<compile_context>
chip_gen: v7x
topology: tpu7x:2x2x1
jax: 0.10.0
libtpu: 0.0.40
codegen_flags: <defaults>
</compile_context>

<pallas_src>
import functools

import jax
import jax.numpy as jnp
from jax.experimental import pallas as pl
from jax.experimental.pallas import tpu as pltpu

SOS_TOKEN = 0
EOS_TOKEN = 1

# ---------------- small, module-consistent shapes ----------------
HIDDEN = 32          # hidden_size
IN_VOCAB = 20        # input_size
OUT_VOCAB = 18       # output_size
MAX_LEN = 8          # max_length
INPUT_LEN = 6        # encoder steps actually run (<= MAX_LEN)
TARGET_LEN = 7       # decoder steps


def _grumt_kernel(
    # SMEM scalars
    inp_tok_ref, tgt_tok_ref,
    # VMEM tensors (pre-fused / pre-folded, see prepare_params)
    enc_gx_tab_ref,                     # (V_in, 1, 3H)  emb @ Wih.T + b_ih
    e_whh_ref, e_bhh_ref,               # (H, 3H), (1, 3H)
    dec_emb_feat_ref,                   # (V_out, ML+H)  [attn emb-half | comb emb-half + b]
    d_hw_ref, d_hb_ref,                 # (H, 3H+ML), (1, 3H+ML)  [Whh | attn_Wh], [bhh | attn_b]
    d_wih_ref, d_bih_ref,               # (H, 3H), (1, 3H)
    comb_wa_ref,                        # (H, H)   attn_applied half of attn_combine
    out_w_ref, out_b_ref,               # (H, V_out), (1, V_out)
    # output
    loss_ref,
    *, input_length, target_length, max_length):
  H = comb_wa_ref.shape[0]
  ML = max_length
  V_OUT = dec_emb_feat_ref.shape[0]

  # ---------------- encoder ----------------
  # Per step: one off-chain dynamic-row gather of the pre-projected input
  # gates + ONE fused matmul on the recurrence (h @ [Whh_rz | Whh_n]).
  h = jnp.zeros((1, H), jnp.float32)
  enc_outs = jnp.zeros((ML, H), jnp.float32)
  enc_row_ids = jax.lax.broadcasted_iota(jnp.int32, (ML, 1), 0)

  for idx in range(input_length):
    gx = enc_gx_tab_ref[inp_tok_ref[idx]]                          # (1, 3H)
    gh = (jnp.dot(h, e_whh_ref[...], preferred_element_type=jnp.float32)
          + e_bhh_ref[...])                                        # (1, 3H)
    rz = jax.nn.sigmoid(gx[:, :2 * H] + gh[:, :2 * H])
    r = rz[:, :H]
    z = rz[:, H:]
    n = jnp.tanh(gx[:, 2 * H:] + r * gh[:, 2 * H:])
    h = (1.0 - z) * n + z * h
    # row update via VPU select (no sublane concat chain)
    enc_outs = jnp.where(enc_row_ids == idx, h, enc_outs)          # (ML, H)

  # ---------------- decoder ----------------
  col_ids = jax.lax.broadcasted_iota(jnp.int32, (1, V_OUT), 1)
  dec_h = h
  # Pre-projected embedding features of the SOS token:
  #   [:ML]  = attention emb-half logits, [ML:] = attn_combine emb-half (+bias)
  emb_feat = dec_emb_feat_ref[SOS_TOKEN:SOS_TOKEN + 1, :]          # (1, ML+H)
  active = jnp.float32(1.0)
  loss_sum = jnp.float32(0.0)

  for di in range(target_length):
    # dropout skipped (see TODO above)

    # ONE fused matmul of the (pre-update) hidden state:
    #   hfeat = [gh_rz | gh_n | attn hidden-half logits]  (1, 3H+ML)
    hfeat = (jnp.dot(dec_h, d_hw_ref[...], preferred_element_type=jnp.float32)
             + d_hb_ref[...])

    # attention softmax over encoder positions
    attn_logits = emb_feat[:, :ML] + hfeat[:, 3 * H:]              # (1, ML)
    a_max = jnp.max(attn_logits, axis=1, keepdims=True)
    a_exp = jnp.exp(attn_logits - a_max)
    inv_den = pl.reciprocal(jnp.sum(a_exp, axis=1, keepdims=True),
                            approx=True)
    attn_w = a_exp * inv_den                                       # softmax
    attn_applied = jnp.dot(attn_w, enc_outs,
                           preferred_element_type=jnp.float32)     # (1, H)

    # attn_combine: emb half comes pre-projected (with bias) in emb_feat
    comb = emb_feat[:, ML:] + jnp.dot(attn_applied, comb_wa_ref[...],
                                      preferred_element_type=jnp.float32)
    comb = jnp.maximum(comb, 0.0)                                  # ReLU

    # GRU cell: one fused input-side matmul; hidden gates reuse hfeat
    gx = (jnp.dot(comb, d_wih_ref[...], preferred_element_type=jnp.float32)
          + d_bih_ref[...])                                        # (1, 3H)
    rz = jax.nn.sigmoid(gx[:, :2 * H] + hfeat[:, :2 * H])
    r = rz[:, :H]
    z = rz[:, H:]
    n = jnp.tanh(gx[:, 2 * H:] + r * hfeat[:, 2 * H:3 * H])
    dec_h = (1.0 - z) * n + z * dec_h

    # output projection + log_softmax statistics
    logits = (jnp.dot(dec_h, out_w_ref[...], preferred_element_type=jnp.float32)
              + out_b_ref[...])                                    # (1, V_out)
    l_max = jnp.max(logits, axis=1, keepdims=True)
    shifted = logits - l_max                                       # max == 0
    log_z = jnp.log(jnp.sum(jnp.exp(shifted), axis=1, keepdims=True))

    # NLLLoss against this step's target token (only the target column is
    # read; no full log_probs materialization).
    tgt = tgt_tok_ref[di]
    tgt_shifted = jnp.sum(jnp.where(col_ids == tgt, shifted,
                                    jnp.zeros_like(shifted)))
    step_loss = jnp.sum(log_z) - tgt_shifted
    loss_sum = loss_sum + active * step_loss

    # greedy argmax, first occurrence (reuses `shifted`: its max is exactly 0)
    cand = jnp.where(shifted == 0.0, col_ids, jnp.int32(V_OUT))
    next_in = jnp.min(cand).astype(jnp.int32)

    # emulate "break" on EOS by masking all later steps' loss contributions
    active = active * jnp.where(next_in == EOS_TOKEN,
                                jnp.float32(0.0), jnp.float32(1.0))

    # pre-projected embedding features of the greedy token for the next step:
    # one-hot @ folded table (single small MXU op, no data-dependent indexing)
    if di + 1 < target_length:
      onehot = jnp.where(col_ids == next_in, 1.0, 0.0).astype(jnp.float32)
      emb_feat = jnp.dot(onehot, dec_emb_feat_ref[...],
                         preferred_element_type=jnp.float32)       # (1, ML+H)

  loss_ref[0, 0] = loss_sum


def prepare_params(params):
  """One-time conversion from PyTorch-layout params to kernel-ready layout.

  Done OUTSIDE the forward path: transposes, lane-axis weight fusion and
  offline folding of embedding-side projections into the tables.
  """
  hidden = params["enc_emb"].shape[1]

  # ---- encoder: fold input-side projection into the embedding table ----
  e_wih_t = jnp.transpose(params["e_wih"])                  # (H, 3H) r|z|n
  enc_gx_table = (jnp.dot(params["enc_emb"], e_wih_t)
                  + params["e_bih"].reshape(1, -1))         # (V_in, 3H)
  enc_gx_table = enc_gx_table[:, None, :]                   # (V_in, 1, 3H)
  e_whh_t = jnp.transpose(params["e_whh"])                  # (H, 3H)
  e_bhh = params["e_bhh"].reshape(1, -1)                    # (1, 3H)

  # ---- decoder: fused hidden-path weight [Whh | attn_Wh] ----
  attn_w = params["attn_w"]                                 # (ML, 2H)
  attn_we_t = jnp.transpose(attn_w[:, :hidden])             # (H, ML) emb half
  attn_wh_t = jnp.transpose(attn_w[:, hidden:])             # (H, ML) hidden half
  d_whh_t = jnp.transpose(params["d_whh"])                  # (H, 3H)
  dec_hfeat_w = jnp.concatenate([d_whh_t, attn_wh_t], axis=1)        # (H, 3H+ML)
  dec_hfeat_b = jnp.concatenate([params["d_bhh"].reshape(1, -1),
                                 params["attn_b"].reshape(1, -1)],
                                axis=1)                              # (1, 3H+ML)

  # ---- decoder: fold emb-side projections into the embedding table ----
  comb_w = params["comb_w"]                                 # (H, 2H)
  comb_we_t = jnp.transpose(comb_w[:, :hidden])             # (H, H) emb half
  comb_wa_t = jnp.transpose(comb_w[:, hidden:])             # (H, H) attn half
  dec_emb = params["dec_emb"]                               # (V_out, H)
  dec_emb_feat = jnp.concatenate(
      [jnp.dot(dec_emb, attn_we_t),
       jnp.dot(dec_emb, comb_we_t) + params["comb_b"].reshape(1, -1)],
      axis=1)                                               # (V_out, ML+H)

  d_wih_t = jnp.transpose(params["d_wih"])                  # (H, 3H)
  d_bih = params["d_bih"].reshape(1, -1)                    # (1, 3H)

  out_w_t = jnp.transpose(params["out_w"])                  # (H, V_out)
  out_b = params["out_b"].reshape(1, -1)                    # (1, V_out)

  return (enc_gx_table, e_whh_t, e_bhh,
          dec_emb_feat, dec_hfeat_w, dec_hfeat_b,
          d_wih_t, d_bih, comb_wa_t, out_w_t, out_b)


def grumt_forward(input_tokens, target_tokens, kernel_params,
                  input_length, target_length, max_length):
  kernel = functools.partial(_grumt_kernel,
                             input_length=input_length,
                             target_length=target_length,
                             max_length=max_length)

  smem = pl.BlockSpec(memory_space=pltpu.MemorySpace.SMEM)
  vmem = pl.BlockSpec(memory_space=pltpu.MemorySpace.VMEM)

  loss = pl.pallas_call(
      kernel,
      out_shape=jax.ShapeDtypeStruct((1, 1), jnp.float32),
      in_specs=[smem, smem] + [vmem] * len(kernel_params),
      out_specs=pl.BlockSpec(memory_space=pltpu.MemorySpace.SMEM),
  )(input_tokens.astype(jnp.int32), target_tokens.astype(jnp.int32),
    *kernel_params)
  return loss[0, 0]


def init_params(key, in_vocab, out_vocab, hidden, max_length):
  ks = jax.random.split(key, 20)
  kH = 1.0 / jnp.sqrt(hidden)
  k2H = 1.0 / jnp.sqrt(2.0 * hidden)

  def u(k, shape, bound):
    return jax.random.uniform(k, shape, jnp.float32, -bound, bound)

  return {
      "enc_emb": jax.random.normal(ks[0], (in_vocab, hidden), jnp.float32),
      "dec_emb": jax.random.normal(ks[1], (out_vocab, hidden), jnp.float32),
      "e_wih": u(ks[2], (3 * hidden, hidden), kH),
      "e_whh": u(ks[3], (3 * hidden, hidden), kH),
      "e_bih": u(ks[4], (3 * hidden,), kH),
      "e_bhh": u(ks[5], (3 * hidden,), kH),
      "d_wih": u(ks[6], (3 * hidden, hidden), kH),
      "d_whh": u(ks[7], (3 * hidden, hidden), kH),
      "d_bih": u(ks[8], (3 * hidden,), kH),
      "d_bhh": u(ks[9], (3 * hidden,), kH),
      "attn_w": u(ks[10], (max_length, 2 * hidden), k2H),
      "attn_b": u(ks[11], (max_length,), k2H),
      "comb_w": u(ks[12], (hidden, 2 * hidden), k2H),
      "comb_b": u(ks[13], (hidden,), k2H),
      "out_w": u(ks[14], (out_vocab, hidden), kH),
      "out_b": u(ks[15], (out_vocab,), kH),
  }


if __name__ == "__main__":
  key = jax.random.PRNGKey(0)
  k_par, k_in, k_tgt = jax.random.split(key, 3)

  params = init_params(k_par, IN_VOCAB, OUT_VOCAB, HIDDEN, MAX_LEN)
  kernel_params = prepare_params(params)   # one-time layout prep (not per call)

  # token sequences (padded to MAX_LEN; only the first *_LEN entries are used)
  input_tokens = jax.random.randint(k_in, (MAX_LEN,), 2, IN_VOCAB, jnp.int32)
  target_tokens = jax.random.randint(k_tgt, (MAX_LEN,), 2, OUT_VOCAB, jnp.int32)

  fwd = jax.jit(functools.partial(grumt_forward,
                                  input_length=INPUT_LEN,
                                  target_length=TARGET_LEN,
                                  max_length=MAX_LEN))
  loss = fwd(input_tokens, target_tokens, kernel_params)
  jax.block_until_ready(loss)
  print("KERNEL_OK")
</pallas_src>

<mosaic_0001>
module attributes {stable_mosaic.version = 11 : i64} {
  func.func @_grumt_kernel(%arg0: memref<8xi32, #tpu.memory_space<smem>>, %arg1: memref<8xi32, #tpu.memory_space<smem>>, %arg2: memref<20x1x96xf32, #tpu.memory_space<vmem>>, %arg3: memref<32x96xf32, #tpu.memory_space<vmem>>, %arg4: memref<1x96xf32, #tpu.memory_space<vmem>>, %arg5: memref<18x40xf32, #tpu.memory_space<vmem>>, %arg6: memref<32x104xf32, #tpu.memory_space<vmem>>, %arg7: memref<1x104xf32, #tpu.memory_space<vmem>>, %arg8: memref<32x96xf32, #tpu.memory_space<vmem>>, %arg9: memref<1x96xf32, #tpu.memory_space<vmem>>, %arg10: memref<32x32xf32, #tpu.memory_space<vmem>>, %arg11: memref<32x18xf32, #tpu.memory_space<vmem>>, %arg12: memref<1x18xf32, #tpu.memory_space<vmem>>, %arg13: memref<1x1xf32, #tpu.memory_space<smem>>) attributes {dimension_semantics = [], scalar_prefetch = 0 : i64, scratch_operands = 0 : i64, tpu.core_type = #tpu.core_type<tc>} {
    %cst = arith.constant 0.000000e+00 : f32
    %0 = vector.broadcast %cst : f32 to vector<1x32xf32>
    %cst_0 = arith.constant 0.000000e+00 : f32
    %1 = vector.broadcast %cst_0 : f32 to vector<8x32xf32>
    %2 = tpu.iota {dimensions = array<i32: 0>} : vector<8x1xi32>
    %c0 = arith.constant 0 : index
    %3 = memref.load %arg0[%c0] : memref<8xi32, #tpu.memory_space<smem>>
    %4 = arith.index_cast %3 : i32 to index
    %c0_1 = arith.constant 0 : index
    %c0_2 = arith.constant 0 : index
    %5 = vector.load %arg2[%4, %c0_1, %c0_2] : memref<20x1x96xf32, #tpu.memory_space<vmem>>, vector<1x1x96xf32>
    %6 = vector.shape_cast %5 : vector<1x1x96xf32> to vector<1x96xf32>
    %c0_3 = arith.constant 0 : index
    %c0_4 = arith.constant 0 : index
    %7 = vector.load %arg3[%c0_3, %c0_4] : memref<32x96xf32, #tpu.memory_space<vmem>>, vector<32x96xf32>
    %cst_5 = arith.constant dense<0.000000e+00> : vector<1x96xf32>
    %8 = tpu.matmul %0, %7, %cst_5 {dimension_numbers = #tpu.dot_dimension_numbers<[1], [0], [0], [1], [0, 0, 1, 1], [], []>} : vector<1x32xf32>, vector<32x96xf32>, vector<1x96xf32> -> vector<1x96xf32>
    %c0_6 = arith.constant 0 : index
    %c0_7 = arith.constant 0 : index
    %9 = vector.load %arg4[%c0_6, %c0_7] : memref<1x96xf32, #tpu.memory_space<vmem>>, vector<1x96xf32>
    %10 = arith.addf %8, %9 : vector<1x96xf32>
    %11 = vector.extract_strided_slice %6 {offsets = [0, 0], sizes = [1, 64], strides = [1, 1]} : vector<1x96xf32> to vector<1x64xf32>
    %12 = vector.extract_strided_slice %10 {offsets = [0, 0], sizes = [1, 64], strides = [1, 1]} : vector<1x96xf32> to vector<1x64xf32>
    %13 = arith.addf %11, %12 : vector<1x64xf32>
    %14 = arith.negf %13 : vector<1x64xf32>
    %15 = math.exp %14 : vector<1x64xf32>
    %cst_8 = arith.constant 1.000000e+00 : f32
    %16 = vector.broadcast %cst_8 : f32 to vector<1x64xf32>
    %17 = arith.addf %16, %15 : vector<1x64xf32>
    %18 = arith.divf %16, %17 : vector<1x64xf32>
    %19 = vector.extract_strided_slice %18 {offsets = [0, 0], sizes = [1, 32], strides = [1, 1]} : vector<1x64xf32> to vector<1x32xf32>
    %20 = vector.extract_strided_slice %18 {offsets = [0, 32], sizes = [1, 32], strides = [1, 1]} : vector<1x64xf32> to vector<1x32xf32>
    %21 = vector.extract_strided_slice %6 {offsets = [0, 64], sizes = [1, 32], strides = [1, 1]} : vector<1x96xf32> to vector<1x32xf32>
    %22 = vector.extract_strided_slice %10 {offsets = [0, 64], sizes = [1, 32], strides = [1, 1]} : vector<1x96xf32> to vector<1x32xf32>
    %23 = arith.mulf %19, %22 : vector<1x32xf32>
    %24 = arith.addf %21, %23 : vector<1x32xf32>
    %25 = math.tanh %24 : vector<1x32xf32>
    %cst_9 = arith.constant 1.000000e+00 : f32
    %26 = vector.broadcast %cst_9 : f32 to vector<1x32xf32>
    %27 = arith.subf %26, %20 : vector<1x32xf32>
    %28 = arith.mulf %27, %25 : vector<1x32xf32>
    %29 = arith.mulf %20, %0 : vector<1x32xf32>
    %30 = arith.addf %28, %29 : vector<1x32xf32>
    %c0_i32 = arith.constant 0 : i32
    %31 = vector.broadcast %c0_i32 : i32 to vector<8x1xi32>
    %32 = arith.cmpi eq, %2, %31 : vector<8x1xi32>
    %33 = vector.shape_cast %32 : vector<8x1xi1> to vector<8x1xi1>
    %34 = vector.broadcast %33 : vector<8x1xi1> to vector<8x32xi1>
    %35 = vector.shape_cast %30 : vector<1x32xf32> to vector<1x32xf32>
    %36 = vector.broadcast %35 : vector<1x32xf32> to vector<8x32xf32>
    %37 = arith.select %34, %36, %1 : vector<8x32xi1>, vector<8x32xf32>
    %c1 = arith.constant 1 : index
    %38 = memref.load %arg0[%c1] : memref<8xi32, #tpu.memory_space<smem>>
    %39 = arith.index_cast %38 : i32 to index
    %c0_10 = arith.constant 0 : index
    %c0_11 = arith.constant 0 : index
    %40 = vector.load %arg2[%39, %c0_10, %c0_11] : memref<20x1x96xf32, #tpu.memory_space<vmem>>, vector<1x1x96xf32>
    %41 = vector.shape_cast %40 : vector<1x1x96xf32> to vector<1x96xf32>
    %c0_12 = arith.constant 0 : index
    %c0_13 = arith.constant 0 : index
    %42 = vector.load %arg3[%c0_12, %c0_13] : memref<32x96xf32, #tpu.memory_space<vmem>>, vector<32x96xf32>
    %cst_14 = arith.constant dense<0.000000e+00> : vector<1x96xf32>
    %43 = tpu.matmul %30, %42, %cst_14 {dimension_numbers = #tpu.dot_dimension_numbers<[1], [0], [0], [1], [0, 0, 1, 1], [], []>} : vector<1x32xf32>, vector<32x96xf32>, vector<1x96xf32> -> vector<1x96xf32>
    %c0_15 = arith.constant 0 : index
    %c0_16 = arith.constant 0 : index
    %44 = vector.load %arg4[%c0_15, %c0_16] : memref<1x96xf32, #tpu.memory_space<vmem>>, vector<1x96xf32>
    %45 = arith.addf %43, %44 : vector<1x96xf32>
    %46 = vector.extract_strided_slice %41 {offsets = [0, 0], sizes = [1, 64], strides = [1, 1]} : vector<1x96xf32> to vector<1x64xf32>
    %47 = vector.extract_strided_slice %45 {offsets = [0, 0], sizes = [1, 64], strides = [1, 1]} : vector<1x96xf32> to vector<1x64xf32>
    %48 = arith.addf %46, %47 : vector<1x64xf32>
    %49 = arith.negf %48 : vector<1x64xf32>
    %50 = math.exp %49 : vector<1x64xf32>
    %cst_17 = arith.constant 1.000000e+00 : f32
    %51 = vector.broadcast %cst_17 : f32 to vector<1x64xf32>
    %52 = arith.addf %51, %50 : vector<1x64xf32>
    %53 = arith.divf %51, %52 : vector<1x64xf32>
    %54 = vector.extract_strided_slice %53 {offsets = [0, 0], sizes = [1, 32], strides = [1, 1]} : vector<1x64xf32> to vector<1x32xf32>
    %55 = vector.extract_strided_slice %53 {offsets = [0, 32], sizes = [1, 32], strides = [1, 1]} : vector<1x64xf32> to vector<1x32xf32>
    %56 = vector.extract_strided_slice %41 {offsets = [0, 64], sizes = [1, 32], strides = [1, 1]} : vector<1x96xf32> to vector<1x32xf32>
    %57 = vector.extract_strided_slice %45 {offsets = [0, 64], sizes = [1, 32], strides = [1, 1]} : vector<1x96xf32> to vector<1x32xf32>
    %58 = arith.mulf %54, %57 : vector<1x32xf32>
    %59 = arith.addf %56, %58 : vector<1x32xf32>
    %60 = math.tanh %59 : vector<1x32xf32>
    %cst_18 = arith.constant 1.000000e+00 : f32
    %61 = vector.broadcast %cst_18 : f32 to vector<1x32xf32>
    %62 = arith.subf %61, %55 : vector<1x32xf32>
    %63 = arith.mulf %62, %60 : vector<1x32xf32>
    %64 = arith.mulf %55, %30 : vector<1x32xf32>
    %65 = arith.addf %63, %64 : vector<1x32xf32>
    %c1_i32 = arith.constant 1 : i32
    %66 = vector.broadcast %c1_i32 : i32 to vector<8x1xi32>
    %67 = arith.cmpi eq, %2, %66 : vector<8x1xi32>
    %68 = vector.shape_cast %67 : vector<8x1xi1> to vector<8x1xi1>
    %69 = vector.broadcast %68 : vector<8x1xi1> to vector<8x32xi1>
    %70 = vector.shape_cast %65 : vector<1x32xf32> to vector<1x32xf32>
    %71 = vector.broadcast %70 : vector<1x32xf32> to vector<8x32xf32>
    %72 = arith.select %69, %71, %37 : vector<8x32xi1>, vector<8x32xf32>
    %c2 = arith.constant 2 : index
    %73 = memref.load %arg0[%c2] : memref<8xi32, #tpu.memory_space<smem>>
    %74 = arith.index_cast %73 : i32 to index
    %c0_19 = arith.constant 0 : index
    %c0_20 = arith.constant 0 : index
    %75 = vector.load %arg2[%74, %c0_19, %c0_20] : memref<20x1x96xf32, #tpu.memory_space<vmem>>, vector<1x1x96xf32>
    %76 = vector.shape_cast %75 : vector<1x1x96xf32> to vector<1x96xf32>
    %c0_21 = arith.constant 0 : index
    %c0_22 = arith.constant 0 : index
    %77 = vector.load %arg3[%c0_21, %c0_22] : memref<32x96xf32, #tpu.memory_space<vmem>>, vector<32x96xf32>
    %cst_23 = arith.constant dense<0.000000e+00> : vector<1x96xf32>
    %78 = tpu.matmul %65, %77, %cst_23 {dimension_numbers = #tpu.dot_dimension_numbers<[1], [0], [0], [1], [0, 0, 1, 1], [], []>} : vector<1x32xf32>, vector<32x96xf32>, vector<1x96xf32> -> vector<1x96xf32>
    %c0_24 = arith.constant 0 : index
    %c0_25 = arith.constant 0 : index
    %79 = vector.load %arg4[%c0_24, %c0_25] : memref<1x96xf32, #tpu.memory_space<vmem>>, vector<1x96xf32>
    %80 = arith.addf %78, %79 : vector<1x96xf32>
    %81 = vector.extract_strided_slice %76 {offsets = [0, 0], sizes = [1, 64], strides = [1, 1]} : vector<1x96xf32> to vector<1x64xf32>
    %82 = vector.extract_strided_slice %80 {offsets = [0, 0], sizes = [1, 64], strides = [1, 1]} : vector<1x96xf32> to vector<1x64xf32>
    %83 = arith.addf %81, %82 : vector<1x64xf32>
    %84 = arith.negf %83 : vector<1x64xf32>
    %85 = math.exp %84 : vector<1x64xf32>
    %cst_26 = arith.constant 1.000000e+00 : f32
    %86 = vector.broadcast %cst_26 : f32 to vector<1x64xf32>
    %87 = arith.addf %86, %85 : vector<1x64xf32>
    %88 = arith.divf %86, %87 : vector<1x64xf32>
    %89 = vector.extract_strided_slice %88 {offsets = [0, 0], sizes = [1, 32], strides = [1, 1]} : vector<1x64xf32> to vector<1x32xf32>
    %90 = vector.extract_strided_slice %88 {offsets = [0, 32], sizes = [1, 32], strides = [1, 1]} : vector<1x64xf32> to vector<1x32xf32>
    %91 = vector.extract_strided_slice %76 {offsets = [0, 64], sizes = [1, 32], strides = [1, 1]} : vector<1x96xf32> to vector<1x32xf32>
    %92 = vector.extract_strided_slice %80 {offsets = [0, 64], sizes = [1, 32], strides = [1, 1]} : vector<1x96xf32> to vector<1x32xf32>
    %93 = arith.mulf %89, %92 : vector<1x32xf32>
    %94 = arith.addf %91, %93 : vector<1x32xf32>
    %95 = math.tanh %94 : vector<1x32xf32>
    %cst_27 = arith.constant 1.000000e+00 : f32
    %96 = vector.broadcast %cst_27 : f32 to vector<1x32xf32>
    %97 = arith.subf %96, %90 : vector<1x32xf32>
    %98 = arith.mulf %97, %95 : vector<1x32xf32>
    %99 = arith.mulf %90, %65 : vector<1x32xf32>
    %100 = arith.addf %98, %99 : vector<1x32xf32>
    %c2_i32 = arith.constant 2 : i32
    %101 = vector.broadcast %c2_i32 : i32 to vector<8x1xi32>
    %102 = arith.cmpi eq, %2, %101 : vector<8x1xi32>
    %103 = vector.shape_cast %102 : vector<8x1xi1> to vector<8x1xi1>
    %104 = vector.broadcast %103 : vector<8x1xi1> to vector<8x32xi1>
    %105 = vector.shape_cast %100 : vector<1x32xf32> to vector<1x32xf32>
    %106 = vector.broadcast %105 : vector<1x32xf32> to vector<8x32xf32>
    %107 = arith.select %104, %106, %72 : vector<8x32xi1>, vector<8x32xf32>
    %c3 = arith.constant 3 : index
    %108 = memref.load %arg0[%c3] : memref<8xi32, #tpu.memory_space<smem>>
    %109 = arith.index_cast %108 : i32 to index
    %c0_28 = arith.constant 0 : index
    %c0_29 = arith.constant 0 : index
    %110 = vector.load %arg2[%109, %c0_28, %c0_29] : memref<20x1x96xf32, #tpu.memory_space<vmem>>, vector<1x1x96xf32>
    %111 = vector.shape_cast %110 : vector<1x1x96xf32> to vector<1x96xf32>
    %c0_30 = arith.constant 0 : index
    %c0_31 = arith.constant 0 : index
    %112 = vector.load %arg3[%c0_30, %c0_31] : memref<32x96xf32, #tpu.memory_space<vmem>>, vector<32x96xf32>
    %cst_32 = arith.constant dense<0.000000e+00> : vector<1x96xf32>
    %113 = tpu.matmul %100, %112, %cst_32 {dimension_numbers = #tpu.dot_dimension_numbers<[1], [0], [0], [1], [0, 0, 1, 1], [], []>} : vector<1x32xf32>, vector<32x96xf32>, vector<1x96xf32> -> vector<1x96xf32>
    %c0_33 = arith.constant 0 : index
    %c0_34 = arith.constant 0 : index
    %114 = vector.load %arg4[%c0_33, %c0_34] : memref<1x96xf32, #tpu.memory_space<vmem>>, vector<1x96xf32>
    %115 = arith.addf %113, %114 : vector<1x96xf32>
    %116 = vector.extract_strided_slice %111 {offsets = [0, 0], sizes = [1, 64], strides = [1, 1]} : vector<1x96xf32> to vector<1x64xf32>
    %117 = vector.extract_strided_slice %115 {offsets = [0, 0], sizes = [1, 64], strides = [1, 1]} : vector<1x96xf32> to vector<1x64xf32>
    %118 = arith.addf %116, %117 : vector<1x64xf32>
    %119 = arith.negf %118 : vector<1x64xf32>
    %120 = math.exp %119 : vector<1x64xf32>
    %cst_35 = arith.constant 1.000000e+00 : f32
    %121 = vector.broadcast %cst_35 : f32 to vector<1x64xf32>
    %122 = arith.addf %121, %120 : vector<1x64xf32>
    %123 = arith.divf %121, %122 : vector<1x64xf32>
    %124 = vector.extract_strided_slice %123 {offsets = [0, 0], sizes = [1, 32], strides = [1, 1]} : vector<1x64xf32> to vector<1x32xf32>
    %125 = vector.extract_strided_slice %123 {offsets = [0, 32], sizes = [1, 32], strides = [1, 1]} : vector<1x64xf32> to vector<1x32xf32>
    %126 = vector.extract_strided_slice %111 {offsets = [0, 64], sizes = [1, 32], strides = [1, 1]} : vector<1x96xf32> to vector<1x32xf32>
    %127 = vector.extract_strided_slice %115 {offsets = [0, 64], sizes = [1, 32], strides = [1, 1]} : vector<1x96xf32> to vector<1x32xf32>
    %128 = arith.mulf %124, %127 : vector<1x32xf32>
    %129 = arith.addf %126, %128 : vector<1x32xf32>
    %130 = math.tanh %129 : vector<1x32xf32>
    %cst_36 = arith.constant 1.000000e+00 : f32
    %131 = vector.broadcast %cst_36 : f32 to vector<1x32xf32>
    %132 = arith.subf %131, %125 : vector<1x32xf32>
    %133 = arith.mulf %132, %130 : vector<1x32xf32>
    %134 = arith.mulf %125, %100 : vector<1x32xf32>
    %135 = arith.addf %133, %134 : vector<1x32xf32>
    %c3_i32 = arith.constant 3 : i32
    %136 = vector.broadcast %c3_i32 : i32 to vector<8x1xi32>
    %137 = arith.cmpi eq, %2, %136 : vector<8x1xi32>
    %138 = vector.shape_cast %137 : vector<8x1xi1> to vector<8x1xi1>
    %139 = vector.broadcast %138 : vector<8x1xi1> to vector<8x32xi1>
    %140 = vector.shape_cast %135 : vector<1x32xf32> to vector<1x32xf32>
    %141 = vector.broadcast %140 : vector<1x32xf32> to vector<8x32xf32>
    %142 = arith.select %139, %141, %107 : vector<8x32xi1>, vector<8x32xf32>
    %c4 = arith.constant 4 : index
    %143 = memref.load %arg0[%c4] : memref<8xi32, #tpu.memory_space<smem>>
    %144 = arith.index_cast %143 : i32 to index
    %c0_37 = arith.constant 0 : index
    %c0_38 = arith.constant 0 : index
    %145 = vector.load %arg2[%144, %c0_37, %c0_38] : memref<20x1x96xf32, #tpu.memory_space<vmem>>, vector<1x1x96xf32>
    %146 = vector.shape_cast %145 : vector<1x1x96xf32> to vector<1x96xf32>
    %c0_39 = arith.constant 0 : index
    %c0_40 = arith.constant 0 : index
    %147 = vector.load %arg3[%c0_39, %c0_40] : memref<32x96xf32, #tpu.memory_space<vmem>>, vector<32x96xf32>
    %cst_41 = arith.constant dense<0.000000e+00> : vector<1x96xf32>
    %148 = tpu.matmul %135, %147, %cst_41 {dimension_numbers = #tpu.dot_dimension_numbers<[1], [0], [0], [1], [0, 0, 1, 1], [], []>} : vector<1x32xf32>, vector<32x96xf32>, vector<1x96xf32> -> vector<1x96xf32>
    %c0_42 = arith.constant 0 : index
    %c0_43 = arith.constant 0 : index
    %149 = vector.load %arg4[%c0_42, %c0_43] : memref<1x96xf32, #tpu.memory_space<vmem>>, vector<1x96xf32>
    %150 = arith.addf %148, %149 : vector<1x96xf32>
    %151 = vector.extract_strided_slice %146 {offsets = [0, 0], sizes = [1, 64], strides = [1, 1]} : vector<1x96xf32> to vector<1x64xf32>
    %152 = vector.extract_strided_slice %150 {offsets = [0, 0], sizes = [1, 64], strides = [1, 1]} : vector<1x96xf32> to vector<1x64xf32>
    %153 = arith.addf %151, %152 : vector<1x64xf32>
    %154 = arith.negf %153 : vector<1x64xf32>
    %155 = math.exp %154 : vector<1x64xf32>
    %cst_44 = arith.constant 1.000000e+00 : f32
    %156 = vector.broadcast %cst_44 : f32 to vector<1x64xf32>
    %157 = arith.addf %156, %155 : vector<1x64xf32>
    %158 = arith.divf %156, %157 : vector<1x64xf32>
    %159 = vector.extract_strided_slice %158 {offsets = [0, 0], sizes = [1, 32], strides = [1, 1]} : vector<1x64xf32> to vector<1x32xf32>
    %160 = vector.extract_strided_slice %158 {offsets = [0, 32], sizes = [1, 32], strides = [1, 1]} : vector<1x64xf32> to vector<1x32xf32>
    %161 = vector.extract_strided_slice %146 {offsets = [0, 64], sizes = [1, 32], strides = [1, 1]} : vector<1x96xf32> to vector<1x32xf32>
    %162 = vector.extract_strided_slice %150 {offsets = [0, 64], sizes = [1, 32], strides = [1, 1]} : vector<1x96xf32> to vector<1x32xf32>
    %163 = arith.mulf %159, %162 : vector<1x32xf32>
    %164 = arith.addf %161, %163 : vector<1x32xf32>
    %165 = math.tanh %164 : vector<1x32xf32>
    %cst_45 = arith.constant 1.000000e+00 : f32
    %166 = vector.broadcast %cst_45 : f32 to vector<1x32xf32>
    %167 = arith.subf %166, %160 : vector<1x32xf32>
    %168 = arith.mulf %167, %165 : vector<1x32xf32>
    %169 = arith.mulf %160, %135 : vector<1x32xf32>
    %170 = arith.addf %168, %169 : vector<1x32xf32>
    %c4_i32 = arith.constant 4 : i32
    %171 = vector.broadcast %c4_i32 : i32 to vector<8x1xi32>
    %172 = arith.cmpi eq, %2, %171 : vector<8x1xi32>
    %173 = vector.shape_cast %172 : vector<8x1xi1> to vector<8x1xi1>
    %174 = vector.broadcast %173 : vector<8x1xi1> to vector<8x32xi1>
    %175 = vector.shape_cast %170 : vector<1x32xf32> to vector<1x32xf32>
    %176 = vector.broadcast %175 : vector<1x32xf32> to vector<8x32xf32>
    %177 = arith.select %174, %176, %142 : vector<8x32xi1>, vector<8x32xf32>
    %c5 = arith.constant 5 : index
    %178 = memref.load %arg0[%c5] : memref<8xi32, #tpu.memory_space<smem>>
    %179 = arith.index_cast %178 : i32 to index
    %c0_46 = arith.constant 0 : index
    %c0_47 = arith.constant 0 : index
    %180 = vector.load %arg2[%179, %c0_46, %c0_47] : memref<20x1x96xf32, #tpu.memory_space<vmem>>, vector<1x1x96xf32>
    %181 = vector.shape_cast %180 : vector<1x1x96xf32> to vector<1x96xf32>
    %c0_48 = arith.constant 0 : index
    %c0_49 = arith.constant 0 : index
    %182 = vector.load %arg3[%c0_48, %c0_49] : memref<32x96xf32, #tpu.memory_space<vmem>>, vector<32x96xf32>
    %cst_50 = arith.constant dense<0.000000e+00> : vector<1x96xf32>
    %183 = tpu.matmul %170, %182, %cst_50 {dimension_numbers = #tpu.dot_dimension_numbers<[1], [0], [0], [1], [0, 0, 1, 1], [], []>} : vector<1x32xf32>, vector<32x96xf32>, vector<1x96xf32> -> vector<1x96xf32>
    %c0_51 = arith.constant 0 : index
    %c0_52 = arith.constant 0 : index
    %184 = vector.load %arg4[%c0_51, %c0_52] : memref<1x96xf32, #tpu.memory_space<vmem>>, vector<1x96xf32>
    %185 = arith.addf %183, %184 : vector<1x96xf32>
    %186 = vector.extract_strided_slice %181 {offsets = [0, 0], sizes = [1, 64], strides = [1, 1]} : vector<1x96xf32> to vector<1x64xf32>
    %187 = vector.extract_strided_slice %185 {offsets = [0, 0], sizes = [1, 64], strides = [1, 1]} : vector<1x96xf32> to vector<1x64xf32>
    %188 = arith.addf %186, %187 : vector<1x64xf32>
    %189 = arith.negf %188 : vector<1x64xf32>
    %190 = math.exp %189 : vector<1x64xf32>
    %cst_53 = arith.constant 1.000000e+00 : f32
    %191 = vector.broadcast %cst_53 : f32 to vector<1x64xf32>
    %192 = arith.addf %191, %190 : vector<1x64xf32>
    %193 = arith.divf %191, %192 : vector<1x64xf32>
    %194 = vector.extract_strided_slice %193 {offsets = [0, 0], sizes = [1, 32], strides = [1, 1]} : vector<1x64xf32> to vector<1x32xf32>
    %195 = vector.extract_strided_slice %193 {offsets = [0, 32], sizes = [1, 32], strides = [1, 1]} : vector<1x64xf32> to vector<1x32xf32>
    %196 = vector.extract_strided_slice %181 {offsets = [0, 64], sizes = [1, 32], strides = [1, 1]} : vector<1x96xf32> to vector<1x32xf32>
    %197 = vector.extract_strided_slice %185 {offsets = [0, 64], sizes = [1, 32], strides = [1, 1]} : vector<1x96xf32> to vector<1x32xf32>
    %198 = arith.mulf %194, %197 : vector<1x32xf32>
    %199 = arith.addf %196, %198 : vector<1x32xf32>
    %200 = math.tanh %199 : vector<1x32xf32>
    %cst_54 = arith.constant 1.000000e+00 : f32
    %201 = vector.broadcast %cst_54 : f32 to vector<1x32xf32>
    %202 = arith.subf %201, %195 : vector<1x32xf32>
    %203 = arith.mulf %202, %200 : vector<1x32xf32>
    %204 = arith.mulf %195, %170 : vector<1x32xf32>
    %205 = arith.addf %203, %204 : vector<1x32xf32>
    %c5_i32 = arith.constant 5 : i32
    %206 = vector.broadcast %c5_i32 : i32 to vector<8x1xi32>
    %207 = arith.cmpi eq, %2, %206 : vector<8x1xi32>
    %208 = vector.shape_cast %207 : vector<8x1xi1> to vector<8x1xi1>
    %209 = vector.broadcast %208 : vector<8x1xi1> to vector<8x32xi1>
    %210 = vector.shape_cast %205 : vector<1x32xf32> to vector<1x32xf32>
    %211 = vector.broadcast %210 : vector<1x32xf32> to vector<8x32xf32>
    %212 = arith.select %209, %211, %177 : vector<8x32xi1>, vector<8x32xf32>
    %213 = tpu.iota {dimensions = array<i32: 1>} : vector<1x18xi32>
    %c0_55 = arith.constant 0 : index
    %c0_56 = arith.constant 0 : index
    %214 = vector.load %arg5[%c0_55, %c0_56] : memref<18x40xf32, #tpu.memory_space<vmem>>, vector<1x40xf32>
    %c0_57 = arith.constant 0 : index
    %c0_58 = arith.constant 0 : index
    %215 = vector.load %arg6[%c0_57, %c0_58] : memref<32x104xf32, #tpu.memory_space<vmem>>, vector<32x104xf32>
    %cst_59 = arith.constant dense<0.000000e+00> : vector<1x104xf32>
    %216 = tpu.matmul %205, %215, %cst_59 {dimension_numbers = #tpu.dot_dimension_numbers<[1], [0], [0], [1], [0, 0, 1, 1], [], []>} : vector<1x32xf32>, vector<32x104xf32>, vector<1x104xf32> -> vector<1x104xf32>
    %c0_60 = arith.constant 0 : index
    %c0_61 = arith.constant 0 : index
    %217 = vector.load %arg7[%c0_60, %c0_61] : memref<1x104xf32, #tpu.memory_space<vmem>>, vector<1x104xf32>
    %218 = arith.addf %216, %217 : vector<1x104xf32>
    %219 = vector.extract_strided_slice %214 {offsets = [0, 0], sizes = [1, 8], strides = [1, 1]} : vector<1x40xf32> to vector<1x8xf32>
    %220 = vector.extract_strided_slice %218 {offsets = [0, 96], sizes = [1, 8], strides = [1, 1]} : vector<1x104xf32> to vector<1x8xf32>
    %221 = arith.addf %219, %220 : vector<1x8xf32>
    %cst_62 = arith.constant dense<0xFF800000> : vector<1xf32>
    %222 = vector.multi_reduction <maximumf>, %221, %cst_62 [1] : vector<1x8xf32> to vector<1xf32>
    %223 = vector.shape_cast %222 : vector<1xf32> to vector<1x1xf32>
    %224 = vector.broadcast %223 : vector<1x1xf32> to vector<1x8xf32>
    %225 = arith.subf %221, %224 : vector<1x8xf32>
    %226 = math.exp %225 : vector<1x8xf32>
    %cst_63 = arith.constant dense<0.000000e+00> : vector<1xf32>
    %227 = vector.multi_reduction <add>, %226, %cst_63 [1] : vector<1x8xf32> to vector<1xf32>
    %228 = vector.shape_cast %227 : vector<1xf32> to vector<1x1xf32>
    %229 = tpu.reciprocal %228 {approx = true} : vector<1x1xf32> -> vector<1x1xf32>
    %230 = vector.broadcast %229 : vector<1x1xf32> to vector<1x8xf32>
    %231 = arith.mulf %226, %230 : vector<1x8xf32>
    %cst_64 = arith.constant dense<0.000000e+00> : vector<1x32xf32>
    %232 = tpu.matmul %231, %212, %cst_64 {dimension_numbers = #tpu.dot_dimension_numbers<[1], [0], [0], [1], [0, 0, 1, 1], [], []>} : vector<1x8xf32>, vector<8x32xf32>, vector<1x32xf32> -> vector<1x32xf32>
    %233 = vector.extract_strided_slice %214 {offsets = [0, 8], sizes = [1, 32], strides = [1, 1]} : vector<1x40xf32> to vector<1x32xf32>
    %c0_65 = arith.constant 0 : index
    %c0_66 = arith.constant 0 : index
    %234 = vector.load %arg10[%c0_65, %c0_66] : memref<32x32xf32, #tpu.memory_space<vmem>>, vector<32x32xf32>
    %cst_67 = arith.constant dense<0.000000e+00> : vector<1x32xf32>
    %235 = tpu.matmul %232, %234, %cst_67 {dimension_numbers = #tpu.dot_dimension_numbers<[1], [0], [0], [1], [0, 0, 1, 1], [], []>} : vector<1x32xf32>, vector<32x32xf32>, vector<1x32xf32> -> vector<1x32xf32>
    %236 = arith.addf %233, %235 : vector<1x32xf32>
    %cst_68 = arith.constant 0.000000e+00 : f32
    %237 = vector.broadcast %cst_68 : f32 to vector<1x32xf32>
    %238 = arith.maximumf %236, %237 : vector<1x32xf32>
    %c0_69 = arith.constant 0 : index
    %c0_70 = arith.constant 0 : index
    %239 = vector.load %arg8[%c0_69, %c0_70] : memref<32x96xf32, #tpu.memory_space<vmem>>, vector<32x96xf32>
    %cst_71 = arith.constant dense<0.000000e+00> : vector<1x96xf32>
    %240 = tpu.matmul %238, %239, %cst_71 {dimension_numbers = #tpu.dot_dimension_numbers<[1], [0], [0], [1], [0, 0, 1, 1], [], []>} : vector<1x32xf32>, vector<32x96xf32>, vector<1x96xf32> -> vector<1x96xf32>
    %c0_72 = arith.constant 0 : index
    %c0_73 = arith.constant 0 : index
    %241 = vector.load %arg9[%c0_72, %c0_73] : memref<1x96xf32, #tpu.memory_space<vmem>>, vector<1x96xf32>
    %242 = arith.addf %240, %241 : vector<1x96xf32>
    %243 = vector.extract_strided_slice %242 {offsets = [0, 0], sizes = [1, 64], strides = [1, 1]} : vector<1x96xf32> to vector<1x64xf32>
    %244 = vector.extract_strided_slice %218 {offsets = [0, 0], sizes = [1, 64], strides = [1, 1]} : vector<1x104xf32> to vector<1x64xf32>
    %245 = arith.addf %243, %244 : vector<1x64xf32>
    %246 = arith.negf %245 : vector<1x64xf32>
    %247 = math.exp %246 : vector<1x64xf32>
    %cst_74 = arith.constant 1.000000e+00 : f32
    %248 = vector.broadcast %cst_74 : f32 to vector<1x64xf32>
    %249 = arith.addf %248, %247 : vector<1x64xf32>
    %250 = arith.divf %248, %249 : vector<1x64xf32>
    %251 = vector.extract_strided_slice %250 {offsets = [0, 0], sizes = [1, 32], strides = [1, 1]} : vector<1x64xf32> to vector<1x32xf32>
    %252 = vector.extract_strided_slice %250 {offsets = [0, 32], sizes = [1, 32], strides = [1, 1]} : vector<1x64xf32> to vector<1x32xf32>
    %253 = vector.extract_strided_slice %242 {offsets = [0, 64], sizes = [1, 32], strides = [1, 1]} : vector<1x96xf32> to vector<1x32xf32>
    %254 = vector.extract_strided_slice %218 {offsets = [0, 64], sizes = [1, 32], strides = [1, 1]} : vector<1x104xf32> to vector<1x32xf32>
    %255 = arith.mulf %251, %254 : vector<1x32xf32>
    %256 = arith.addf %253, %255 : vector<1x32xf32>
    %257 = math.tanh %256 : vector<1x32xf32>
    %cst_75 = arith.constant 1.000000e+00 : f32
    %258 = vector.broadcast %cst_75 : f32 to vector<1x32xf32>
    %259 = arith.subf %258, %252 : vector<1x32xf32>
    %260 = arith.mulf %259, %257 : vector<1x32xf32>
    %261 = arith.mulf %252, %205 : vector<1x32xf32>
    %262 = arith.addf %260, %261 : vector<1x32xf32>
    %c0_76 = arith.constant 0 : index
    %c0_77 = arith.constant 0 : index
    %263 = vector.load %arg11[%c0_76, %c0_77] : memref<32x18xf32, #tpu.memory_space<vmem>>, vector<32x18xf32>
    %cst_78 = arith.constant dense<0.000000e+00> : vector<1x18xf32>
    %264 = tpu.matmul %262, %263, %cst_78 {dimension_numbers = #tpu.dot_dimension_numbers<[1], [0], [0], [1], [0, 0, 1, 1], [], []>} : vector<1x32xf32>, vector<32x18xf32>, vector<1x18xf32> -> vector<1x18xf32>
    %c0_79 = arith.constant 0 : index
    %c0_80 = arith.constant 0 : index
    %265 = vector.load %arg12[%c0_79, %c0_80] : memref<1x18xf32, #tpu.memory_space<vmem>>, vector<1x18xf32>
    %266 = arith.addf %264, %265 : vector<1x18xf32>
    %cst_81 = arith.constant dense<0xFF800000> : vector<1xf32>
    %267 = vector.multi_reduction <maximumf>, %266, %cst_81 [1] : vector<1x18xf32> to vector<1xf32>
    %268 = vector.shape_cast %267 : vector<1xf32> to vector<1x1xf32>
    %269 = vector.broadcast %268 : vector<1x1xf32> to vector<1x18xf32>
    %270 = arith.subf %266, %269 : vector<1x18xf32>
    %271 = math.exp %270 : vector<1x18xf32>
    %cst_82 = arith.constant dense<0.000000e+00> : vector<1xf32>
    %272 = vector.multi_reduction <add>, %271, %cst_82 [1] : vector<1x18xf32> to vector<1xf32>
    %273 = vector.shape_cast %272 : vector<1xf32> to vector<1x1xf32>
    %274 = math.log %273 : vector<1x1xf32>
    %c0_83 = arith.constant 0 : index
    %275 = memref.load %arg1[%c0_83] : memref<8xi32, #tpu.memory_space<smem>>
    %276 = vector.broadcast %275 : i32 to vector<1x18xi32>
    %277 = arith.cmpi eq, %213, %276 : vector<1x18xi32>
    %cst_84 = arith.constant 0.000000e+00 : f32
    %278 = vector.broadcast %cst_84 : f32 to vector<1x18xf32>
    %279 = arith.select %277, %270, %278 : vector<1x18xi1>, vector<1x18xf32>
    %280 = vector.shape_cast %279 : vector<1x18xf32> to vector<1x1x18xf32>
    %cst_85 = arith.constant dense<0.000000e+00> : vector<1xf32>
    %281 = vector.multi_reduction <add>, %280, %cst_85 [1, 2] : vector<1x1x18xf32> to vector<1xf32>
    %282 = vector.shape_cast %281 : vector<1xf32> to vector<1x1x1xf32>
    %283 = vector.extract %282[0, 0, 0] : f32 from vector<1x1x1xf32>
    %284 = vector.shape_cast %274 : vector<1x1xf32> to vector<1x1x1xf32>
    %cst_86 = arith.constant dense<0.000000e+00> : vector<1xf32>
    %285 = vector.multi_reduction <add>, %284, %cst_86 [1, 2] : vector<1x1x1xf32> to vector<1xf32>
    %286 = vector.shape_cast %285 : vector<1xf32> to vector<1x1x1xf32>
    %287 = vector.extract %286[0, 0, 0] : f32 from vector<1x1x1xf32>
    %288 = arith.subf %287, %283 : f32
    %cst_87 = arith.constant 1.000000e+00 : f32
    %289 = arith.mulf %cst_87, %288 : f32
    %cst_88 = arith.constant 0.000000e+00 : f32
    %290 = arith.addf %cst_88, %289 : f32
    %cst_89 = arith.constant 0.000000e+00 : f32
    %291 = vector.broadcast %cst_89 : f32 to vector<1x18xf32>
    %292 = arith.cmpf oeq, %270, %291 : vector<1x18xf32>
    %c18_i32 = arith.constant 18 : i32
    %293 = vector.broadcast %c18_i32 : i32 to vector<1x18xi32>
    %294 = arith.select %292, %213, %293 : vector<1x18xi1>, vector<1x18xi32>
    %295 = vector.shape_cast %294 : vector<1x18xi32> to vector<1x1x18xi32>
    %cst_90 = arith.constant dense<2147483647> : vector<1xi32>
    %296 = vector.multi_reduction <minsi>, %295, %cst_90 [1, 2] : vector<1x1x18xi32> to vector<1xi32>
    %297 = vector.shape_cast %296 : vector<1xi32> to vector<1x1x1xi32>
    %298 = vector.extract %297[0, 0, 0] : i32 from vector<1x1x1xi32>
    %c1_i32_91 = arith.constant 1 : i32
    %299 = arith.cmpi eq, %298, %c1_i32_91 : i32
    %cst_92 = arith.constant 0.000000e+00 : f32
    %cst_93 = arith.constant 1.000000e+00 : f32
    %300 = arith.select %299, %cst_92, %cst_93 : f32
    %cst_94 = arith.constant 1.000000e+00 : f32
    %301 = arith.mulf %cst_94, %300 : f32
    %302 = vector.broadcast %298 : i32 to vector<1x18xi32>
    %303 = arith.cmpi eq, %213, %302 : vector<1x18xi32>
    %cst_95 = arith.constant 1.000000e+00 : f32
    %cst_96 = arith.constant 0.000000e+00 : f32
    %304 = vector.broadcast %cst_95 : f32 to vector<1x18xf32>
    %305 = vector.broadcast %cst_96 : f32 to vector<1x18xf32>
    %306 = arith.select %303, %304, %305 : vector<1x18xi1>, vector<1x18xf32>
    %c0_97 = arith.constant 0 : index
    %c0_98 = arith.constant 0 : index
    %307 = vector.load %arg5[%c0_97, %c0_98] : memref<18x40xf32, #tpu.memory_space<vmem>>, vector<18x40xf32>
    %cst_99 = arith.constant dense<0.000000e+00> : vector<1x40xf32>
    %308 = tpu.matmul %306, %307, %cst_99 {dimension_numbers = #tpu.dot_dimension_numbers<[1], [0], [0], [1], [0, 0, 1, 1], [], []>} : vector<1x18xf32>, vector<18x40xf32>, vector<1x40xf32> -> vector<1x40xf32>
    %c0_100 = arith.constant 0 : index
    %c0_101 = arith.constant 0 : index
    %309 = vector.load %arg6[%c0_100, %c0_101] : memref<32x104xf32, #tpu.memory_space<vmem>>, vector<32x104xf32>
    %cst_102 = arith.constant dense<0.000000e+00> : vector<1x104xf32>
    %310 = tpu.matmul %262, %309, %cst_102 {dimension_numbers = #tpu.dot_dimension_numbers<[1], [0], [0], [1], [0, 0, 1, 1], [], []>} : vector<1x32xf32>, vector<32x104xf32>, vector<1x104xf32> -> vector<1x104xf32>
    %c0_103 = arith.constant 0 : index
    %c0_104 = arith.constant 0 : index
    %311 = vector.load %arg7[%c0_103, %c0_104] : memref<1x104xf32, #tpu.memory_space<vmem>>, vector<1x104xf32>
    %312 = arith.addf %310, %311 : vector<1x104xf32>
    %313 = vector.extract_strided_slice %308 {offsets = [0, 0], sizes = [1, 8], strides = [1, 1]} : vector<1x40xf32> to vector<1x8xf32>
    %314 = vector.extract_strided_slice %312 {offsets = [0, 96], sizes = [1, 8], strides = [1, 1]} : vector<1x104xf32> to vector<1x8xf32>
    %315 = arith.addf %313, %314 : vector<1x8xf32>
    %cst_105 = arith.constant dense<0xFF800000> : vector<1xf32>
    %316 = vector.multi_reduction <maximumf>, %315, %cst_105 [1] : vector<1x8xf32> to vector<1xf32>
    %317 = vector.shape_cast %316 : vector<1xf32> to vector<1x1xf32>
    %318 = vector.broadcast %317 : vector<1x1xf32> to vector<1x8xf32>
    %319 = arith.subf %315, %318 : vector<1x8xf32>
    %320 = math.exp %319 : vector<1x8xf32>
    %cst_106 = arith.constant dense<0.000000e+00> : vector<1xf32>
    %321 = vector.multi_reduction <add>, %320, %cst_106 [1] : vector<1x8xf32> to vector<1xf32>
    %322 = vector.shape_cast %321 : vector<1xf32> to vector<1x1xf32>
    %323 = tpu.reciprocal %322 {approx = true} : vector<1x1xf32> -> vector<1x1xf32>
    %324 = vector.broadcast %323 : vector<1x1xf32> to vector<1x8xf32>
    %325 = arith.mulf %320, %324 : vector<1x8xf32>
    %cst_107 = arith.constant dense<0.000000e+00> : vector<1x32xf32>
    %326 = tpu.matmul %325, %212, %cst_107 {dimension_numbers = #tpu.dot_dimension_numbers<[1], [0], [0], [1], [0, 0, 1, 1], [], []>} : vector<1x8xf32>, vector<8x32xf32>, vector<1x32xf32> -> vector<1x32xf32>
    %327 = vector.extract_strided_slice %308 {offsets = [0, 8], sizes = [1, 32], strides = [1, 1]} : vector<1x40xf32> to vector<1x32xf32>
    %c0_108 = arith.constant 0 : index
    %c0_109 = arith.constant 0 : index
    %328 = vector.load %arg10[%c0_108, %c0_109] : memref<32x32xf32, #tpu.memory_space<vmem>>, vector<32x32xf32>
    %cst_110 = arith.constant dense<0.000000e+00> : vector<1x32xf32>
    %329 = tpu.matmul %326, %328, %cst_110 {dimension_numbers = #tpu.dot_dimension_numbers<[1], [0], [0], [1], [0, 0, 1, 1], [], []>} : vector<1x32xf32>, vector<32x32xf32>, vector<1x32xf32> -> vector<1x32xf32>
    %330 = arith.addf %327, %329 : vector<1x32xf32>
    %cst_111 = arith.constant 0.000000e+00 : f32
    %331 = vector.broadcast %cst_111 : f32 to vector<1x32xf32>
    %332 = arith.maximumf %330, %331 : vector<1x32xf32>
    %c0_112 = arith.constant 0 : index
    %c0_113 = arith.constant 0 : index
    %333 = vector.load %arg8[%c0_112, %c0_113] : memref<32x96xf32, #tpu.memory_space<vmem>>, vector<32x96xf32>
    %cst_114 = arith.constant dense<0.000000e+00> : vector<1x96xf32>
    %334 = tpu.matmul %332, %333, %cst_114 {dimension_numbers = #tpu.dot_dimension_numbers<[1], [0], [0], [1], [0, 0, 1, 1], [], []>} : vector<1x32xf32>, vector<32x96xf32>, vector<1x96xf32> -> vector<1x96xf32>
    %c0_115 = arith.constant 0 : index
    %c0_116 = arith.constant 0 : index
    %335 = vector.load %arg9[%c0_115, %c0_116] : memref<1x96xf32, #tpu.memory_space<vmem>>, vector<1x96xf32>
    %336 = arith.addf %334, %335 : vector<1x96xf32>
    %337 = vector.extract_strided_slice %336 {offsets = [0, 0], sizes = [1, 64], strides = [1, 1]} : vector<1x96xf32> to vector<1x64xf32>
    %338 = vector.extract_strided_slice %312 {offsets = [0, 0], sizes = [1, 64], strides = [1, 1]} : vector<1x104xf32> to vector<1x64xf32>
    %339 = arith.addf %337, %338 : vector<1x64xf32>
    %340 = arith.negf %339 : vector<1x64xf32>
    %341 = math.exp %340 : vector<1x64xf32>
    %cst_117 = arith.constant 1.000000e+00 : f32
    %342 = vector.broadcast %cst_117 : f32 to vector<1x64xf32>
    %343 = arith.addf %342, %341 : vector<1x64xf32>
    %344 = arith.divf %342, %343 : vector<1x64xf32>
    %345 = vector.extract_strided_slice %344 {offsets = [0, 0], sizes = [1, 32], strides = [1, 1]} : vector<1x64xf32> to vector<1x32xf32>
    %346 = vector.extract_strided_slice %344 {offsets = [0, 32], sizes = [1, 32], strides = [1, 1]} : vector<1x64xf32> to vector<1x32xf32>
    %347 = vector.extract_strided_slice %336 {offsets = [0, 64], sizes = [1, 32], strides = [1, 1]} : vector<1x96xf32> to vector<1x32xf32>
    %348 = vector.extract_strided_slice %312 {offsets = [0, 64], sizes = [1, 32], strides = [1, 1]} : vector<1x104xf32> to vector<1x32xf32>
    %349 = arith.mulf %345, %348 : vector<1x32xf32>
    %350 = arith.addf %347, %349 : vector<1x32xf32>
    %351 = math.tanh %350 : vector<1x32xf32>
    %cst_118 = arith.constant 1.000000e+00 : f32
    %352 = vector.broadcast %cst_118 : f32 to vector<1x32xf32>
    %353 = arith.subf %352, %346 : vector<1x32xf32>
    %354 = arith.mulf %353, %351 : vector<1x32xf32>
    %355 = arith.mulf %346, %262 : vector<1x32xf32>
    %356 = arith.addf %354, %355 : vector<1x32xf32>
    %c0_119 = arith.constant 0 : index
    %c0_120 = arith.constant 0 : index
    %357 = vector.load %arg11[%c0_119, %c0_120] : memref<32x18xf32, #tpu.memory_space<vmem>>, vector<32x18xf32>
    %cst_121 = arith.constant dense<0.000000e+00> : vector<1x18xf32>
    %358 = tpu.matmul %356, %357, %cst_121 {dimension_numbers = #tpu.dot_dimension_numbers<[1], [0], [0], [1], [0, 0, 1, 1], [], []>} : vector<1x32xf32>, vector<32x18xf32>, vector<1x18xf32> -> vector<1x18xf32>
    %c0_122 = arith.constant 0 : index
    %c0_123 = arith.constant 0 : index
    %359 = vector.load %arg12[%c0_122, %c0_123] : memref<1x18xf32, #tpu.memory_space<vmem>>, vector<1x18xf32>
    %360 = arith.addf %358, %359 : vector<1x18xf32>
    %cst_124 = arith.constant dense<0xFF800000> : vector<1xf32>
    %361 = vector.multi_reduction <maximumf>, %360, %cst_124 [1] : vector<1x18xf32> to vector<1xf32>
    %362 = vector.shape_cast %361 : vector<1xf32> to vector<1x1xf32>
    %363 = vector.broadcast %362 : vector<1x1xf32> to vector<1x18xf32>
    %364 = arith.subf %360, %363 : vector<1x18xf32>
    %365 = math.exp %364 : vector<1x18xf32>
    %cst_125 = arith.constant dense<0.000000e+00> : vector<1xf32>
    %366 = vector.multi_reduction <add>, %365, %cst_125 [1] : vector<1x18xf32> to vector<1xf32>
    %367 = vector.shape_cast %366 : vector<1xf32> to vector<1x1xf32>
    %368 = math.log %367 : vector<1x1xf32>
    %c1_126 = arith.constant 1 : index
    %369 = memref.load %arg1[%c1_126] : memref<8xi32, #tpu.memory_space<smem>>
    %370 = vector.broadcast %369 : i32 to vector<1x18xi32>
    %371 = arith.cmpi eq, %213, %370 : vector<1x18xi32>
    %cst_127 = arith.constant 0.000000e+00 : f32
    %372 = vector.broadcast %cst_127 : f32 to vector<1x18xf32>
    %373 = arith.select %371, %364, %372 : vector<1x18xi1>, vector<1x18xf32>
    %374 = vector.shape_cast %373 : vector<1x18xf32> to vector<1x1x18xf32>
    %cst_128 = arith.constant dense<0.000000e+00> : vector<1xf32>
    %375 = vector.multi_reduction <add>, %374, %cst_128 [1, 2] : vector<1x1x18xf32> to vector<1xf32>
    %376 = vector.shape_cast %375 : vector<1xf32> to vector<1x1x1xf32>
    %377 = vector.extract %376[0, 0, 0] : f32 from vector<1x1x1xf32>
    %378 = vector.shape_cast %368 : vector<1x1xf32> to vector<1x1x1xf32>
    %cst_129 = arith.constant dense<0.000000e+00> : vector<1xf32>
    %379 = vector.multi_reduction <add>, %378, %cst_129 [1, 2] : vector<1x1x1xf32> to vector<1xf32>
    %380 = vector.shape_cast %379 : vector<1xf32> to vector<1x1x1xf32>
    %381 = vector.extract %380[0, 0, 0] : f32 from vector<1x1x1xf32>
    %382 = arith.subf %381, %377 : f32
    %383 = arith.mulf %301, %382 : f32
    %384 = arith.addf %290, %383 : f32
    %cst_130 = arith.constant 0.000000e+00 : f32
    %385 = vector.broadcast %cst_130 : f32 to vector<1x18xf32>
    %386 = arith.cmpf oeq, %364, %385 : vector<1x18xf32>
    %c18_i32_131 = arith.constant 18 : i32
    %387 = vector.broadcast %c18_i32_131 : i32 to vector<1x18xi32>
    %388 = arith.select %386, %213, %387 : vector<1x18xi1>, vector<1x18xi32>
    %389 = vector.shape_cast %388 : vector<1x18xi32> to vector<1x1x18xi32>
    %cst_132 = arith.constant dense<2147483647> : vector<1xi32>
    %390 = vector.multi_reduction <minsi>, %389, %cst_132 [1, 2] : vector<1x1x18xi32> to vector<1xi32>
    %391 = vector.shape_cast %390 : vector<1xi32> to vector<1x1x1xi32>
    %392 = vector.extract %391[0, 0, 0] : i32 from vector<1x1x1xi32>
    %c1_i32_133 = arith.constant 1 : i32
    %393 = arith.cmpi eq, %392, %c1_i32_133 : i32
    %cst_134 = arith.constant 0.000000e+00 : f32
    %cst_135 = arith.constant 1.000000e+00 : f32
    %394 = arith.select %393, %cst_134, %cst_135 : f32
    %395 = arith.mulf %301, %394 : f32
    %396 = vector.broadcast %392 : i32 to vector<1x18xi32>
    %397 = arith.cmpi eq, %213, %396 : vector<1x18xi32>
    %cst_136 = arith.constant 1.000000e+00 : f32
    %cst_137 = arith.constant 0.000000e+00 : f32
    %398 = vector.broadcast %cst_136 : f32 to vector<1x18xf32>
    %399 = vector.broadcast %cst_137 : f32 to vector<1x18xf32>
    %400 = arith.select %397, %398, %399 : vector<1x18xi1>, vector<1x18xf32>
    %c0_138 = arith.constant 0 : index
    %c0_139 = arith.constant 0 : index
    %401 = vector.load %arg5[%c0_138, %c0_139] : memref<18x40xf32, #tpu.memory_space<vmem>>, vector<18x40xf32>
    %cst_140 = arith.constant dense<0.000000e+00> : vector<1x40xf32>
    %402 = tpu.matmul %400, %401, %cst_140 {dimension_numbers = #tpu.dot_dimension_numbers<[1], [0], [0], [1], [0, 0, 1, 1], [], []>} : vector<1x18xf32>, vector<18x40xf32>, vector<1x40xf32> -> vector<1x40xf32>
    %c0_141 = arith.constant 0 : index
    %c0_142 = arith.constant 0 : index
    %403 = vector.load %arg6[%c0_141, %c0_142] : memref<32x104xf32, #tpu.memory_space<vmem>>, vector<32x104xf32>
    %cst_143 = arith.constant dense<0.000000e+00> : vector<1x104xf32>
    %404 = tpu.matmul %356, %403, %cst_143 {dimension_numbers = #tpu.dot_dimension_numbers<[1], [0], [0], [1], [0, 0, 1, 1], [], []>} : vector<1x32xf32>, vector<32x104xf32>, vector<1x104xf32> -> vector<1x104xf32>
    %c0_144 = arith.constant 0 : index
    %c0_145 = arith.constant 0 : index
    %405 = vector.load %arg7[%c0_144, %c0_145] : memref<1x104xf32, #tpu.memory_space<vmem>>, vector<1x104xf32>
    %406 = arith.addf %404, %405 : vector<1x104xf32>
    %407 = vector.extract_strided_slice %402 {offsets = [0, 0], sizes = [1, 8], strides = [1, 1]} : vector<1x40xf32> to vector<1x8xf32>
    %408 = vector.extract_strided_slice %406 {offsets = [0, 96], sizes = [1, 8], strides = [1, 1]} : vector<1x104xf32> to vector<1x8xf32>
    %409 = arith.addf %407, %408 : vector<1x8xf32>
    %cst_146 = arith.constant dense<0xFF800000> : vector<1xf32>
    %410 = vector.multi_reduction <maximumf>, %409, %cst_146 [1] : vector<1x8xf32> to vector<1xf32>
    %411 = vector.shape_cast %410 : vector<1xf32> to vector<1x1xf32>
    %412 = vector.broadcast %411 : vector<1x1xf32> to vector<1x8xf32>
    %413 = arith.subf %409, %412 : vector<1x8xf32>
    %414 = math.exp %413 : vector<1x8xf32>
    %cst_147 = arith.constant dense<0.000000e+00> : vector<1xf32>
    %415 = vector.multi_reduction <add>, %414, %cst_147 [1] : vector<1x8xf32> to vector<1xf32>
    %416 = vector.shape_cast %415 : vector<1xf32> to vector<1x1xf32>
    %417 = tpu.reciprocal %416 {approx = true} : vector<1x1xf32> -> vector<1x1xf32>
    %418 = vector.broadcast %417 : vector<1x1xf32> to vector<1x8xf32>
    %419 = arith.mulf %414, %418 : vector<1x8xf32>
    %cst_148 = arith.constant dense<0.000000e+00> : vector<1x32xf32>
    %420 = tpu.matmul %419, %212, %cst_148 {dimension_numbers = #tpu.dot_dimension_numbers<[1], [0], [0], [1], [0, 0, 1, 1], [], []>} : vector<1x8xf32>, vector<8x32xf32>, vector<1x32xf32> -> vector<1x32xf32>
    %421 = vector.extract_strided_slice %402 {offsets = [0, 8], sizes = [1, 32], strides = [1, 1]} : vector<1x40xf32> to vector<1x32xf32>
    %c0_149 = arith.constant 0 : index
    %c0_150 = arith.constant 0 : index
    %422 = vector.load %arg10[%c0_149, %c0_150] : memref<32x32xf32, #tpu.memory_space<vmem>>, vector<32x32xf32>
    %cst_151 = arith.constant dense<0.000000e+00> : vector<1x32xf32>
    %423 = tpu.matmul %420, %422, %cst_151 {dimension_numbers = #tpu.dot_dimension_numbers<[1], [0], [0], [1], [0, 0, 1, 1], [], []>} : vector<1x32xf32>, vector<32x32xf32>, vector<1x32xf32> -> vector<1x32xf32>
    %424 = arith.addf %421, %423 : vector<1x32xf32>
    %cst_152 = arith.constant 0.000000e+00 : f32
    %425 = vector.broadcast %cst_152 : f32 to vector<1x32xf32>
    %426 = arith.maximumf %424, %425 : vector<1x32xf32>
    %c0_153 = arith.constant 0 : index
    %c0_154 = arith.constant 0 : index
    %427 = vector.load %arg8[%c0_153, %c0_154] : memref<32x96xf32, #tpu.memory_space<vmem>>, vector<32x96xf32>
    %cst_155 = arith.constant dense<0.000000e+00> : vector<1x96xf32>
    %428 = tpu.matmul %426, %427, %cst_155 {dimension_numbers = #tpu.dot_dimension_numbers<[1], [0], [0], [1], [0, 0, 1, 1], [], []>} : vector<1x32xf32>, vector<32x96xf32>, vector<1x96xf32> -> vector<1x96xf32>
    %c0_156 = arith.constant 0 : index
    %c0_157 = arith.constant 0 : index
    %429 = vector.load %arg9[%c0_156, %c0_157] : memref<1x96xf32, #tpu.memory_space<vmem>>, vector<1x96xf32>
    %430 = arith.addf %428, %429 : vector<1x96xf32>
    %431 = vector.extract_strided_slice %430 {offsets = [0, 0], sizes = [1, 64], strides = [1, 1]} : vector<1x96xf32> to vector<1x64xf32>
    %432 = vector.extract_strided_slice %406 {offsets = [0, 0], sizes = [1, 64], strides = [1, 1]} : vector<1x104xf32> to vector<1x64xf32>
    %433 = arith.addf %431, %432 : vector<1x64xf32>
    %434 = arith.negf %433 : vector<1x64xf32>
    %435 = math.exp %434 : vector<1x64xf32>
    %cst_158 = arith.constant 1.000000e+00 : f32
    %436 = vector.broadcast %cst_158 : f32 to vector<1x64xf32>
    %437 = arith.addf %436, %435 : vector<1x64xf32>
    %438 = arith.divf %436, %437 : vector<1x64xf32>
    %439 = vector.extract_strided_slice %438 {offsets = [0, 0], sizes = [1, 32], strides = [1, 1]} : vector<1x64xf32> to vector<1x32xf32>
    %440 = vector.extract_strided_slice %438 {offsets = [0, 32], sizes = [1, 32], strides = [1, 1]} : vector<1x64xf32> to vector<1x32xf32>
    %441 = vector.extract_strided_slice %430 {offsets = [0, 64], sizes = [1, 32], strides = [1, 1]} : vector<1x96xf32> to vector<1x32xf32>
    %442 = vector.extract_strided_slice %406 {offsets = [0, 64], sizes = [1, 32], strides = [1, 1]} : vector<1x104xf32> to vector<1x32xf32>
    %443 = arith.mulf %439, %442 : vector<1x32xf32>
    %444 = arith.addf %441, %443 : vector<1x32xf32>
    %445 = math.tanh %444 : vector<1x32xf32>
    %cst_159 = arith.constant 1.000000e+00 : f32
    %446 = vector.broadcast %cst_159 : f32 to vector<1x32xf32>
    %447 = arith.subf %446, %440 : vector<1x32xf32>
    %448 = arith.mulf %447, %445 : vector<1x32xf32>
    %449 = arith.mulf %440, %356 : vector<1x32xf32>
    %450 = arith.addf %448, %449 : vector<1x32xf32>
    %c0_160 = arith.constant 0 : index
    %c0_161 = arith.constant 0 : index
    %451 = vector.load %arg11[%c0_160, %c0_161] : memref<32x18xf32, #tpu.memory_space<vmem>>, vector<32x18xf32>
    %cst_162 = arith.constant dense<0.000000e+00> : vector<1x18xf32>
    %452 = tpu.matmul %450, %451, %cst_162 {dimension_numbers = #tpu.dot_dimension_numbers<[1], [0], [0], [1], [0, 0, 1, 1], [], []>} : vector<1x32xf32>, vector<32x18xf32>, vector<1x18xf32> -> vector<1x18xf32>
    %c0_163 = arith.constant 0 : index
    %c0_164 = arith.constant 0 : index
    %453 = vector.load %arg12[%c0_163, %c0_164] : memref<1x18xf32, #tpu.memory_space<vmem>>, vector<1x18xf32>
    %454 = arith.addf %452, %453 : vector<1x18xf32>
    %cst_165 = arith.constant dense<0xFF800000> : vector<1xf32>
    %455 = vector.multi_reduction <maximumf>, %454, %cst_165 [1] : vector<1x18xf32> to vector<1xf32>
    %456 = vector.shape_cast %455 : vector<1xf32> to vector<1x1xf32>
    %457 = vector.broadcast %456 : vector<1x1xf32> to vector<1x18xf32>
    %458 = arith.subf %454, %457 : vector<1x18xf32>
    %459 = math.exp %458 : vector<1x18xf32>
    %cst_166 = arith.constant dense<0.000000e+00> : vector<1xf32>
    %460 = vector.multi_reduction <add>, %459, %cst_166 [1] : vector<1x18xf32> to vector<1xf32>
    %461 = vector.shape_cast %460 : vector<1xf32> to vector<1x1xf32>
    %462 = math.log %461 : vector<1x1xf32>
    %c2_167 = arith.constant 2 : index
    %463 = memref.load %arg1[%c2_167] : memref<8xi32, #tpu.memory_space<smem>>
    %464 = vector.broadcast %463 : i32 to vector<1x18xi32>
    %465 = arith.cmpi eq, %213, %464 : vector<1x18xi32>
    %cst_168 = arith.constant 0.000000e+00 : f32
    %466 = vector.broadcast %cst_168 : f32 to vector<1x18xf32>
    %467 = arith.select %465, %458, %466 : vector<1x18xi1>, vector<1x18xf32>
    %468 = vector.shape_cast %467 : vector<1x18xf32> to vector<1x1x18xf32>
    %cst_169 = arith.constant dense<0.000000e+00> : vector<1xf32>
    %469 = vector.multi_reduction <add>, %468, %cst_169 [1, 2] : vector<1x1x18xf32> to vector<1xf32>
    %470 = vector.shape_cast %469 : vector<1xf32> to vector<1x1x1xf32>
    %471 = vector.extract %470[0, 0, 0] : f32 from vector<1x1x1xf32>
    %472 = vector.shape_cast %462 : vector<1x1xf32> to vector<1x1x1xf32>
    %cst_170 = arith.constant dense<0.000000e+00> : vector<1xf32>
    %473 = vector.multi_reduction <add>, %472, %cst_170 [1, 2] : vector<1x1x1xf32> to vector<1xf32>
    %474 = vector.shape_cast %473 : vector<1xf32> to vector<1x1x1xf32>
    %475 = vector.extract %474[0, 0, 0] : f32 from vector<1x1x1xf32>
    %476 = arith.subf %475, %471 : f32
    %477 = arith.mulf %395, %476 : f32
    %478 = arith.addf %384, %477 : f32
    %cst_171 = arith.constant 0.000000e+00 : f32
    %479 = vector.broadcast %cst_171 : f32 to vector<1x18xf32>
    %480 = arith.cmpf oeq, %458, %479 : vector<1x18xf32>
    %c18_i32_172 = arith.constant 18 : i32
    %481 = vector.broadcast %c18_i32_172 : i32 to vector<1x18xi32>
    %482 = arith.select %480, %213, %481 : vector<1x18xi1>, vector<1x18xi32>
    %483 = vector.shape_cast %482 : vector<1x18xi32> to vector<1x1x18xi32>
    %cst_173 = arith.constant dense<2147483647> : vector<1xi32>
    %484 = vector.multi_reduction <minsi>, %483, %cst_173 [1, 2] : vector<1x1x18xi32> to vector<1xi32>
    %485 = vector.shape_cast %484 : vector<1xi32> to vector<1x1x1xi32>
    %486 = vector.extract %485[0, 0, 0] : i32 from vector<1x1x1xi32>
    %c1_i32_174 = arith.constant 1 : i32
    %487 = arith.cmpi eq, %486, %c1_i32_174 : i32
    %cst_175 = arith.constant 0.000000e+00 : f32
    %cst_176 = arith.constant 1.000000e+00 : f32
    %488 = arith.select %487, %cst_175, %cst_176 : f32
    %489 = arith.mulf %395, %488 : f32
    %490 = vector.broadcast %486 : i32 to vector<1x18xi32>
    %491 = arith.cmpi eq, %213, %490 : vector<1x18xi32>
    %cst_177 = arith.constant 1.000000e+00 : f32
    %cst_178 = arith.constant 0.000000e+00 : f32
    %492 = vector.broadcast %cst_177 : f32 to vector<1x18xf32>
    %493 = vector.broadcast %cst_178 : f32 to vector<1x18xf32>
    %494 = arith.select %491, %492, %493 : vector<1x18xi1>, vector<1x18xf32>
    %c0_179 = arith.constant 0 : index
    %c0_180 = arith.constant 0 : index
    %495 = vector.load %arg5[%c0_179, %c0_180] : memref<18x40xf32, #tpu.memory_space<vmem>>, vector<18x40xf32>
    %cst_181 = arith.constant dense<0.000000e+00> : vector<1x40xf32>
    %496 = tpu.matmul %494, %495, %cst_181 {dimension_numbers = #tpu.dot_dimension_numbers<[1], [0], [0], [1], [0, 0, 1, 1], [], []>} : vector<1x18xf32>, vector<18x40xf32>, vector<1x40xf32> -> vector<1x40xf32>
    %c0_182 = arith.constant 0 : index
    %c0_183 = arith.constant 0 : index
    %497 = vector.load %arg6[%c0_182, %c0_183] : memref<32x104xf32, #tpu.memory_space<vmem>>, vector<32x104xf32>
    %cst_184 = arith.constant dense<0.000000e+00> : vector<1x104xf32>
    %498 = tpu.matmul %450, %497, %cst_184 {dimension_numbers = #tpu.dot_dimension_numbers<[1], [0], [0], [1], [0, 0, 1, 1], [], []>} : vector<1x32xf32>, vector<32x104xf32>, vector<1x104xf32> -> vector<1x104xf32>
    %c0_185 = arith.constant 0 : index
    %c0_186 = arith.constant 0 : index
    %499 = vector.load %arg7[%c0_185, %c0_186] : memref<1x104xf32, #tpu.memory_space<vmem>>, vector<1x104xf32>
    %500 = arith.addf %498, %499 : vector<1x104xf32>
    %501 = vector.extract_strided_slice %496 {offsets = [0, 0], sizes = [1, 8], strides = [1, 1]} : vector<1x40xf32> to vector<1x8xf32>
    %502 = vector.extract_strided_slice %500 {offsets = [0, 96], sizes = [1, 8], strides = [1, 1]} : vector<1x104xf32> to vector<1x8xf32>
    %503 = arith.addf %501, %502 : vector<1x8xf32>
    %cst_187 = arith.constant dense<0xFF800000> : vector<1xf32>
    %504 = vector.multi_reduction <maximumf>, %503, %cst_187 [1] : vector<1x8xf32> to vector<1xf32>
    %505 = vector.shape_cast %504 : vector<1xf32> to vector<1x1xf32>
    %506 = vector.broadcast %505 : vector<1x1xf32> to vector<1x8xf32>
    %507 = arith.subf %503, %506 : vector<1x8xf32>
    %508 = math.exp %507 : vector<1x8xf32>
    %cst_188 = arith.constant dense<0.000000e+00> : vector<1xf32>
    %509 = vector.multi_reduction <add>, %508, %cst_188 [1] : vector<1x8xf32> to vector<1xf32>
    %510 = vector.shape_cast %509 : vector<1xf32> to vector<1x1xf32>
    %511 = tpu.reciprocal %510 {approx = true} : vector<1x1xf32> -> vector<1x1xf32>
    %512 = vector.broadcast %511 : vector<1x1xf32> to vector<1x8xf32>
    %513 = arith.mulf %508, %512 : vector<1x8xf32>
    %cst_189 = arith.constant dense<0.000000e+00> : vector<1x32xf32>
    %514 = tpu.matmul %513, %212, %cst_189 {dimension_numbers = #tpu.dot_dimension_numbers<[1], [0], [0], [1], [0, 0, 1, 1], [], []>} : vector<1x8xf32>, vector<8x32xf32>, vector<1x32xf32> -> vector<1x32xf32>
    %515 = vector.extract_strided_slice %496 {offsets = [0, 8], sizes = [1, 32], strides = [1, 1]} : vector<1x40xf32> to vector<1x32xf32>
    %c0_190 = arith.constant 0 : index
    %c0_191 = arith.constant 0 : index
    %516 = vector.load %arg10[%c0_190, %c0_191] : memref<32x32xf32, #tpu.memory_space<vmem>>, vector<32x32xf32>
    %cst_192 = arith.constant dense<0.000000e+00> : vector<1x32xf32>
    %517 = tpu.matmul %514, %516, %cst_192 {dimension_numbers = #tpu.dot_dimension_numbers<[1], [0], [0], [1], [0, 0, 1, 1], [], []>} : vector<1x32xf32>, vector<32x32xf32>, vector<1x32xf32> -> vector<1x32xf32>
    %518 = arith.addf %515, %517 : vector<1x32xf32>
    %cst_193 = arith.constant 0.000000e+00 : f32
    %519 = vector.broadcast %cst_193 : f32 to vector<1x32xf32>
    %520 = arith.maximumf %518, %519 : vector<1x32xf32>
    %c0_194 = arith.constant 0 : index
    %c0_195 = arith.constant 0 : index
    %521 = vector.load %arg8[%c0_194, %c0_195] : memref<32x96xf32, #tpu.memory_space<vmem>>, vector<32x96xf32>
    %cst_196 = arith.constant dense<0.000000e+00> : vector<1x96xf32>
    %522 = tpu.matmul %520, %521, %cst_196 {dimension_numbers = #tpu.dot_dimension_numbers<[1], [0], [0], [1], [0, 0, 1, 1], [], []>} : vector<1x32xf32>, vector<32x96xf32>, vector<1x96xf32> -> vector<1x96xf32>
    %c0_197 = arith.constant 0 : index
    %c0_198 = arith.constant 0 : index
    %523 = vector.load %arg9[%c0_197, %c0_198] : memref<1x96xf32, #tpu.memory_space<vmem>>, vector<1x96xf32>
    %524 = arith.addf %522, %523 : vector<1x96xf32>
    %525 = vector.extract_strided_slice %524 {offsets = [0, 0], sizes = [1, 64], strides = [1, 1]} : vector<1x96xf32> to vector<1x64xf32>
    %526 = vector.extract_strided_slice %500 {offsets = [0, 0], sizes = [1, 64], strides = [1, 1]} : vector<1x104xf32> to vector<1x64xf32>
    %527 = arith.addf %525, %526 : vector<1x64xf32>
    %528 = arith.negf %527 : vector<1x64xf32>
    %529 = math.exp %528 : vector<1x64xf32>
    %cst_199 = arith.constant 1.000000e+00 : f32
    %530 = vector.broadcast %cst_199 : f32 to vector<1x64xf32>
    %531 = arith.addf %530, %529 : vector<1x64xf32>
    %532 = arith.divf %530, %531 : vector<1x64xf32>
    %533 = vector.extract_strided_slice %532 {offsets = [0, 0], sizes = [1, 32], strides = [1, 1]} : vector<1x64xf32> to vector<1x32xf32>
    %534 = vector.extract_strided_slice %532 {offsets = [0, 32], sizes = [1, 32], strides = [1, 1]} : vector<1x64xf32> to vector<1x32xf32>
    %535 = vector.extract_strided_slice %524 {offsets = [0, 64], sizes = [1, 32], strides = [1, 1]} : vector<1x96xf32> to vector<1x32xf32>
    %536 = vector.extract_strided_slice %500 {offsets = [0, 64], sizes = [1, 32], strides = [1, 1]} : vector<1x104xf32> to vector<1x32xf32>
    %537 = arith.mulf %533, %536 : vector<1x32xf32>
    %538 = arith.addf %535, %537 : vector<1x32xf32>
    %539 = math.tanh %538 : vector<1x32xf32>
    %cst_200 = arith.constant 1.000000e+00 : f32
    %540 = vector.broadcast %cst_200 : f32 to vector<1x32xf32>
    %541 = arith.subf %540, %534 : vector<1x32xf32>
    %542 = arith.mulf %541, %539 : vector<1x32xf32>
    %543 = arith.mulf %534, %450 : vector<1x32xf32>
    %544 = arith.addf %542, %543 : vector<1x32xf32>
    %c0_201 = arith.constant 0 : index
    %c0_202 = arith.constant 0 : index
    %545 = vector.load %arg11[%c0_201, %c0_202] : memref<32x18xf32, #tpu.memory_space<vmem>>, vector<32x18xf32>
    %cst_203 = arith.constant dense<0.000000e+00> : vector<1x18xf32>
    %546 = tpu.matmul %544, %545, %cst_203 {dimension_numbers = #tpu.dot_dimension_numbers<[1], [0], [0], [1], [0, 0, 1, 1], [], []>} : vector<1x32xf32>, vector<32x18xf32>, vector<1x18xf32> -> vector<1x18xf32>
    %c0_204 = arith.constant 0 : index
    %c0_205 = arith.constant 0 : index
    %547 = vector.load %arg12[%c0_204, %c0_205] : memref<1x18xf32, #tpu.memory_space<vmem>>, vector<1x18xf32>
    %548 = arith.addf %546, %547 : vector<1x18xf32>
    %cst_206 = arith.constant dense<0xFF800000> : vector<1xf32>
    %549 = vector.multi_reduction <maximumf>, %548, %cst_206 [1] : vector<1x18xf32> to vector<1xf32>
    %550 = vector.shape_cast %549 : vector<1xf32> to vector<1x1xf32>
    %551 = vector.broadcast %550 : vector<1x1xf32> to vector<1x18xf32>
    %552 = arith.subf %548, %551 : vector<1x18xf32>
    %553 = math.exp %552 : vector<1x18xf32>
    %cst_207 = arith.constant dense<0.000000e+00> : vector<1xf32>
    %554 = vector.multi_reduction <add>, %553, %cst_207 [1] : vector<1x18xf32> to vector<1xf32>
    %555 = vector.shape_cast %554 : vector<1xf32> to vector<1x1xf32>
    %556 = math.log %555 : vector<1x1xf32>
    %c3_208 = arith.constant 3 : index
    %557 = memref.load %arg1[%c3_208] : memref<8xi32, #tpu.memory_space<smem>>
    %558 = vector.broadcast %557 : i32 to vector<1x18xi32>
    %559 = arith.cmpi eq, %213, %558 : vector<1x18xi32>
    %cst_209 = arith.constant 0.000000e+00 : f32
    %560 = vector.broadcast %cst_209 : f32 to vector<1x18xf32>
    %561 = arith.select %559, %552, %560 : vector<1x18xi1>, vector<1x18xf32>
    %562 = vector.shape_cast %561 : vector<1x18xf32> to vector<1x1x18xf32>
    %cst_210 = arith.constant dense<0.000000e+00> : vector<1xf32>
    %563 = vector.multi_reduction <add>, %562, %cst_210 [1, 2] : vector<1x1x18xf32> to vector<1xf32>
    %564 = vector.shape_cast %563 : vector<1xf32> to vector<1x1x1xf32>
    %565 = vector.extract %564[0, 0, 0] : f32 from vector<1x1x1xf32>
    %566 = vector.shape_cast %556 : vector<1x1xf32> to vector<1x1x1xf32>
    %cst_211 = arith.constant dense<0.000000e+00> : vector<1xf32>
    %567 = vector.multi_reduction <add>, %566, %cst_211 [1, 2] : vector<1x1x1xf32> to vector<1xf32>
    %568 = vector.shape_cast %567 : vector<1xf32> to vector<1x1x1xf32>
    %569 = vector.extract %568[0, 0, 0] : f32 from vector<1x1x1xf32>
    %570 = arith.subf %569, %565 : f32
    %571 = arith.mulf %489, %570 : f32
    %572 = arith.addf %478, %571 : f32
    %cst_212 = arith.constant 0.000000e+00 : f32
    %573 = vector.broadcast %cst_212 : f32 to vector<1x18xf32>
    %574 = arith.cmpf oeq, %552, %573 : vector<1x18xf32>
    %c18_i32_213 = arith.constant 18 : i32
    %575 = vector.broadcast %c18_i32_213 : i32 to vector<1x18xi32>
    %576 = arith.select %574, %213, %575 : vector<1x18xi1>, vector<1x18xi32>
    %577 = vector.shape_cast %576 : vector<1x18xi32> to vector<1x1x18xi32>
    %cst_214 = arith.constant dense<2147483647> : vector<1xi32>
    %578 = vector.multi_reduction <minsi>, %577, %cst_214 [1, 2] : vector<1x1x18xi32> to vector<1xi32>
    %579 = vector.shape_cast %578 : vector<1xi32> to vector<1x1x1xi32>
    %580 = vector.extract %579[0, 0, 0] : i32 from vector<1x1x1xi32>
    %c1_i32_215 = arith.constant 1 : i32
    %581 = arith.cmpi eq, %580, %c1_i32_215 : i32
    %cst_216 = arith.constant 0.000000e+00 : f32
    %cst_217 = arith.constant 1.000000e+00 : f32
    %582 = arith.select %581, %cst_216, %cst_217 : f32
    %583 = arith.mulf %489, %582 : f32
    %584 = vector.broadcast %580 : i32 to vector<1x18xi32>
    %585 = arith.cmpi eq, %213, %584 : vector<1x18xi32>
    %cst_218 = arith.constant 1.000000e+00 : f32
    %cst_219 = arith.constant 0.000000e+00 : f32
    %586 = vector.broadcast %cst_218 : f32 to vector<1x18xf32>
    %587 = vector.broadcast %cst_219 : f32 to vector<1x18xf32>
    %588 = arith.select %585, %586, %587 : vector<1x18xi1>, vector<1x18xf32>
    %c0_220 = arith.constant 0 : index
    %c0_221 = arith.constant 0 : index
    %589 = vector.load %arg5[%c0_220, %c0_221] : memref<18x40xf32, #tpu.memory_space<vmem>>, vector<18x40xf32>
    %cst_222 = arith.constant dense<0.000000e+00> : vector<1x40xf32>
    %590 = tpu.matmul %588, %589, %cst_222 {dimension_numbers = #tpu.dot_dimension_numbers<[1], [0], [0], [1], [0, 0, 1, 1], [], []>} : vector<1x18xf32>, vector<18x40xf32>, vector<1x40xf32> -> vector<1x40xf32>
    %c0_223 = arith.constant 0 : index
    %c0_224 = arith.constant 0 : index
    %591 = vector.load %arg6[%c0_223, %c0_224] : memref<32x104xf32, #tpu.memory_space<vmem>>, vector<32x104xf32>
    %cst_225 = arith.constant dense<0.000000e+00> : vector<1x104xf32>
    %592 = tpu.matmul %544, %591, %cst_225 {dimension_numbers = #tpu.dot_dimension_numbers<[1], [0], [0], [1], [0, 0, 1, 1], [], []>} : vector<1x32xf32>, vector<32x104xf32>, vector<1x104xf32> -> vector<1x104xf32>
    %c0_226 = arith.constant 0 : index
    %c0_227 = arith.constant 0 : index
    %593 = vector.load %arg7[%c0_226, %c0_227] : memref<1x104xf32, #tpu.memory_space<vmem>>, vector<1x104xf32>
    %594 = arith.addf %592, %593 : vector<1x104xf32>
    %595 = vector.extract_strided_slice %590 {offsets = [0, 0], sizes = [1, 8], strides = [1, 1]} : vector<1x40xf32> to vector<1x8xf32>
    %596 = vector.extract_strided_slice %594 {offsets = [0, 96], sizes = [1, 8], strides = [1, 1]} : vector<1x104xf32> to vector<1x8xf32>
    %597 = arith.addf %595, %596 : vector<1x8xf32>
    %cst_228 = arith.constant dense<0xFF800000> : vector<1xf32>
    %598 = vector.multi_reduction <maximumf>, %597, %cst_228 [1] : vector<1x8xf32> to vector<1xf32>
    %599 = vector.shape_cast %598 : vector<1xf32> to vector<1x1xf32>
    %600 = vector.broadcast %599 : vector<1x1xf32> to vector<1x8xf32>
    %601 = arith.subf %597, %600 : vector<1x8xf32>
    %602 = math.exp %601 : vector<1x8xf32>
    %cst_229 = arith.constant dense<0.000000e+00> : vector<1xf32>
    %603 = vector.multi_reduction <add>, %602, %cst_229 [1] : vector<1x8xf32> to vector<1xf32>
    %604 = vector.shape_cast %603 : vector<1xf32> to vector<1x1xf32>
    %605 = tpu.reciprocal %604 {approx = true} : vector<1x1xf32> -> vector<1x1xf32>
    %606 = vector.broadcast %605 : vector<1x1xf32> to vector<1x8xf32>
    %607 = arith.mulf %602, %606 : vector<1x8xf32>
    %cst_230 = arith.constant dense<0.000000e+00> : vector<1x32xf32>
    %608 = tpu.matmul %607, %212, %cst_230 {dimension_numbers = #tpu.dot_dimension_numbers<[1], [0], [0], [1], [0, 0, 1, 1], [], []>} : vector<1x8xf32>, vector<8x32xf32>, vector<1x32xf32> -> vector<1x32xf32>
    %609 = vector.extract_strided_slice %590 {offsets = [0, 8], sizes = [1, 32], strides = [1, 1]} : vector<1x40xf32> to vector<1x32xf32>
    %c0_231 = arith.constant 0 : index
    %c0_232 = arith.constant 0 : index
    %610 = vector.load %arg10[%c0_231, %c0_232] : memref<32x32xf32, #tpu.memory_space<vmem>>, vector<32x32xf32>
    %cst_233 = arith.constant dense<0.000000e+00> : vector<1x32xf32>
    %611 = tpu.matmul %608, %610, %cst_233 {dimension_numbers = #tpu.dot_dimension_numbers<[1], [0], [0], [1], [0, 0, 1, 1], [], []>} : vector<1x32xf32>, vector<32x32xf32>, vector<1x32xf32> -> vector<1x32xf32>
    %612 = arith.addf %609, %611 : vector<1x32xf32>
    %cst_234 = arith.constant 0.000000e+00 : f32
    %613 = vector.broadcast %cst_234 : f32 to vector<1x32xf32>
    %614 = arith.maximumf %612, %613 : vector<1x32xf32>
    %c0_235 = arith.constant 0 : index
    %c0_236 = arith.constant 0 : index
    %615 = vector.load %arg8[%c0_235, %c0_236] : memref<32x96xf32, #tpu.memory_space<vmem>>, vector<32x96xf32>
    %cst_237 = arith.constant dense<0.000000e+00> : vector<1x96xf32>
    %616 = tpu.matmul %614, %615, %cst_237 {dimension_numbers = #tpu.dot_dimension_numbers<[1], [0], [0], [1], [0, 0, 1, 1], [], []>} : vector<1x32xf32>, vector<32x96xf32>, vector<1x96xf32> -> vector<1x96xf32>
    %c0_238 = arith.constant 0 : index
    %c0_239 = arith.constant 0 : index
    %617 = vector.load %arg9[%c0_238, %c0_239] : memref<1x96xf32, #tpu.memory_space<vmem>>, vector<1x96xf32>
    %618 = arith.addf %616, %617 : vector<1x96xf32>
    %619 = vector.extract_strided_slice %618 {offsets = [0, 0], sizes = [1, 64], strides = [1, 1]} : vector<1x96xf32> to vector<1x64xf32>
    %620 = vector.extract_strided_slice %594 {offsets = [0, 0], sizes = [1, 64], strides = [1, 1]} : vector<1x104xf32> to vector<1x64xf32>
    %621 = arith.addf %619, %620 : vector<1x64xf32>
    %622 = arith.negf %621 : vector<1x64xf32>
    %623 = math.exp %622 : vector<1x64xf32>
    %cst_240 = arith.constant 1.000000e+00 : f32
    %624 = vector.broadcast %cst_240 : f32 to vector<1x64xf32>
    %625 = arith.addf %624, %623 : vector<1x64xf32>
    %626 = arith.divf %624, %625 : vector<1x64xf32>
    %627 = vector.extract_strided_slice %626 {offsets = [0, 0], sizes = [1, 32], strides = [1, 1]} : vector<1x64xf32> to vector<1x32xf32>
    %628 = vector.extract_strided_slice %626 {offsets = [0, 32], sizes = [1, 32], strides = [1, 1]} : vector<1x64xf32> to vector<1x32xf32>
    %629 = vector.extract_strided_slice %618 {offsets = [0, 64], sizes = [1, 32], strides = [1, 1]} : vector<1x96xf32> to vector<1x32xf32>
    %630 = vector.extract_strided_slice %594 {offsets = [0, 64], sizes = [1, 32], strides = [1, 1]} : vector<1x104xf32> to vector<1x32xf32>
    %631 = arith.mulf %627, %630 : vector<1x32xf32>
    %632 = arith.addf %629, %631 : vector<1x32xf32>
    %633 = math.tanh %632 : vector<1x32xf32>
    %cst_241 = arith.constant 1.000000e+00 : f32
    %634 = vector.broadcast %cst_241 : f32 to vector<1x32xf32>
    %635 = arith.subf %634, %628 : vector<1x32xf32>
    %636 = arith.mulf %635, %633 : vector<1x32xf32>
    %637 = arith.mulf %628, %544 : vector<1x32xf32>
    %638 = arith.addf %636, %637 : vector<1x32xf32>
    %c0_242 = arith.constant 0 : index
    %c0_243 = arith.constant 0 : index
    %639 = vector.load %arg11[%c0_242, %c0_243] : memref<32x18xf32, #tpu.memory_space<vmem>>, vector<32x18xf32>
    %cst_244 = arith.constant dense<0.000000e+00> : vector<1x18xf32>
    %640 = tpu.matmul %638, %639, %cst_244 {dimension_numbers = #tpu.dot_dimension_numbers<[1], [0], [0], [1], [0, 0, 1, 1], [], []>} : vector<1x32xf32>, vector<32x18xf32>, vector<1x18xf32> -> vector<1x18xf32>
    %c0_245 = arith.constant 0 : index
    %c0_246 = arith.constant 0 : index
    %641 = vector.load %arg12[%c0_245, %c0_246] : memref<1x18xf32, #tpu.memory_space<vmem>>, vector<1x18xf32>
    %642 = arith.addf %640, %641 : vector<1x18xf32>
    %cst_247 = arith.constant dense<0xFF800000> : vector<1xf32>
    %643 = vector.multi_reduction <maximumf>, %642, %cst_247 [1] : vector<1x18xf32> to vector<1xf32>
    %644 = vector.shape_cast %643 : vector<1xf32> to vector<1x1xf32>
    %645 = vector.broadcast %644 : vector<1x1xf32> to vector<1x18xf32>
    %646 = arith.subf %642, %645 : vector<1x18xf32>
    %647 = math.exp %646 : vector<1x18xf32>
    %cst_248 = arith.constant dense<0.000000e+00> : vector<1xf32>
    %648 = vector.multi_reduction <add>, %647, %cst_248 [1] : vector<1x18xf32> to vector<1xf32>
    %649 = vector.shape_cast %648 : vector<1xf32> to vector<1x1xf32>
    %650 = math.log %649 : vector<1x1xf32>
    %c4_249 = arith.constant 4 : index
    %651 = memref.load %arg1[%c4_249] : memref<8xi32, #tpu.memory_space<smem>>
    %652 = vector.broadcast %651 : i32 to vector<1x18xi32>
    %653 = arith.cmpi eq, %213, %652 : vector<1x18xi32>
    %cst_250 = arith.constant 0.000000e+00 : f32
    %654 = vector.broadcast %cst_250 : f32 to vector<1x18xf32>
    %655 = arith.select %653, %646, %654 : vector<1x18xi1>, vector<1x18xf32>
    %656 = vector.shape_cast %655 : vector<1x18xf32> to vector<1x1x18xf32>
    %cst_251 = arith.constant dense<0.000000e+00> : vector<1xf32>
    %657 = vector.multi_reduction <add>, %656, %cst_251 [1, 2] : vector<1x1x18xf32> to vector<1xf32>
    %658 = vector.shape_cast %657 : vector<1xf32> to vector<1x1x1xf32>
    %659 = vector.extract %658[0, 0, 0] : f32 from vector<1x1x1xf32>
    %660 = vector.shape_cast %650 : vector<1x1xf32> to vector<1x1x1xf32>
    %cst_252 = arith.constant dense<0.000000e+00> : vector<1xf32>
    %661 = vector.multi_reduction <add>, %660, %cst_252 [1, 2] : vector<1x1x1xf32> to vector<1xf32>
    %662 = vector.shape_cast %661 : vector<1xf32> to vector<1x1x1xf32>
    %663 = vector.extract %662[0, 0, 0] : f32 from vector<1x1x1xf32>
    %664 = arith.subf %663, %659 : f32
    %665 = arith.mulf %583, %664 : f32
    %666 = arith.addf %572, %665 : f32
    %cst_253 = arith.constant 0.000000e+00 : f32
    %667 = vector.broadcast %cst_253 : f32 to vector<1x18xf32>
    %668 = arith.cmpf oeq, %646, %667 : vector<1x18xf32>
    %c18_i32_254 = arith.constant 18 : i32
    %669 = vector.broadcast %c18_i32_254 : i32 to vector<1x18xi32>
    %670 = arith.select %668, %213, %669 : vector<1x18xi1>, vector<1x18xi32>
    %671 = vector.shape_cast %670 : vector<1x18xi32> to vector<1x1x18xi32>
    %cst_255 = arith.constant dense<2147483647> : vector<1xi32>
    %672 = vector.multi_reduction <minsi>, %671, %cst_255 [1, 2] : vector<1x1x18xi32> to vector<1xi32>
    %673 = vector.shape_cast %672 : vector<1xi32> to vector<1x1x1xi32>
    %674 = vector.extract %673[0, 0, 0] : i32 from vector<1x1x1xi32>
    %c1_i32_256 = arith.constant 1 : i32
    %675 = arith.cmpi eq, %674, %c1_i32_256 : i32
    %cst_257 = arith.constant 0.000000e+00 : f32
    %cst_258 = arith.constant 1.000000e+00 : f32
    %676 = arith.select %675, %cst_257, %cst_258 : f32
    %677 = arith.mulf %583, %676 : f32
    %678 = vector.broadcast %674 : i32 to vector<1x18xi32>
    %679 = arith.cmpi eq, %213, %678 : vector<1x18xi32>
    %cst_259 = arith.constant 1.000000e+00 : f32
    %cst_260 = arith.constant 0.000000e+00 : f32
    %680 = vector.broadcast %cst_259 : f32 to vector<1x18xf32>
    %681 = vector.broadcast %cst_260 : f32 to vector<1x18xf32>
    %682 = arith.select %679, %680, %681 : vector<1x18xi1>, vector<1x18xf32>
    %c0_261 = arith.constant 0 : index
    %c0_262 = arith.constant 0 : index
    %683 = vector.load %arg5[%c0_261, %c0_262] : memref<18x40xf32, #tpu.memory_space<vmem>>, vector<18x40xf32>
    %cst_263 = arith.constant dense<0.000000e+00> : vector<1x40xf32>
    %684 = tpu.matmul %682, %683, %cst_263 {dimension_numbers = #tpu.dot_dimension_numbers<[1], [0], [0], [1], [0, 0, 1, 1], [], []>} : vector<1x18xf32>, vector<18x40xf32>, vector<1x40xf32> -> vector<1x40xf32>
    %c0_264 = arith.constant 0 : index
    %c0_265 = arith.constant 0 : index
    %685 = vector.load %arg6[%c0_264, %c0_265] : memref<32x104xf32, #tpu.memory_space<vmem>>, vector<32x104xf32>
    %cst_266 = arith.constant dense<0.000000e+00> : vector<1x104xf32>
    %686 = tpu.matmul %638, %685, %cst_266 {dimension_numbers = #tpu.dot_dimension_numbers<[1], [0], [0], [1], [0, 0, 1, 1], [], []>} : vector<1x32xf32>, vector<32x104xf32>, vector<1x104xf32> -> vector<1x104xf32>
    %c0_267 = arith.constant 0 : index
    %c0_268 = arith.constant 0 : index
    %687 = vector.load %arg7[%c0_267, %c0_268] : memref<1x104xf32, #tpu.memory_space<vmem>>, vector<1x104xf32>
    %688 = arith.addf %686, %687 : vector<1x104xf32>
    %689 = vector.extract_strided_slice %684 {offsets = [0, 0], sizes = [1, 8], strides = [1, 1]} : vector<1x40xf32> to vector<1x8xf32>
    %690 = vector.extract_strided_slice %688 {offsets = [0, 96], sizes = [1, 8], strides = [1, 1]} : vector<1x104xf32> to vector<1x8xf32>
    %691 = arith.addf %689, %690 : vector<1x8xf32>
    %cst_269 = arith.constant dense<0xFF800000> : vector<1xf32>
    %692 = vector.multi_reduction <maximumf>, %691, %cst_269 [1] : vector<1x8xf32> to vector<1xf32>
    %693 = vector.shape_cast %692 : vector<1xf32> to vector<1x1xf32>
    %694 = vector.broadcast %693 : vector<1x1xf32> to vector<1x8xf32>
    %695 = arith.subf %691, %694 : vector<1x8xf32>
    %696 = math.exp %695 : vector<1x8xf32>
    %cst_270 = arith.constant dense<0.000000e+00> : vector<1xf32>
    %697 = vector.multi_reduction <add>, %696, %cst_270 [1] : vector<1x8xf32> to vector<1xf32>
    %698 = vector.shape_cast %697 : vector<1xf32> to vector<1x1xf32>
    %699 = tpu.reciprocal %698 {approx = true} : vector<1x1xf32> -> vector<1x1xf32>
    %700 = vector.broadcast %699 : vector<1x1xf32> to vector<1x8xf32>
    %701 = arith.mulf %696, %700 : vector<1x8xf32>
    %cst_271 = arith.constant dense<0.000000e+00> : vector<1x32xf32>
    %702 = tpu.matmul %701, %212, %cst_271 {dimension_numbers = #tpu.dot_dimension_numbers<[1], [0], [0], [1], [0, 0, 1, 1], [], []>} : vector<1x8xf32>, vector<8x32xf32>, vector<1x32xf32> -> vector<1x32xf32>
    %703 = vector.extract_strided_slice %684 {offsets = [0, 8], sizes = [1, 32], strides = [1, 1]} : vector<1x40xf32> to vector<1x32xf32>
    %c0_272 = arith.constant 0 : index
    %c0_273 = arith.constant 0 : index
    %704 = vector.load %arg10[%c0_272, %c0_273] : memref<32x32xf32, #tpu.memory_space<vmem>>, vector<32x32xf32>
    %cst_274 = arith.constant dense<0.000000e+00> : vector<1x32xf32>
    %705 = tpu.matmul %702, %704, %cst_274 {dimension_numbers = #tpu.dot_dimension_numbers<[1], [0], [0], [1], [0, 0, 1, 1], [], []>} : vector<1x32xf32>, vector<32x32xf32>, vector<1x32xf32> -> vector<1x32xf32>
    %706 = arith.addf %703, %705 : vector<1x32xf32>
    %cst_275 = arith.constant 0.000000e+00 : f32
    %707 = vector.broadcast %cst_275 : f32 to vector<1x32xf32>
    %708 = arith.maximumf %706, %707 : vector<1x32xf32>
    %c0_276 = arith.constant 0 : index
    %c0_277 = arith.constant 0 : index
    %709 = vector.load %arg8[%c0_276, %c0_277] : memref<32x96xf32, #tpu.memory_space<vmem>>, vector<32x96xf32>
    %cst_278 = arith.constant dense<0.000000e+00> : vector<1x96xf32>
    %710 = tpu.matmul %708, %709, %cst_278 {dimension_numbers = #tpu.dot_dimension_numbers<[1], [0], [0], [1], [0, 0, 1, 1], [], []>} : vector<1x32xf32>, vector<32x96xf32>, vector<1x96xf32> -> vector<1x96xf32>
    %c0_279 = arith.constant 0 : index
    %c0_280 = arith.constant 0 : index
    %711 = vector.load %arg9[%c0_279, %c0_280] : memref<1x96xf32, #tpu.memory_space<vmem>>, vector<1x96xf32>
    %712 = arith.addf %710, %711 : vector<1x96xf32>
    %713 = vector.extract_strided_slice %712 {offsets = [0, 0], sizes = [1, 64], strides = [1, 1]} : vector<1x96xf32> to vector<1x64xf32>
    %714 = vector.extract_strided_slice %688 {offsets = [0, 0], sizes = [1, 64], strides = [1, 1]} : vector<1x104xf32> to vector<1x64xf32>
    %715 = arith.addf %713, %714 : vector<1x64xf32>
    %716 = arith.negf %715 : vector<1x64xf32>
    %717 = math.exp %716 : vector<1x64xf32>
    %cst_281 = arith.constant 1.000000e+00 : f32
    %718 = vector.broadcast %cst_281 : f32 to vector<1x64xf32>
    %719 = arith.addf %718, %717 : vector<1x64xf32>
    %720 = arith.divf %718, %719 : vector<1x64xf32>
    %721 = vector.extract_strided_slice %720 {offsets = [0, 0], sizes = [1, 32], strides = [1, 1]} : vector<1x64xf32> to vector<1x32xf32>
    %722 = vector.extract_strided_slice %720 {offsets = [0, 32], sizes = [1, 32], strides = [1, 1]} : vector<1x64xf32> to vector<1x32xf32>
    %723 = vector.extract_strided_slice %712 {offsets = [0, 64], sizes = [1, 32], strides = [1, 1]} : vector<1x96xf32> to vector<1x32xf32>
    %724 = vector.extract_strided_slice %688 {offsets = [0, 64], sizes = [1, 32], strides = [1, 1]} : vector<1x104xf32> to vector<1x32xf32>
    %725 = arith.mulf %721, %724 : vector<1x32xf32>
    %726 = arith.addf %723, %725 : vector<1x32xf32>
    %727 = math.tanh %726 : vector<1x32xf32>
    %cst_282 = arith.constant 1.000000e+00 : f32
    %728 = vector.broadcast %cst_282 : f32 to vector<1x32xf32>
    %729 = arith.subf %728, %722 : vector<1x32xf32>
    %730 = arith.mulf %729, %727 : vector<1x32xf32>
    %731 = arith.mulf %722, %638 : vector<1x32xf32>
    %732 = arith.addf %730, %731 : vector<1x32xf32>
    %c0_283 = arith.constant 0 : index
    %c0_284 = arith.constant 0 : index
    %733 = vector.load %arg11[%c0_283, %c0_284] : memref<32x18xf32, #tpu.memory_space<vmem>>, vector<32x18xf32>
    %cst_285 = arith.constant dense<0.000000e+00> : vector<1x18xf32>
    %734 = tpu.matmul %732, %733, %cst_285 {dimension_numbers = #tpu.dot_dimension_numbers<[1], [0], [0], [1], [0, 0, 1, 1], [], []>} : vector<1x32xf32>, vector<32x18xf32>, vector<1x18xf32> -> vector<1x18xf32>
    %c0_286 = arith.constant 0 : index
    %c0_287 = arith.constant 0 : index
    %735 = vector.load %arg12[%c0_286, %c0_287] : memref<1x18xf32, #tpu.memory_space<vmem>>, vector<1x18xf32>
    %736 = arith.addf %734, %735 : vector<1x18xf32>
    %cst_288 = arith.constant dense<0xFF800000> : vector<1xf32>
    %737 = vector.multi_reduction <maximumf>, %736, %cst_288 [1] : vector<1x18xf32> to vector<1xf32>
    %738 = vector.shape_cast %737 : vector<1xf32> to vector<1x1xf32>
    %739 = vector.broadcast %738 : vector<1x1xf32> to vector<1x18xf32>
    %740 = arith.subf %736, %739 : vector<1x18xf32>
    %741 = math.exp %740 : vector<1x18xf32>
    %cst_289 = arith.constant dense<0.000000e+00> : vector<1xf32>
    %742 = vector.multi_reduction <add>, %741, %cst_289 [1] : vector<1x18xf32> to vector<1xf32>
    %743 = vector.shape_cast %742 : vector<1xf32> to vector<1x1xf32>
    %744 = math.log %743 : vector<1x1xf32>
    %c5_290 = arith.constant 5 : index
    %745 = memref.load %arg1[%c5_290] : memref<8xi32, #tpu.memory_space<smem>>
    %746 = vector.broadcast %745 : i32 to vector<1x18xi32>
    %747 = arith.cmpi eq, %213, %746 : vector<1x18xi32>
    %cst_291 = arith.constant 0.000000e+00 : f32
    %748 = vector.broadcast %cst_291 : f32 to vector<1x18xf32>
    %749 = arith.select %747, %740, %748 : vector<1x18xi1>, vector<1x18xf32>
    %750 = vector.shape_cast %749 : vector<1x18xf32> to vector<1x1x18xf32>
    %cst_292 = arith.constant dense<0.000000e+00> : vector<1xf32>
    %751 = vector.multi_reduction <add>, %750, %cst_292 [1, 2] : vector<1x1x18xf32> to vector<1xf32>
    %752 = vector.shape_cast %751 : vector<1xf32> to vector<1x1x1xf32>
    %753 = vector.extract %752[0, 0, 0] : f32 from vector<1x1x1xf32>
    %754 = vector.shape_cast %744 : vector<1x1xf32> to vector<1x1x1xf32>
    %cst_293 = arith.constant dense<0.000000e+00> : vector<1xf32>
    %755 = vector.multi_reduction <add>, %754, %cst_293 [1, 2] : vector<1x1x1xf32> to vector<1xf32>
    %756 = vector.shape_cast %755 : vector<1xf32> to vector<1x1x1xf32>
    %757 = vector.extract %756[0, 0, 0] : f32 from vector<1x1x1xf32>
    %758 = arith.subf %757, %753 : f32
    %759 = arith.mulf %677, %758 : f32
    %760 = arith.addf %666, %759 : f32
    %cst_294 = arith.constant 0.000000e+00 : f32
    %761 = vector.broadcast %cst_294 : f32 to vector<1x18xf32>
    %762 = arith.cmpf oeq, %740, %761 : vector<1x18xf32>
    %c18_i32_295 = arith.constant 18 : i32
    %763 = vector.broadcast %c18_i32_295 : i32 to vector<1x18xi32>
    %764 = arith.select %762, %213, %763 : vector<1x18xi1>, vector<1x18xi32>
    %765 = vector.shape_cast %764 : vector<1x18xi32> to vector<1x1x18xi32>
    %cst_296 = arith.constant dense<2147483647> : vector<1xi32>
    %766 = vector.multi_reduction <minsi>, %765, %cst_296 [1, 2] : vector<1x1x18xi32> to vector<1xi32>
    %767 = vector.shape_cast %766 : vector<1xi32> to vector<1x1x1xi32>
    %768 = vector.extract %767[0, 0, 0] : i32 from vector<1x1x1xi32>
    %c1_i32_297 = arith.constant 1 : i32
    %769 = arith.cmpi eq, %768, %c1_i32_297 : i32
    %cst_298 = arith.constant 0.000000e+00 : f32
    %cst_299 = arith.constant 1.000000e+00 : f32
    %770 = arith.select %769, %cst_298, %cst_299 : f32
    %771 = arith.mulf %677, %770 : f32
    %772 = vector.broadcast %768 : i32 to vector<1x18xi32>
    %773 = arith.cmpi eq, %213, %772 : vector<1x18xi32>
    %cst_300 = arith.constant 1.000000e+00 : f32
    %cst_301 = arith.constant 0.000000e+00 : f32
    %774 = vector.broadcast %cst_300 : f32 to vector<1x18xf32>
    %775 = vector.broadcast %cst_301 : f32 to vector<1x18xf32>
    %776 = arith.select %773, %774, %775 : vector<1x18xi1>, vector<1x18xf32>
    %c0_302 = arith.constant 0 : index
    %c0_303 = arith.constant 0 : index
    %777 = vector.load %arg5[%c0_302, %c0_303] : memref<18x40xf32, #tpu.memory_space<vmem>>, vector<18x40xf32>
    %cst_304 = arith.constant dense<0.000000e+00> : vector<1x40xf32>
    %778 = tpu.matmul %776, %777, %cst_304 {dimension_numbers = #tpu.dot_dimension_numbers<[1], [0], [0], [1], [0, 0, 1, 1], [], []>} : vector<1x18xf32>, vector<18x40xf32>, vector<1x40xf32> -> vector<1x40xf32>
    %c0_305 = arith.constant 0 : index
    %c0_306 = arith.constant 0 : index
    %779 = vector.load %arg6[%c0_305, %c0_306] : memref<32x104xf32, #tpu.memory_space<vmem>>, vector<32x104xf32>
    %cst_307 = arith.constant dense<0.000000e+00> : vector<1x104xf32>
    %780 = tpu.matmul %732, %779, %cst_307 {dimension_numbers = #tpu.dot_dimension_numbers<[1], [0], [0], [1], [0, 0, 1, 1], [], []>} : vector<1x32xf32>, vector<32x104xf32>, vector<1x104xf32> -> vector<1x104xf32>
    %c0_308 = arith.constant 0 : index
    %c0_309 = arith.constant 0 : index
    %781 = vector.load %arg7[%c0_308, %c0_309] : memref<1x104xf32, #tpu.memory_space<vmem>>, vector<1x104xf32>
    %782 = arith.addf %780, %781 : vector<1x104xf32>
    %783 = vector.extract_strided_slice %778 {offsets = [0, 0], sizes = [1, 8], strides = [1, 1]} : vector<1x40xf32> to vector<1x8xf32>
    %784 = vector.extract_strided_slice %782 {offsets = [0, 96], sizes = [1, 8], strides = [1, 1]} : vector<1x104xf32> to vector<1x8xf32>
    %785 = arith.addf %783, %784 : vector<1x8xf32>
    %cst_310 = arith.constant dense<0xFF800000> : vector<1xf32>
    %786 = vector.multi_reduction <maximumf>, %785, %cst_310 [1] : vector<1x8xf32> to vector<1xf32>
    %787 = vector.shape_cast %786 : vector<1xf32> to vector<1x1xf32>
    %788 = vector.broadcast %787 : vector<1x1xf32> to vector<1x8xf32>
    %789 = arith.subf %785, %788 : vector<1x8xf32>
    %790 = math.exp %789 : vector<1x8xf32>
    %cst_311 = arith.constant dense<0.000000e+00> : vector<1xf32>
    %791 = vector.multi_reduction <add>, %790, %cst_311 [1] : vector<1x8xf32> to vector<1xf32>
    %792 = vector.shape_cast %791 : vector<1xf32> to vector<1x1xf32>
    %793 = tpu.reciprocal %792 {approx = true} : vector<1x1xf32> -> vector<1x1xf32>
    %794 = vector.broadcast %793 : vector<1x1xf32> to vector<1x8xf32>
    %795 = arith.mulf %790, %794 : vector<1x8xf32>
    %cst_312 = arith.constant dense<0.000000e+00> : vector<1x32xf32>
    %796 = tpu.matmul %795, %212, %cst_312 {dimension_numbers = #tpu.dot_dimension_numbers<[1], [0], [0], [1], [0, 0, 1, 1], [], []>} : vector<1x8xf32>, vector<8x32xf32>, vector<1x32xf32> -> vector<1x32xf32>
    %797 = vector.extract_strided_slice %778 {offsets = [0, 8], sizes = [1, 32], strides = [1, 1]} : vector<1x40xf32> to vector<1x32xf32>
    %c0_313 = arith.constant 0 : index
    %c0_314 = arith.constant 0 : index
    %798 = vector.load %arg10[%c0_313, %c0_314] : memref<32x32xf32, #tpu.memory_space<vmem>>, vector<32x32xf32>
    %cst_315 = arith.constant dense<0.000000e+00> : vector<1x32xf32>
    %799 = tpu.matmul %796, %798, %cst_315 {dimension_numbers = #tpu.dot_dimension_numbers<[1], [0], [0], [1], [0, 0, 1, 1], [], []>} : vector<1x32xf32>, vector<32x32xf32>, vector<1x32xf32> -> vector<1x32xf32>
    %800 = arith.addf %797, %799 : vector<1x32xf32>
    %cst_316 = arith.constant 0.000000e+00 : f32
    %801 = vector.broadcast %cst_316 : f32 to vector<1x32xf32>
    %802 = arith.maximumf %800, %801 : vector<1x32xf32>
    %c0_317 = arith.constant 0 : index
    %c0_318 = arith.constant 0 : index
    %803 = vector.load %arg8[%c0_317, %c0_318] : memref<32x96xf32, #tpu.memory_space<vmem>>, vector<32x96xf32>
    %cst_319 = arith.constant dense<0.000000e+00> : vector<1x96xf32>
    %804 = tpu.matmul %802, %803, %cst_319 {dimension_numbers = #tpu.dot_dimension_numbers<[1], [0], [0], [1], [0, 0, 1, 1], [], []>} : vector<1x32xf32>, vector<32x96xf32>, vector<1x96xf32> -> vector<1x96xf32>
    %c0_320 = arith.constant 0 : index
    %c0_321 = arith.constant 0 : index
    %805 = vector.load %arg9[%c0_320, %c0_321] : memref<1x96xf32, #tpu.memory_space<vmem>>, vector<1x96xf32>
    %806 = arith.addf %804, %805 : vector<1x96xf32>
    %807 = vector.extract_strided_slice %806 {offsets = [0, 0], sizes = [1, 64], strides = [1, 1]} : vector<1x96xf32> to vector<1x64xf32>
    %808 = vector.extract_strided_slice %782 {offsets = [0, 0], sizes = [1, 64], strides = [1, 1]} : vector<1x104xf32> to vector<1x64xf32>
    %809 = arith.addf %807, %808 : vector<1x64xf32>
    %810 = arith.negf %809 : vector<1x64xf32>
    %811 = math.exp %810 : vector<1x64xf32>
    %cst_322 = arith.constant 1.000000e+00 : f32
    %812 = vector.broadcast %cst_322 : f32 to vector<1x64xf32>
    %813 = arith.addf %812, %811 : vector<1x64xf32>
    %814 = arith.divf %812, %813 : vector<1x64xf32>
    %815 = vector.extract_strided_slice %814 {offsets = [0, 0], sizes = [1, 32], strides = [1, 1]} : vector<1x64xf32> to vector<1x32xf32>
    %816 = vector.extract_strided_slice %814 {offsets = [0, 32], sizes = [1, 32], strides = [1, 1]} : vector<1x64xf32> to vector<1x32xf32>
    %817 = vector.extract_strided_slice %806 {offsets = [0, 64], sizes = [1, 32], strides = [1, 1]} : vector<1x96xf32> to vector<1x32xf32>
    %818 = vector.extract_strided_slice %782 {offsets = [0, 64], sizes = [1, 32], strides = [1, 1]} : vector<1x104xf32> to vector<1x32xf32>
    %819 = arith.mulf %815, %818 : vector<1x32xf32>
    %820 = arith.addf %817, %819 : vector<1x32xf32>
    %821 = math.tanh %820 : vector<1x32xf32>
    %cst_323 = arith.constant 1.000000e+00 : f32
    %822 = vector.broadcast %cst_323 : f32 to vector<1x32xf32>
    %823 = arith.subf %822, %816 : vector<1x32xf32>
    %824 = arith.mulf %823, %821 : vector<1x32xf32>
    %825 = arith.mulf %816, %732 : vector<1x32xf32>
    %826 = arith.addf %824, %825 : vector<1x32xf32>
    %c0_324 = arith.constant 0 : index
    %c0_325 = arith.constant 0 : index
    %827 = vector.load %arg11[%c0_324, %c0_325] : memref<32x18xf32, #tpu.memory_space<vmem>>, vector<32x18xf32>
    %cst_326 = arith.constant dense<0.000000e+00> : vector<1x18xf32>
    %828 = tpu.matmul %826, %827, %cst_326 {dimension_numbers = #tpu.dot_dimension_numbers<[1], [0], [0], [1], [0, 0, 1, 1], [], []>} : vector<1x32xf32>, vector<32x18xf32>, vector<1x18xf32> -> vector<1x18xf32>
    %c0_327 = arith.constant 0 : index
    %c0_328 = arith.constant 0 : index
    %829 = vector.load %arg12[%c0_327, %c0_328] : memref<1x18xf32, #tpu.memory_space<vmem>>, vector<1x18xf32>
    %830 = arith.addf %828, %829 : vector<1x18xf32>
    %cst_329 = arith.constant dense<0xFF800000> : vector<1xf32>
    %831 = vector.multi_reduction <maximumf>, %830, %cst_329 [1] : vector<1x18xf32> to vector<1xf32>
    %832 = vector.shape_cast %831 : vector<1xf32> to vector<1x1xf32>
    %833 = vector.broadcast %832 : vector<1x1xf32> to vector<1x18xf32>
    %834 = arith.subf %830, %833 : vector<1x18xf32>
    %835 = math.exp %834 : vector<1x18xf32>
    %cst_330 = arith.constant dense<0.000000e+00> : vector<1xf32>
    %836 = vector.multi_reduction <add>, %835, %cst_330 [1] : vector<1x18xf32> to vector<1xf32>
    %837 = vector.shape_cast %836 : vector<1xf32> to vector<1x1xf32>
    %838 = math.log %837 : vector<1x1xf32>
    %c6 = arith.constant 6 : index
    %839 = memref.load %arg1[%c6] : memref<8xi32, #tpu.memory_space<smem>>
    %840 = vector.broadcast %839 : i32 to vector<1x18xi32>
    %841 = arith.cmpi eq, %213, %840 : vector<1x18xi32>
    %cst_331 = arith.constant 0.000000e+00 : f32
    %842 = vector.broadcast %cst_331 : f32 to vector<1x18xf32>
    %843 = arith.select %841, %834, %842 : vector<1x18xi1>, vector<1x18xf32>
    %844 = vector.shape_cast %843 : vector<1x18xf32> to vector<1x1x18xf32>
    %cst_332 = arith.constant dense<0.000000e+00> : vector<1xf32>
    %845 = vector.multi_reduction <add>, %844, %cst_332 [1, 2] : vector<1x1x18xf32> to vector<1xf32>
    %846 = vector.shape_cast %845 : vector<1xf32> to vector<1x1x1xf32>
    %847 = vector.extract %846[0, 0, 0] : f32 from vector<1x1x1xf32>
    %848 = vector.shape_cast %838 : vector<1x1xf32> to vector<1x1x1xf32>
    %cst_333 = arith.constant dense<0.000000e+00> : vector<1xf32>
    %849 = vector.multi_reduction <add>, %848, %cst_333 [1, 2] : vector<1x1x1xf32> to vector<1xf32>
    %850 = vector.shape_cast %849 : vector<1xf32> to vector<1x1x1xf32>
    %851 = vector.extract %850[0, 0, 0] : f32 from vector<1x1x1xf32>
    %852 = arith.subf %851, %847 : f32
    %853 = arith.mulf %771, %852 : f32
    %854 = arith.addf %760, %853 : f32
    %c0_334 = arith.constant 0 : index
    %c0_335 = arith.constant 0 : index
    %855 = memref.load %arg13[%c0_334, %c0_335] : memref<1x1xf32, #tpu.memory_space<smem>>
    memref.store %854, %arg13[%c0_334, %c0_335] : memref<1x1xf32, #tpu.memory_space<smem>>
    return
  }
}

</mosaic_0001>

<llo_original>
// kernel: grumt_forward.1
$region0: #{grumt_forward.1}
  #allocation0 [shape = 'u32[]', space=smem, size = 0x4, offset = 0x4, fixed_abs, tag = 'smem constant byte address 0x4 - core index']
  #allocation1 [shape = 'u32[144,128]{1,0:T(1,128)}', space=vmem, size = 0x12000, scoped, tag = 'internal scratch']
  %s0 = inlined_call_operand.vmem [shape: s32[8], index: 0, kind: input, shape index: {}]
  %s1 = inlined_call_operand.vmem [shape: s32[8], index: 1, kind: input, shape index: {}]
  %s2 = inlined_call_operand.hbm [shape: f32[20,1,96], index: 2, kind: input, shape index: {}]
  %s3 = inlined_call_operand.vmem [shape: f32[32,96], index: 3, kind: input, shape index: {}]
  %s4 = inlined_call_operand.vmem [shape: f32[1,96], index: 4, kind: input, shape index: {}]
  %s5 = inlined_call_operand.hbm [shape: f32[18,40], index: 5, kind: input, shape index: {}]
  %s6 = inlined_call_operand.vmem [shape: f32[32,104], index: 6, kind: input, shape index: {}]
  %s7 = inlined_call_operand.vmem [shape: f32[1,104], index: 7, kind: input, shape index: {}]
  %s8 = inlined_call_operand.hbm [shape: f32[32,96], index: 8, kind: input, shape index: {}]
  %s9 = inlined_call_operand.vmem [shape: f32[1,96], index: 9, kind: input, shape index: {}]
  %s10 = inlined_call_operand.hbm [shape: f32[32,32], index: 10, kind: input, shape index: {}]
  %s11 = inlined_call_operand.vmem [shape: f32[32,18], index: 11, kind: input, shape index: {}]
  %s12 = inlined_call_operand.vmem [shape: f32[1,18], index: 12, kind: input, shape index: {}]
  %s13 = inlined_call_operand.hbm [shape: f32[1,1], index: 13, kind: output, shape index: {}]
  %s14 = sld [smem:[#allocation0]]
  $region86: #{grumt_forward.1} parent=0
    _
  %s16 = ssub.s32 1, %s14
  %s17 = scalar_select 0, %s16, %s14
  $region1: #{grumt_forward.1} parent=0
    #allocation2 [shape = 'u8[512]{0}', space=smem, size = 0x200, scoped, tag = 'input window, operand 0, single buffered']
    #allocation3 [shape = 's32[1]{0}', space=sflag, size = 0x4, scoped, tag = 'scoped memory for grumt_forward.1']
    #allocation4 [shape = 's32[1]{0}', space=sflag, size = 0x4, scoped, tag = 'scoped memory for grumt_forward.1']
    #allocation5 [shape = 's32[1]{0}', space=sflag, size = 0x4, scoped, tag = 'scoped memory for grumt_forward.1']
    #allocation6 [shape = 'u8[512]{0}', space=smem, size = 0x200, scoped, tag = 'input window, operand 1, single buffered']
    #allocation7 [shape = 's32[1]{0}', space=sflag, size = 0x4, scoped, tag = 'scoped memory for grumt_forward.1']
    #allocation8 [shape = 'u8[10240]{0}', space=vmem, size = 0x2800, scoped, tag = 'input window, operand 2, single buffered']
    #allocation9 [shape = 'u8[12288]{0}', space=vmem, size = 0x3000, scoped, tag = 'input window, operand 5, single buffered']
    #allocation10 [shape = 's32[1]{0}', space=sflag, size = 0x4, scoped, tag = 'scoped memory for grumt_forward.1']
    #allocation11 [shape = 'u8[16384]{0}', space=vmem, size = 0x4000, scoped, tag = 'input window, operand 8, single buffered']
    #allocation12 [shape = 'u8[16384]{0}', space=vmem, size = 0x4000, scoped, tag = 'input window, operand 10, single buffered']
    #allocation13 [shape = 's32[1]{0}', space=sflag, size = 0x4, scoped, tag = 'scoped memory for grumt_forward.1']
    #allocation14 [shape = 'u8[512]{0}', space=smem, size = 0x200, scoped, tag = 'output window, operand 0, single buffered']
    %18 = vsyncpa [#allocation5], 0
    %19 = vsyncpa [#allocation7], 0
    %20 = vsyncpa [#allocation3], 0
    %21 = vsyncpa [#allocation10], 0
    %22 = vsyncpa [#allocation13], 0
    %23 = vsyncpa [#allocation4], 0
    // Predicated region
    $region2: #{grumt_forward.1} parent=1 // pred_check
      _
    $region3: #{grumt_forward.1} parent=1 // pred_check_branch
      %25 = sbr.rel (0) target = $region5
    $region4: #{grumt_forward.1} parent=1 // pred_region
      %s27 = ssub.s32 16, 16
      %28 = vsyncadd [#allocation5], %s27
      %s30 = sshll.u32 %s0, 4
      %s31 = int_to_ptr.vmem [resolvable:$true] %s30
      %33 = dma.vmem_to_smem %s31, 16, [#allocation2], [#allocation5]
    $region5: #{grumt_forward.1} parent=1 // pred_fallthru
      _
    // Predicated region
    $region6: #{grumt_forward.1} parent=1 // pred_check
      _
    $region7: #{grumt_forward.1} parent=1 // pred_check_branch
      %35 = sbr.rel (0) target = $region9
    $region8: #{grumt_forward.1} parent=1 // pred_region
      %s37 = ssub.s32 16, 16
      %38 = vsyncadd [#allocation7], %s37
      %s40 = sshll.u32 %s1, 4
      %s41 = int_to_ptr.vmem [resolvable:$true] %s40
      %43 = dma.vmem_to_smem %s41, 16, [#allocation6], [#allocation7]
    $region9: #{grumt_forward.1} parent=1 // pred_fallthru
      _
    // Predicated region
    $region10: #{grumt_forward.1} parent=1 // pred_check
      _
    $region11: #{grumt_forward.1} parent=1 // pred_check_branch
      %45 = sbr.rel (0) target = $region13
    $region12: #{grumt_forward.1} parent=1 // pred_region
      %s47 = ssub.s32 320, 320
      %48 = vsyncadd [#allocation3], %s47
      %s49 = sshll.u32 [#allocation8], 4
      %s50 = int_to_ptr.vmem [resolvable:$true] %s49
      %55 = dma.hbm_to_vmem [thread:$0]  %s2, 320, %s50, [#allocation3], 16, 16, 1
    $region13: #{grumt_forward.1} parent=1 // pred_fallthru
      _
    // Predicated region
    $region14: #{grumt_forward.1} parent=1 // pred_check
      _
    $region15: #{grumt_forward.1} parent=1 // pred_check_branch
      %57 = sbr.rel (0) target = $region17
    $region16: #{grumt_forward.1} parent=1 // pred_region
      _
    $region17: #{grumt_forward.1} parent=1 // pred_fallthru
      _
    // Predicated region
    $region18: #{grumt_forward.1} parent=1 // pred_check
      _
    $region19: #{grumt_forward.1} parent=1 // pred_check_branch
      %59 = sbr.rel (0) target = $region21
    $region20: #{grumt_forward.1} parent=1 // pred_region
      _
    $region21: #{grumt_forward.1} parent=1 // pred_fallthru
      _
    // Predicated region
    $region22: #{grumt_forward.1} parent=1 // pred_check
      _
    $region23: #{grumt_forward.1} parent=1 // pred_check_branch
      %61 = sbr.rel (0) target = $region25
    $region24: #{grumt_forward.1} parent=1 // pred_region
      %s63 = ssub.s32 384, 384
      %64 = vsyncadd [#allocation10], %s63
      %s65 = sshll.u32 [#allocation9], 4
      %s66 = int_to_ptr.vmem [resolvable:$true] %s65
      %71 = dma.hbm_to_vmem [thread:$0]  %s5, 384, %s66, [#allocation10], 128, 128, 8
    $region25: #{grumt_forward.1} parent=1 // pred_fallthru
      _
    // Predicated region
    $region26: #{grumt_forward.1} parent=1 // pred_check
      _
    $region27: #{grumt_forward.1} parent=1 // pred_check_branch
      %73 = sbr.rel (0) target = $region29
    $region28: #{grumt_forward.1} parent=1 // pred_region
      _
    $region29: #{grumt_forward.1} parent=1 // pred_fallthru
      _
    // Predicated region
    $region30: #{grumt_forward.1} parent=1 // pred_check
      _
    $region31: #{grumt_forward.1} parent=1 // pred_check_branch
      %75 = sbr.rel (0) target = $region33
    $region32: #{grumt_forward.1} parent=1 // pred_region
      _
    $region33: #{grumt_forward.1} parent=1 // pred_fallthru
      _
    // Predicated region
    $region34: #{grumt_forward.1} parent=1 // pred_check
      _
    $region35: #{grumt_forward.1} parent=1 // pred_check_branch
      %77 = sbr.rel (0) target = $region37
    $region36: #{grumt_forward.1} parent=1 // pred_region
      %s79 = ssub.s32 512, 512
      %80 = vsyncadd [#allocation10], %s79
      %s81 = sshll.u32 [#allocation11], 4
      %s82 = int_to_ptr.vmem [resolvable:$true] %s81
      %87 = dma.hbm_to_vmem [thread:$0]  %s8, 512, %s82, [#allocation10], 128, 128, 8
    $region37: #{grumt_forward.1} parent=1 // pred_fallthru
      _
    // Predicated region
    $region38: #{grumt_forward.1} parent=1 // pred_check
      _
    $region39: #{grumt_forward.1} parent=1 // pred_check_branch
      %89 = sbr.rel (0) target = $region41
    $region40: #{grumt_forward.1} parent=1 // pred_region
      _
    $region41: #{grumt_forward.1} parent=1 // pred_fallthru
      _
    // Predicated region
    $region42: #{grumt_forward.1} parent=1 // pred_check
      _
    $region43: #{grumt_forward.1} parent=1 // pred_check_branch
      %91 = sbr.rel (0) target = $region45
    $region44: #{grumt_forward.1} parent=1 // pred_region
      %s93 = ssub.s32 512, 512
      %94 = vsyncadd [#allocation13], %s93
      %s95 = sshll.u32 [#allocation12], 4
      %s96 = int_to_ptr.vmem [resolvable:$true] %s95
      %101 = dma.hbm_to_vmem [thread:$0]  %s10, 512, %s96, [#allocation13], 128, 128, 8
    $region45: #{grumt_forward.1} parent=1 // pred_fallthru
      _
    // Predicated region
    $region46: #{grumt_forward.1} parent=1 // pred_check
      _
    $region47: #{grumt_forward.1} parent=1 // pred_check_branch
      %103 = sbr.rel (0) target = $region49
    $region48: #{grumt_forward.1} parent=1 // pred_region
      _
    $region49: #{grumt_forward.1} parent=1 // pred_fallthru
      _
    // Predicated region
    $region50: #{grumt_forward.1} parent=1 // pred_check
      _
    $region51: #{grumt_forward.1} parent=1 // pred_check_branch
      %105 = sbr.rel (0) target = $region53
    $region52: #{grumt_forward.1} parent=1 // pred_region
      _
    $region53: #{grumt_forward.1} parent=1 // pred_fallthru
      _
    // Predicated region
    $region54: #{grumt_forward.1} parent=1 // pred_check
      _
    $region55: #{grumt_forward.1} parent=1 // pred_check_branch
      %107 = sbr.rel (0) target = $region57
    $region56: #{grumt_forward.1} parent=1 // pred_region
      %108 = dma.done [#allocation5], 16
    $region57: #{grumt_forward.1} parent=1 // pred_fallthru
      _
    // Predicated region
    $region58: #{grumt_forward.1} parent=1 // pred_check
      _
    $region59: #{grumt_forward.1} parent=1 // pred_check_branch
      %110 = sbr.rel (0) target = $region61
    $region60: #{grumt_forward.1} parent=1 // pred_region
      %111 = dma.done [#allocation7], 16
    $region61: #{grumt_forward.1} parent=1 // pred_fallthru
      _
    // Predicated region
    $region62: #{grumt_forward.1} parent=1 // pred_check
      _
    $region63: #{grumt_forward.1} parent=1 // pred_check_branch
      %113 = sbr.rel (0) target = $region65
    $region64: #{grumt_forward.1} parent=1 // pred_region
      %114 = dma.done [#allocation3], 320
    $region65: #{grumt_forward.1} parent=1 // pred_fallthru
      _
    // Predicated region
    $region66: #{grumt_forward.1} parent=1 // pred_check
      _
    $region67: #{grumt_forward.1} parent=1 // pred_check_branch
      %116 = sbr.rel (0) target = $region69
    $region68: #{grumt_forward.1} parent=1 // pred_region
      %117 = dma.done [#allocation10], 384
    $region69: #{grumt_forward.1} parent=1 // pred_fallthru
      _
    // Predicated region
    $region70: #{grumt_forward.1} parent=1 // pred_check
      _
    $region71: #{grumt_forward.1} parent=1 // pred_check_branch
      %119 = sbr.rel (0) target = $region73
    $region72: #{grumt_forward.1} parent=1 // pred_region
      %120 = dma.done [#allocation10], 512
    $region73: #{grumt_forward.1} parent=1 // pred_fallthru
      _
    // Predicated region
    $region74: #{grumt_forward.1} parent=1 // pred_check
      _
    $region75: #{grumt_forward.1} parent=1 // pred_check_branch
      %122 = sbr.rel (0) target = $region77
    $region76: #{grumt_forward.1} parent=1 // pred_region
      %123 = dma.done [#allocation13], 512
    $region77: #{grumt_forward.1} parent=1 // pred_fallthru
      _
    %124 = sfence
    %v125 = vlaneseq
    %v126 = vshrl.u32 %v125, 7
    %s127 = sld [smem:[#allocation2]]
    %s128 = scalar_lea.vmem [#allocation8], %s127
    %v129 = vld [vmem:[%s128] sm:$0x1]
    %v130 = vld [vmem:[%s3] sm:$0xff]
    %v131 = vld [vmem:[%s3 + $0x8] sm:$0xff]
    %v132 = vld [vmem:[%s3 + $0x10] sm:$0xff]
    %v133 = vld [vmem:[%s3 + $0x18] sm:$0xff]
    %v134 = vld [vmem:[%s4] sm:$0x1]
    %vm135 = vcmask 261120
    %v137 = vsel %vm135, 0.0, 0
    %139 = vmatprep.subr.mxu0 0.0
    %140 = vmatpush1.msra.mxu0 %v130
    %141 = vmatprep.subr.mxu0 0.0
    %142 = vmatpush1.msra.mxu0 %v131
    %143 = vmatprep.subr.mxu0 0.0
    %144 = vmatpush1.msra.mxu0 %v132
    %145 = vmatprep.subr.mxu0 0.0
    %146 = vmatpush1.msra.mxu0 %v133
    %147 = vmatprep.subr.mxu0 0.0
    %148 = vmatpush1.msra.mxu0 0.0
    %149 = vmatprep.subr.mxu0 0.0
    %150 = vmatpush1.msra.mxu0 0.0
    %151 = vmatprep.subr.mxu0 0.0
    %152 = vmatpush1.msra.mxu0 0.0
    %153 = vmatprep.subr.mxu0 0.0
    %154 = vmatpush1.msra.mxu0 0.0
    %155 = vmatprep.subr.mxu0 0.0
    %156 = vmatpush1.msra.mxu0 0.0
    %157 = vmatprep.subr.mxu0 0.0
    %158 = vmatpush1.msra.mxu0 0.0
    %159 = vmatprep.subr.mxu0 0.0
    %160 = vmatpush1.msra.mxu0 0.0
    %161 = vmatprep.subr.mxu0 0.0
    %162 = vmatpush1.msra.mxu0 0.0
    %163 = vmatprep.subr.mxu0 0.0
    %164 = vmatpush1.msra.mxu0 0.0
    %165 = vmatprep.subr.mxu0 0.0
    %166 = vmatpush1.msra.mxu0 0.0
    %167 = vmatprep.subr.mxu0 0.0
    %168 = vmatpush1.msra.mxu0 0.0
    %169 = vmatprep.subr.mxu0 0.0
    %170 = vmatpush1.msra.mxu0 0.0
    %171 = vmatprep.subr.mxu0 0.0
    %172 = vmatpush1.msra.mxu0 0.0
    %173 = vmatprep.subr.mxu0 0.0
    %174 = vmatpush1.msra.mxu0 0.0
    %175 = vmatprep.subr.mxu0 0.0
    %176 = vmatpush1.msra.mxu0 0.0
    %177 = vmatprep.subr.mxu0 0.0
    %178 = vmatpush1.msra.mxu0 0.0
    %179 = vmatprep.subr.mxu0 0.0
    %180 = vmatpush1.msra.mxu0 0.0
    %181 = vmatprep.subr.mxu0 0.0
    %182 = vmatpush1.msra.mxu0 0.0
    %183 = vmatprep.subr.mxu0 0.0
    %184 = vmatpush1.msra.mxu0 0.0
    %185 = vmatprep.subr.mxu0 0.0
    %186 = vmatpush1.msra.mxu0 0.0
    %187 = vmatprep.subr.mxu0 0.0
    %188 = vmatpush1.msra.mxu0 0.0
    %189 = vmatprep.subr.mxu0 0.0
    %190 = vmatpush1.msra.mxu0 0.0
    %191 = vmatprep.subr.mxu0 0.0
    %192 = vmatpush1.msra.mxu0 0.0
    %193 = vmatprep.subr.mxu0 0.0
    %194 = vmatpush1.msra.mxu0 0.0
    %195 = vmatprep.subr.mxu0 0.0
    %196 = vmatpush1.msra.mxu0 0.0
    %197 = vmatprep.subr.mxu0 0.0
    %198 = vmatpush1.msra.mxu0 0.0
    %199 = vmatprep.subr.mxu0 0.0
    %200 = vmatpush1.msra.mxu0 0.0
    %201 = vmatprep.subr.mxu0 0.0
    %202 = vmatpush1.msra.mxu0 0.0
    %203 = vmatprep.mubr.f32.mxu0 0.0
    %204 = vmatmul.mubr.f32.gmra.mrb[0].mxu0 %v137
    %v205 = vpop.f32.mrb[0].mxu0
    %v206 = vadd.f32 %v134, %v205
    %v207 = vpop.f32.mrb[0].mxu0
    %208 = vdwg.mxu0
    %v209 = vadd.f32 %v129, %v206
    %v210 = vxor.u32 %v209, 2147483648
    %v211 = vmul.f32 %v210, 1.442695
    %v212 = vpow.pop %v211
    %v213 = vadd.f32 %v212, 1.0
    %v214 = vrcp.pop %v213
    %v215 = vmul.f32 1.0, %v214
    %v218 = vunpack.c.l.s4 1966171168
    %v219 = vunpack.c.0.s8 %v218
    %v220 = vlaneseq
    %v221 = vshrl.u32 %v220, 7
    %v222 = vsub.s32 %v219, %v221
    %v223 = vrot.slane %v206, %v222
    %v225 = vunpack.c.l.s4 1966171168
    %v226 = vunpack.c.0.s8 %v225
    %v227 = vlaneseq
    %v228 = vshrl.u32 %v227, 7
    %v229 = vsub.s32 %v226, %v228
    %v230 = vrot.slane %v223, %v229
    %231 = vrot.lane.b32.xlu0 %v230, 64
    %v232 = vpop.permute.xlu0 %231
    %v234 = vmul.f32 %v215, %v232
    %236 = vrot.lane.b32.xlu0 %v234, 64
    %v237 = vpop.permute.xlu0 %236
    %v239 = vadd.f32 %v129, %v237
    %v240 = vtanh.pop %v239
    %v241 = vsub.f32 1.0, %v215
    %243 = vrot.lane.b32.xlu0 %v240, 96
    %v244 = vpop.permute.xlu0 %243
    %v246 = vmul.f32 %v241, %v244
    %v247 = vmul.f32 %v215, 0.0
    %v248 = vadd.f32 %v246, %v247
    %vm249 = vcmp.eq.s32.totalorder %v126, 0
    %v250 = vsel %vm249, 1, 0
    %vm251 = vcmp.eq.s32.totalorder %v250, 1
    %v253 = vlaneseq
    %v254 = vshrl.u32 %v253, 7
    %v255 = vsub.s32 0, %v254
    %v256 = vrot.slane %v248, %v255
    %v258 = vsel %vm251, %v256, 0.0
    %s259 = sld [smem:[#allocation2 + $0x1]]
    %s260 = scalar_lea.vmem [#allocation8], %s259
    %v261 = vld [vmem:[%s260] sm:$0x1]
    %262 = vrot.lane.b32.xlu0 %v256, 96
    %v263 = vpop.permute.xlu0 %262
    %v264 = vsel %vm135, %v263, 0
    %266 = vmatprep.subr.mxu0 0.0
    %267 = vmatpush1.msra.mxu0 %v130
    %268 = vmatprep.subr.mxu0 0.0
    %269 = vmatpush1.msra.mxu0 %v131
    %270 = vmatprep.subr.mxu0 0.0
    %271 = vmatpush1.msra.mxu0 %v132
    %272 = vmatprep.subr.mxu0 0.0
    %273 = vmatpush1.msra.mxu0 %v133
    %274 = vmatprep.subr.mxu0 0.0
    %275 = vmatpush1.msra.mxu0 0.0
    %276 = vmatprep.subr.mxu0 0.0
    %277 = vmatpush1.msra.mxu0 0.0
    %278 = vmatprep.subr.mxu0 0.0
    %279 = vmatpush1.msra.mxu0 0.0
    %280 = vmatprep.subr.mxu0 0.0
    %281 = vmatpush1.msra.mxu0 0.0
    %282 = vmatprep.subr.mxu0 0.0
    %283 = vmatpush1.msra.mxu0 0.0
    %284 = vmatprep.subr.mxu0 0.0
    %285 = vmatpush1.msra.mxu0 0.0
    %286 = vmatprep.subr.mxu0 0.0
    %287 = vmatpush1.msra.mxu0 0.0
    %288 = vmatprep.subr.mxu0 0.0
    %289 = vmatpush1.msra.mxu0 0.0
    %290 = vmatprep.subr.mxu0 0.0
    %291 = vmatpush1.msra.mxu0 0.0
    %292 = vmatprep.subr.mxu0 0.0
    %293 = vmatpush1.msra.mxu0 0.0
    %294 = vmatprep.subr.mxu0 0.0
    %295 = vmatpush1.msra.mxu0 0.0
    %296 = vmatprep.subr.mxu0 0.0
    %297 = vmatpush1.msra.mxu0 0.0
    %298 = vmatprep.subr.mxu0 0.0
    %299 = vmatpush1.msra.mxu0 0.0
    %300 = vmatprep.subr.mxu0 0.0
    %301 = vmatpush1.msra.mxu0 0.0
    %302 = vmatprep.subr.mxu0 0.0
    %303 = vmatpush1.msra.mxu0 0.0
    %304 = vmatprep.subr.mxu0 0.0
    %305 = vmatpush1.msra.mxu0 0.0
    %306 = vmatprep.subr.mxu0 0.0
    %307 = vmatpush1.msra.mxu0 0.0
    %308 = vmatprep.subr.mxu0 0.0
    %309 = vmatpush1.msra.mxu0 0.0
    %310 = vmatprep.subr.mxu0 0.0
    %311 = vmatpush1.msra.mxu0 0.0
    %312 = vmatprep.subr.mxu0 0.0
    %313 = vmatpush1.msra.mxu0 0.0
    %314 = vmatprep.subr.mxu0 0.0
    %315 = vmatpush1.msra.mxu0 0.0
    %316 = vmatprep.subr.mxu0 0.0
    %317 = vmatpush1.msra.mxu0 0.0
    %318 = vmatprep.subr.mxu0 0.0
    %319 = vmatpush1.msra.mxu0 0.0
    %320 = vmatprep.subr.mxu0 0.0
    %321 = vmatpush1.msra.mxu0 0.0
    %322 = vmatprep.subr.mxu0 0.0
    %323 = vmatpush1.msra.mxu0 0.0
    %324 = vmatprep.subr.mxu0 0.0
    %325 = vmatpush1.msra.mxu0 0.0
    %326 = vmatprep.subr.mxu0 0.0
    %327 = vmatpush1.msra.mxu0 0.0
    %328 = vmatprep.subr.mxu0 0.0
    %329 = vmatpush1.msra.mxu0 0.0
    %330 = vmatprep.mubr.f32.mxu0 0.0
    %331 = vmatmul.mubr.f32.gmra.mrb[0].mxu0 %v264
    %v332 = vpop.f32.mrb[0].mxu0
    %v333 = vadd.f32 %v134, %v332
    %v334 = vpop.f32.mrb[0].mxu0
    %335 = vdwg.mxu0
    %v336 = vadd.f32 %v261, %v333
    %v337 = vxor.u32 %v336, 2147483648
    %v338 = vmul.f32 %v337, 1.442695
    %v339 = vpow.pop %v338
    %v340 = vadd.f32 %v339, 1.0
    %v341 = vrcp.pop %v340
    %v342 = vmul.f32 1.0, %v341
    %v345 = vunpack.c.l.s4 1966171168
    %v346 = vunpack.c.0.s8 %v345
    %v347 = vlaneseq
    %v348 = vshrl.u32 %v347, 7
    %v349 = vsub.s32 %v346, %v348
    %v350 = vrot.slane %v333, %v349
    %v352 = vunpack.c.l.s4 1966171168
    %v353 = vunpack.c.0.s8 %v352
    %v354 = vlaneseq
    %v355 = vshrl.u32 %v354, 7
    %v356 = vsub.s32 %v353, %v355
    %v357 = vrot.slane %v350, %v356
    %358 = vrot.lane.b32.xlu0 %v357, 64
    %v359 = vpop.permute.xlu0 %358
    %v361 = vmul.f32 %v342, %v359
    %363 = vrot.lane.b32.xlu0 %v361, 64
    %v364 = vpop.permute.xlu0 %363
    %v366 = vadd.f32 %v261, %v364
    %v367 = vtanh.pop %v366
    %v368 = vsub.f32 1.0, %v342
    %370 = vrot.lane.b32.xlu0 %v367, 96
    %v371 = vpop.permute.xlu0 %370
    %v373 = vmul.f32 %v368, %v371
    %v374 = vmul.f32 %v342, %v248
    %v375 = vadd.f32 %v373, %v374
    %vm376 = vcmp.eq.s32.totalorder %v126, 1
    %v377 = vsel %vm376, 1, 0
    %vm378 = vcmp.eq.s32.totalorder %v377, 1
    %v380 = vlaneseq
    %v381 = vshrl.u32 %v380, 7
    %v382 = vsub.s32 0, %v381
    %v383 = vrot.slane %v375, %v382
    %v385 = vsel %vm378, %v383, %v258
    %s386 = sld [smem:[#allocation2 + $0x2]]
    %s387 = scalar_lea.vmem [#allocation8], %s386
    %v388 = vld [vmem:[%s387] sm:$0x1]
    %389 = vrot.lane.b32.xlu0 %v383, 96
    %v390 = vpop.permute.xlu0 %389
    %v391 = vsel %vm135, %v390, 0
    %393 = vmatprep.subr.mxu0 0.0
    %394 = vmatpush1.msra.mxu0 %v130
    %395 = vmatprep.subr.mxu0 0.0
    %396 = vmatpush1.msra.mxu0 %v131
    %397 = vmatprep.subr.mxu0 0.0
    %398 = vmatpush1.msra.mxu0 %v132
    %399 = vmatprep.subr.mxu0 0.0
    %400 = vmatpush1.msra.mxu0 %v133
    %401 = vmatprep.subr.mxu0 0.0
    %402 = vmatpush1.msra.mxu0 0.0
    %403 = vmatprep.subr.mxu0 0.0
    %404 = vmatpush1.msra.mxu0 0.0
    %405 = vmatprep.subr.mxu0 0.0
    %406 = vmatpush1.msra.mxu0 0.0
    %407 = vmatprep.subr.mxu0 0.0
    %408 = vmatpush1.msra.mxu0 0.0
    %409 = vmatprep.subr.mxu0 0.0
    %410 = vmatpush1.msra.mxu0 0.0
    %411 = vmatprep.subr.mxu0 0.0
    %412 = vmatpush1.msra.mxu0 0.0
    %413 = vmatprep.subr.mxu0 0.0
    %414 = vmatpush1.msra.mxu0 0.0
    %415 = vmatprep.subr.mxu0 0.0
    %416 = vmatpush1.msra.mxu0 0.0
    %417 = vmatprep.subr.mxu0 0.0
    %418 = vmatpush1.msra.mxu0 0.0
    %419 = vmatprep.subr.mxu0 0.0
    %420 = vmatpush1.msra.mxu0 0.0
    %421 = vmatprep.subr.mxu0 0.0
    %422 = vmatpush1.msra.mxu0 0.0
    %423 = vmatprep.subr.mxu0 0.0
    %424 = vmatpush1.msra.mxu0 0.0
    %425 = vmatprep.subr.mxu0 0.0
    %426 = vmatpush1.msra.mxu0 0.0
    %427 = vmatprep.subr.mxu0 0.0
    %428 = vmatpush1.msra.mxu0 0.0
    %429 = vmatprep.subr.mxu0 0.0
    %430 = vmatpush1.msra.mxu0 0.0
    %431 = vmatprep.subr.mxu0 0.0
    %432 = vmatpush1.msra.mxu0 0.0
    %433 = vmatprep.subr.mxu0 0.0
    %434 = vmatpush1.msra.mxu0 0.0
    %435 = vmatprep.subr.mxu0 0.0
    %436 = vmatpush1.msra.mxu0 0.0
    %437 = vmatprep.subr.mxu0 0.0
    %438 = vmatpush1.msra.mxu0 0.0
    %439 = vmatprep.subr.mxu0 0.0
    %440 = vmatpush1.msra.mxu0 0.0
    %441 = vmatprep.subr.mxu0 0.0
    %442 = vmatpush1.msra.mxu0 0.0
    %443 = vmatprep.subr.mxu0 0.0
    %444 = vmatpush1.msra.mxu0 0.0
    %445 = vmatprep.subr.mxu0 0.0
    %446 = vmatpush1.msra.mxu0 0.0
    %447 = vmatprep.subr.mxu0 0.0
    %448 = vmatpush1.msra.mxu0 0.0
    %449 = vmatprep.subr.mxu0 0.0
    %450 = vmatpush1.msra.mxu0 0.0
    %451 = vmatprep.subr.mxu0 0.0
    %452 = vmatpush1.msra.mxu0 0.0
    %453 = vmatprep.subr.mxu0 0.0
    %454 = vmatpush1.msra.mxu0 0.0
    %455 = vmatprep.subr.mxu0 0.0
    %456 = vmatpush1.msra.mxu0 0.0
    %457 = vmatprep.mubr.f32.mxu0 0.0
    %458 = vmatmul.mubr.f32.gmra.mrb[0].mxu0 %v391
    %v459 = vpop.f32.mrb[0].mxu0
    %v460 = vadd.f32 %v134, %v459
    %v461 = vpop.f32.mrb[0].mxu0
    %462 = vdwg.mxu0
    %v463 = vadd.f32 %v388, %v460
    %v464 = vxor.u32 %v463, 2147483648
    %v465 = vmul.f32 %v464, 1.442695
    %v466 = vpow.pop %v465
    %v467 = vadd.f32 %v466, 1.0
    %v468 = vrcp.pop %v467
    %v469 = vmul.f32 1.0, %v468
    %v472 = vunpack.c.l.s4 1966171168
    %v473 = vunpack.c.0.s8 %v472
    %v474 = vlaneseq
    %v475 = vshrl.u32 %v474, 7
    %v476 = vsub.s32 %v473, %v475
    %v477 = vrot.slane %v460, %v476
    %v479 = vunpack.c.l.s4 1966171168
    %v480 = vunpack.c.0.s8 %v479
    %v481 = vlaneseq
    %v482 = vshrl.u32 %v481, 7
    %v483 = vsub.s32 %v480, %v482
    %v484 = vrot.slane %v477, %v483
    %485 = vrot.lane.b32.xlu0 %v484, 64
    %v486 = vpop.permute.xlu0 %485
    %v488 = vmul.f32 %v469, %v486
    %490 = vrot.lane.b32.xlu0 %v488, 64
    %v491 = vpop.permute.xlu0 %490
    %v493 = vadd.f32 %v388, %v491
    %v494 = vtanh.pop %v493
    %v495 = vsub.f32 1.0, %v469
    %497 = vrot.lane.b32.xlu0 %v494, 96
    %v498 = vpop.permute.xlu0 %497
    %v500 = vmul.f32 %v495, %v498
    %v501 = vmul.f32 %v469, %v375
    %v502 = vadd.f32 %v500, %v501
    %vm503 = vcmp.eq.s32.totalorder %v126, 2
    %v504 = vsel %vm503, 1, 0
    %vm505 = vcmp.eq.s32.totalorder %v504, 1
    %v507 = vlaneseq
    %v508 = vshrl.u32 %v507, 7
    %v509 = vsub.s32 0, %v508
    %v510 = vrot.slane %v502, %v509
    %v512 = vsel %vm505, %v510, %v385
    %s513 = sld [smem:[#allocation2 + $0x3]]
    %s514 = scalar_lea.vmem [#allocation8], %s513
    %v515 = vld [vmem:[%s514] sm:$0x1]
    %516 = vrot.lane.b32.xlu0 %v510, 96
    %v517 = vpop.permute.xlu0 %516
    %v518 = vsel %vm135, %v517, 0
    %520 = vmatprep.subr.mxu0 0.0
    %521 = vmatpush1.msra.mxu0 %v130
    %522 = vmatprep.subr.mxu0 0.0
    %523 = vmatpush1.msra.mxu0 %v131
    %524 = vmatprep.subr.mxu0 0.0
    %525 = vmatpush1.msra.mxu0 %v132
    %526 = vmatprep.subr.mxu0 0.0
    %527 = vmatpush1.msra.mxu0 %v133
    %528 = vmatprep.subr.mxu0 0.0
    %529 = vmatpush1.msra.mxu0 0.0
    %530 = vmatprep.subr.mxu0 0.0
    %531 = vmatpush1.msra.mxu0 0.0
    %532 = vmatprep.subr.mxu0 0.0
    %533 = vmatpush1.msra.mxu0 0.0
    %534 = vmatprep.subr.mxu0 0.0
    %535 = vmatpush1.msra.mxu0 0.0
    %536 = vmatprep.subr.mxu0 0.0
    %537 = vmatpush1.msra.mxu0 0.0
    %538 = vmatprep.subr.mxu0 0.0
    %539 = vmatpush1.msra.mxu0 0.0
    %540 = vmatprep.subr.mxu0 0.0
    %541 = vmatpush1.msra.mxu0 0.0
    %542 = vmatprep.subr.mxu0 0.0
    %543 = vmatpush1.msra.mxu0 0.0
    %544 = vmatprep.subr.mxu0 0.0
    %545 = vmatpush1.msra.mxu0 0.0
    %546 = vmatprep.subr.mxu0 0.0
    %547 = vmatpush1.msra.mxu0 0.0
    %548 = vmatprep.subr.mxu0 0.0
    %549 = vmatpush1.msra.mxu0 0.0
    %550 = vmatprep.subr.mxu0 0.0
    %551 = vmatpush1.msra.mxu0 0.0
    %552 = vmatprep.subr.mxu0 0.0
    %553 = vmatpush1.msra.mxu0 0.0
    %554 = vmatprep.subr.mxu0 0.0
    %555 = vmatpush1.msra.mxu0 0.0
    %556 = vmatprep.subr.mxu0 0.0
    %557 = vmatpush1.msra.mxu0 0.0
    %558 = vmatprep.subr.mxu0 0.0
    %559 = vmatpush1.msra.mxu0 0.0
    %560 = vmatprep.subr.mxu0 0.0
    %561 = vmatpush1.msra.mxu0 0.0
    %562 = vmatprep.subr.mxu0 0.0
    %563 = vmatpush1.msra.mxu0 0.0
    %564 = vmatprep.subr.mxu0 0.0
    %565 = vmatpush1.msra.mxu0 0.0
    %566 = vmatprep.subr.mxu0 0.0
    %567 = vmatpush1.msra.mxu0 0.0
    %568 = vmatprep.subr.mxu0 0.0
    %569 = vmatpush1.msra.mxu0 0.0
    %570 = vmatprep.subr.mxu0 0.0
    %571 = vmatpush1.msra.mxu0 0.0
    %572 = vmatprep.subr.mxu0 0.0
    %573 = vmatpush1.msra.mxu0 0.0
    %574 = vmatprep.subr.mxu0 0.0
    %575 = vmatpush1.msra.mxu0 0.0
    %576 = vmatprep.subr.mxu0 0.0
    %577 = vmatpush1.msra.mxu0 0.0
    %578 = vmatprep.subr.mxu0 0.0
    %579 = vmatpush1.msra.mxu0 0.0
    %580 = vmatprep.subr.mxu0 0.0
    %581 = vmatpush1.msra.mxu0 0.0
    %582 = vmatprep.subr.mxu0 0.0
    %583 = vmatpush1.msra.mxu0 0.0
    %584 = vmatprep.mubr.f32.mxu0 0.0
    %585 = vmatmul.mubr.f32.gmra.mrb[0].mxu0 %v518
    %v586 = vpop.f32.mrb[0].mxu0
    %v587 = vadd.f32 %v134, %v586
    %v588 = vpop.f32.mrb[0].mxu0
    %589 = vdwg.mxu0
    %v590 = vadd.f32 %v515, %v587
    %v591 = vxor.u32 %v590, 2147483648
    %v592 = vmul.f32 %v591, 1.442695
    %v593 = vpow.pop %v592
    %v594 = vadd.f32 %v593, 1.0
    %v595 = vrcp.pop %v594
    %v596 = vmul.f32 1.0, %v595
    %v599 = vunpack.c.l.s4 1966171168
    %v600 = vunpack.c.0.s8 %v599
    %v601 = vlaneseq
    %v602 = vshrl.u32 %v601, 7
    %v603 = vsub.s32 %v600, %v602
    %v604 = vrot.slane %v587, %v603
    %v606 = vunpack.c.l.s4 1966171168
    %v607 = vunpack.c.0.s8 %v606
    %v608 = vlaneseq
    %v609 = vshrl.u32 %v608, 7
    %v610 = vsub.s32 %v607, %v609
    %v611 = vrot.slane %v604, %v610
    %612 = vrot.lane.b32.xlu0 %v611, 64
    %v613 = vpop.permute.xlu0 %612
    %v615 = vmul.f32 %v596, %v613
    %617 = vrot.lane.b32.xlu0 %v615, 64
    %v618 = vpop.permute.xlu0 %617
    %v620 = vadd.f32 %v515, %v618
    %v621 = vtanh.pop %v620
    %v622 = vsub.f32 1.0, %v596
    %624 = vrot.lane.b32.xlu0 %v621, 96
    %v625 = vpop.permute.xlu0 %624
    %v627 = vmul.f32 %v622, %v625
    %v628 = vmul.f32 %v596, %v502
    %v629 = vadd.f32 %v627, %v628
    %vm630 = vcmp.eq.s32.totalorder %v126, 3
    %v631 = vsel %vm630, 1, 0
    %vm632 = vcmp.eq.s32.totalorder %v631, 1
    %v634 = vlaneseq
    %v635 = vshrl.u32 %v634, 7
    %v636 = vsub.s32 0, %v635
    %v637 = vrot.slane %v629, %v636
    %v639 = vsel %vm632, %v637, %v512
    %s640 = sld [smem:[#allocation2 + $0x4]]
    %s641 = scalar_lea.vmem [#allocation8], %s640
    %v642 = vld [vmem:[%s641] sm:$0x1]
    %643 = vrot.lane.b32.xlu0 %v637, 96
    %v644 = vpop.permute.xlu0 %643
    %v645 = vsel %vm135, %v644, 0
    %647 = vmatprep.subr.mxu0 0.0
    %648 = vmatpush1.msra.mxu0 %v130
    %649 = vmatprep.subr.mxu0 0.0
    %650 = vmatpush1.msra.mxu0 %v131
    %651 = vmatprep.subr.mxu0 0.0
    %652 = vmatpush1.msra.mxu0 %v132
    %653 = vmatprep.subr.mxu0 0.0
    %654 = vmatpush1.msra.mxu0 %v133
    %655 = vmatprep.subr.mxu0 0.0
    %656 = vmatpush1.msra.mxu0 0.0
    %657 = vmatprep.subr.mxu0 0.0
    %658 = vmatpush1.msra.mxu0 0.0
    %659 = vmatprep.subr.mxu0 0.0
    %660 = vmatpush1.msra.mxu0 0.0
    %661 = vmatprep.subr.mxu0 0.0
    %662 = vmatpush1.msra.mxu0 0.0
    %663 = vmatprep.subr.mxu0 0.0
    %664 = vmatpush1.msra.mxu0 0.0
    %665 = vmatprep.subr.mxu0 0.0
    %666 = vmatpush1.msra.mxu0 0.0
    %667 = vmatprep.subr.mxu0 0.0
    %668 = vmatpush1.msra.mxu0 0.0
    %669 = vmatprep.subr.mxu0 0.0
    %670 = vmatpush1.msra.mxu0 0.0
    %671 = vmatprep.subr.mxu0 0.0
    %672 = vmatpush1.msra.mxu0 0.0
    %673 = vmatprep.subr.mxu0 0.0
    %674 = vmatpush1.msra.mxu0 0.0
    %675 = vmatprep.subr.mxu0 0.0
    %676 = vmatpush1.msra.mxu0 0.0
    %677 = vmatprep.subr.mxu0 0.0
    %678 = vmatpush1.msra.mxu0 0.0
    %679 = vmatprep.subr.mxu0 0.0
    %680 = vmatpush1.msra.mxu0 0.0
    %681 = vmatprep.subr.mxu0 0.0
    %682 = vmatpush1.msra.mxu0 0.0
    %683 = vmatprep.subr.mxu0 0.0
    %684 = vmatpush1.msra.mxu0 0.0
    %685 = vmatprep.subr.mxu0 0.0
    %686 = vmatpush1.msra.mxu0 0.0
    %687 = vmatprep.subr.mxu0 0.0
    %688 = vmatpush1.msra.mxu0 0.0
    %689 = vmatprep.subr.mxu0 0.0
    %690 = vmatpush1.msra.mxu0 0.0
    %691 = vmatprep.subr.mxu0 0.0
    %692 = vmatpush1.msra.mxu0 0.0
    %693 = vmatprep.subr.mxu0 0.0
    %694 = vmatpush1.msra.mxu0 0.0
    %695 = vmatprep.subr.mxu0 0.0
    %696 = vmatpush1.msra.mxu0 0.0
    %697 = vmatprep.subr.mxu0 0.0
    %698 = vmatpush1.msra.mxu0 0.0
    %699 = vmatprep.subr.mxu0 0.0
    %700 = vmatpush1.msra.mxu0 0.0
    %701 = vmatprep.subr.mxu0 0.0
    %702 = vmatpush1.msra.mxu0 0.0
    %703 = vmatprep.subr.mxu0 0.0
    %704 = vmatpush1.msra.mxu0 0.0
    %705 = vmatprep.subr.mxu0 0.0
    %706 = vmatpush1.msra.mxu0 0.0
    %707 = vmatprep.subr.mxu0 0.0
    %708 = vmatpush1.msra.mxu0 0.0
    %709 = vmatprep.subr.mxu0 0.0
    %710 = vmatpush1.msra.mxu0 0.0
    %711 = vmatprep.mubr.f32.mxu0 0.0
    %712 = vmatmul.mubr.f32.gmra.mrb[0].mxu0 %v645
    %v713 = vpop.f32.mrb[0].mxu0
    %v714 = vadd.f32 %v134, %v713
    %v715 = vpop.f32.mrb[0].mxu0
    %716 = vdwg.mxu0
    %v717 = vadd.f32 %v642, %v714
    %v718 = vxor.u32 %v717, 2147483648
    %v719 = vmul.f32 %v718, 1.442695
    %v720 = vpow.pop %v719
    %v721 = vadd.f32 %v720, 1.0
    %v722 = vrcp.pop %v721
    %v723 = vmul.f32 1.0, %v722
    %v726 = vunpack.c.l.s4 1966171168
    %v727 = vunpack.c.0.s8 %v726
    %v728 = vlaneseq
    %v729 = vshrl.u32 %v728, 7
    %v730 = vsub.s32 %v727, %v729
    %v731 = vrot.slane %v714, %v730
    %v733 = vunpack.c.l.s4 1966171168
    %v734 = vunpack.c.0.s8 %v733
    %v735 = vlaneseq
    %v736 = vshrl.u32 %v735, 7
    %v737 = vsub.s32 %v734, %v736
    %v738 = vrot.slane %v731, %v737
    %739 = vrot.lane.b32.xlu0 %v738, 64
    %v740 = vpop.permute.xlu0 %739
    %v742 = vmul.f32 %v723, %v740
    %744 = vrot.lane.b32.xlu0 %v742, 64
    %v745 = vpop.permute.xlu0 %744
    %v747 = vadd.f32 %v642, %v745
    %v748 = vtanh.pop %v747
    %v749 = vsub.f32 1.0, %v723
    %751 = vrot.lane.b32.xlu0 %v748, 96
    %v752 = vpop.permute.xlu0 %751
    %v754 = vmul.f32 %v749, %v752
    %v755 = vmul.f32 %v723, %v629
    %v756 = vadd.f32 %v754, %v755
    %vm757 = vcmp.eq.s32.totalorder %v126, 4
    %v758 = vsel %vm757, 1, 0
    %vm759 = vcmp.eq.s32.totalorder %v758, 1
    %v761 = vlaneseq
    %v762 = vshrl.u32 %v761, 7
    %v763 = vsub.s32 0, %v762
    %v764 = vrot.slane %v756, %v763
    %v766 = vsel %vm759, %v764, %v639
    %s767 = sld [smem:[#allocation2 + $0x5]]
    %s768 = scalar_lea.vmem [#allocation8], %s767
    %v769 = vld [vmem:[%s768] sm:$0x1]
    %770 = vrot.lane.b32.xlu0 %v764, 96
    %v771 = vpop.permute.xlu0 %770
    %v772 = vsel %vm135, %v771, 0
    %774 = vmatprep.subr.mxu0 0.0
    %775 = vmatpush1.msra.mxu0 %v130
    %776 = vmatprep.subr.mxu0 0.0
    %777 = vmatpush1.msra.mxu0 %v131
    %778 = vmatprep.subr.mxu0 0.0
    %779 = vmatpush1.msra.mxu0 %v132
    %780 = vmatprep.subr.mxu0 0.0
    %781 = vmatpush1.msra.mxu0 %v133
    %782 = vmatprep.subr.mxu0 0.0
    %783 = vmatpush1.msra.mxu0 0.0
    %784 = vmatprep.subr.mxu0 0.0
    %785 = vmatpush1.msra.mxu0 0.0
    %786 = vmatprep.subr.mxu0 0.0
    %787 = vmatpush1.msra.mxu0 0.0
    %788 = vmatprep.subr.mxu0 0.0
    %789 = vmatpush1.msra.mxu0 0.0
    %790 = vmatprep.subr.mxu0 0.0
    %791 = vmatpush1.msra.mxu0 0.0
    %792 = vmatprep.subr.mxu0 0.0
    %793 = vmatpush1.msra.mxu0 0.0
    %794 = vmatprep.subr.mxu0 0.0
    %795 = vmatpush1.msra.mxu0 0.0
    %796 = vmatprep.subr.mxu0 0.0
    %797 = vmatpush1.msra.mxu0 0.0
    %798 = vmatprep.subr.mxu0 0.0
    %799 = vmatpush1.msra.mxu0 0.0
    %800 = vmatprep.subr.mxu0 0.0
    %801 = vmatpush1.msra.mxu0 0.0
    %802 = vmatprep.subr.mxu0 0.0
    %803 = vmatpush1.msra.mxu0 0.0
    %804 = vmatprep.subr.mxu0 0.0
    %805 = vmatpush1.msra.mxu0 0.0
    %806 = vmatprep.subr.mxu0 0.0
    %807 = vmatpush1.msra.mxu0 0.0
    %808 = vmatprep.subr.mxu0 0.0
    %809 = vmatpush1.msra.mxu0 0.0
    %810 = vmatprep.subr.mxu0 0.0
    %811 = vmatpush1.msra.mxu0 0.0
    %812 = vmatprep.subr.mxu0 0.0
    %813 = vmatpush1.msra.mxu0 0.0
    %814 = vmatprep.subr.mxu0 0.0
    %815 = vmatpush1.msra.mxu0 0.0
    %816 = vmatprep.subr.mxu0 0.0
    %817 = vmatpush1.msra.mxu0 0.0
    %818 = vmatprep.subr.mxu0 0.0
    %819 = vmatpush1.msra.mxu0 0.0
    %820 = vmatprep.subr.mxu0 0.0
    %821 = vmatpush1.msra.mxu0 0.0
    %822 = vmatprep.subr.mxu0 0.0
    %823 = vmatpush1.msra.mxu0 0.0
    %824 = vmatprep.subr.mxu0 0.0
    %825 = vmatpush1.msra.mxu0 0.0
    %826 = vmatprep.subr.mxu0 0.0
    %827 = vmatpush1.msra.mxu0 0.0
    %828 = vmatprep.subr.mxu0 0.0
    %829 = vmatpush1.msra.mxu0 0.0
    %830 = vmatprep.subr.mxu0 0.0
    %831 = vmatpush1.msra.mxu0 0.0
    %832 = vmatprep.subr.mxu0 0.0
    %833 = vmatpush1.msra.mxu0 0.0
    %834 = vmatprep.subr.mxu0 0.0
    %835 = vmatpush1.msra.mxu0 0.0
    %836 = vmatprep.subr.mxu0 0.0
    %837 = vmatpush1.msra.mxu0 0.0
    %838 = vmatprep.mubr.f32.mxu0 0.0
    %839 = vmatmul.mubr.f32.gmra.mrb[0].mxu0 %v772
    %v840 = vpop.f32.mrb[0].mxu0
    %v841 = vadd.f32 %v134, %v840
    %v842 = vpop.f32.mrb[0].mxu0
    %843 = vdwg.mxu0
    %v844 = vadd.f32 %v769, %v841
    %v845 = vxor.u32 %v844, 2147483648
    %v846 = vmul.f32 %v845, 1.442695
    %v847 = vpow.pop %v846
    %v848 = vadd.f32 %v847, 1.0
    %v849 = vrcp.pop %v848
    %v850 = vmul.f32 1.0, %v849
    %v853 = vunpack.c.l.s4 1966171168
    %v854 = vunpack.c.0.s8 %v853
    %v855 = vlaneseq
    %v856 = vshrl.u32 %v855, 7
    %v857 = vsub.s32 %v854, %v856
    %v858 = vrot.slane %v841, %v857
    %v860 = vunpack.c.l.s4 1966171168
    %v861 = vunpack.c.0.s8 %v860
    %v862 = vlaneseq
    %v863 = vshrl.u32 %v862, 7
    %v864 = vsub.s32 %v861, %v863
    %v865 = vrot.slane %v858, %v864
    %866 = vrot.lane.b32.xlu0 %v865, 64
    %v867 = vpop.permute.xlu0 %866
    %v869 = vmul.f32 %v850, %v867
    %871 = vrot.lane.b32.xlu0 %v869, 64
    %v872 = vpop.permute.xlu0 %871
    %v874 = vadd.f32 %v769, %v872
    %v875 = vtanh.pop %v874
    %v876 = vsub.f32 1.0, %v850
    %878 = vrot.lane.b32.xlu0 %v875, 96
    %v879 = vpop.permute.xlu0 %878
    %v881 = vmul.f32 %v876, %v879
    %v882 = vmul.f32 %v850, %v756
    %v883 = vadd.f32 %v881, %v882
    %vm884 = vcmp.eq.s32.totalorder %v126, 5
    %v885 = vsel %vm884, 1, 0
    %vm886 = vcmp.eq.s32.totalorder %v885, 1
    %v888 = vlaneseq
    %v889 = vshrl.u32 %v888, 7
    %v890 = vsub.s32 0, %v889
    %v891 = vrot.slane %v883, %v890
    %v893 = vsel %vm886, %v891, %v766
    %v894 = vlaneseq
    %v895 = vand.u32 %v894, 127
    %v896 = vld [vmem:[#allocation9] sm:$0x1]
    %v897 = vld [vmem:[%s6] sm:$0xff]
    %v898 = vld [vmem:[%s6 + $0x8] sm:$0xff]
    %v899 = vld [vmem:[%s6 + $0x10] sm:$0xff]
    %v900 = vld [vmem:[%s6 + $0x18] sm:$0xff]
    %v901 = vld [vmem:[%s7] sm:$0x1]
    %902 = vrot.lane.b32.xlu0 %v891, 96
    %v903 = vpop.permute.xlu0 %902
    %v904 = vsel %vm135, %v903, 0
    %906 = vmatprep.subr.mxu0 0.0
    %907 = vmatpush1.msra.mxu0 %v897
    %908 = vmatprep.subr.mxu0 0.0
    %909 = vmatpush1.msra.mxu0 %v898
    %910 = vmatprep.subr.mxu0 0.0
    %911 = vmatpush1.msra.mxu0 %v899
    %912 = vmatprep.subr.mxu0 0.0
    %913 = vmatpush1.msra.mxu0 %v900
    %914 = vmatprep.subr.mxu0 0.0
    %915 = vmatpush1.msra.mxu0 0.0
    %916 = vmatprep.subr.mxu0 0.0
    %917 = vmatpush1.msra.mxu0 0.0
    %918 = vmatprep.subr.mxu0 0.0
    %919 = vmatpush1.msra.mxu0 0.0
    %920 = vmatprep.subr.mxu0 0.0
    %921 = vmatpush1.msra.mxu0 0.0
    %922 = vmatprep.subr.mxu0 0.0
    %923 = vmatpush1.msra.mxu0 0.0
    %924 = vmatprep.subr.mxu0 0.0
    %925 = vmatpush1.msra.mxu0 0.0
    %926 = vmatprep.subr.mxu0 0.0
    %927 = vmatpush1.msra.mxu0 0.0
    %928 = vmatprep.subr.mxu0 0.0
    %929 = vmatpush1.msra.mxu0 0.0
    %930 = vmatprep.subr.mxu0 0.0
    %931 = vmatpush1.msra.mxu0 0.0
    %932 = vmatprep.subr.mxu0 0.0
    %933 = vmatpush1.msra.mxu0 0.0
    %934 = vmatprep.subr.mxu0 0.0
    %935 = vmatpush1.msra.mxu0 0.0
    %936 = vmatprep.subr.mxu0 0.0
    %937 = vmatpush1.msra.mxu0 0.0
    %938 = vmatprep.subr.mxu0 0.0
    %939 = vmatpush1.msra.mxu0 0.0
    %940 = vmatprep.subr.mxu0 0.0
    %941 = vmatpush1.msra.mxu0 0.0
    %942 = vmatprep.subr.mxu0 0.0
    %943 = vmatpush1.msra.mxu0 0.0
    %944 = vmatprep.subr.mxu0 0.0
    %945 = vmatpush1.msra.mxu0 0.0
    %946 = vmatprep.subr.mxu0 0.0
    %947 = vmatpush1.msra.mxu0 0.0
    %948 = vmatprep.subr.mxu0 0.0
    %949 = vmatpush1.msra.mxu0 0.0
    %950 = vmatprep.subr.mxu0 0.0
    %951 = vmatpush1.msra.mxu0 0.0
    %952 = vmatprep.subr.mxu0 0.0
    %953 = vmatpush1.msra.mxu0 0.0
    %954 = vmatprep.subr.mxu0 0.0
    %955 = vmatpush1.msra.mxu0 0.0
    %956 = vmatprep.subr.mxu0 0.0
    %957 = vmatpush1.msra.mxu0 0.0
    %958 = vmatprep.subr.mxu0 0.0
    %959 = vmatpush1.msra.mxu0 0.0
    %960 = vmatprep.subr.mxu0 0.0
    %961 = vmatpush1.msra.mxu0 0.0
    %962 = vmatprep.subr.mxu0 0.0
    %963 = vmatpush1.msra.mxu0 0.0
    %964 = vmatprep.subr.mxu0 0.0
    %965 = vmatpush1.msra.mxu0 0.0
    %966 = vmatprep.subr.mxu0 0.0
    %967 = vmatpush1.msra.mxu0 0.0
    %968 = vmatprep.subr.mxu0 0.0
    %969 = vmatpush1.msra.mxu0 0.0
    %970 = vmatprep.mubr.f32.mxu0 0.0
    %971 = vmatmul.mubr.f32.gmra.mrb[0].mxu0 %v904
    %v972 = vpop.f32.mrb[0].mxu0
    %v973 = vadd.f32 %v901, %v972
    %v974 = vpop.f32.mrb[0].mxu0
    %975 = vdwg.mxu0
    %977 = vrot.lane.b32.xlu0 %v973, 32
    %v978 = vpop.permute.xlu0 %977
    %v980 = vadd.f32 %v896, %v978
    %vm981 = vcmask 57344
    %v982 = vsel %vm981, %v980, -inf
    %983 = vmax.xlane.f32.xlu0 %v982
    %v984 = vpop.xlane.xlu0 %983
    %v985 = vsub.f32 %v980, %v984
    %v986 = vmul.f32 %v985, 1.442695
    %v987 = vpow.pop %v986
    %v988 = vsel %vm981, %v987, 0.0
    %989 = vadd.xlane.f32.xlu0 %v988
    %v990 = vpop.xlane.xlu0 %989
    %v991 = vrcp.pop %v990
    %v992 = vmul.f32 %v987, %v991
    %994 = vrot.lane.b32.xlu0 %v893, 96
    %v995 = vpop.permute.xlu0 %994
    %vm997 = vcmask 64512
    %v999 = vsel %vm997, %v992, 0
    %1001 = vmatprep.subr.mxu0 0.0
    %1002 = vmatpush1.msra.mxu0 %v995
    %1003 = vmatprep.subr.mxu0 0.0
    %1004 = vmatpush1.msra.mxu0 0.0
    %1005 = vmatprep.subr.mxu0 0.0
    %1006 = vmatpush1.msra.mxu0 0.0
    %1007 = vmatprep.subr.mxu0 0.0
    %1008 = vmatpush1.msra.mxu0 0.0
    %1009 = vmatprep.subr.mxu0 0.0
    %1010 = vmatpush1.msra.mxu0 0.0
    %1011 = vmatprep.subr.mxu0 0.0
    %1012 = vmatpush1.msra.mxu0 0.0
    %1013 = vmatprep.subr.mxu0 0.0
    %1014 = vmatpush1.msra.mxu0 0.0
    %1015 = vmatprep.subr.mxu0 0.0
    %1016 = vmatpush1.msra.mxu0 0.0
    %1017 = vmatprep.subr.mxu0 0.0
    %1018 = vmatpush1.msra.mxu0 0.0
    %1019 = vmatprep.subr.mxu0 0.0
    %1020 = vmatpush1.msra.mxu0 0.0
    %1021 = vmatprep.subr.mxu0 0.0
    %1022 = vmatpush1.msra.mxu0 0.0
    %1023 = vmatprep.subr.mxu0 0.0
    %1024 = vmatpush1.msra.mxu0 0.0
    %1025 = vmatprep.subr.mxu0 0.0
    %1026 = vmatpush1.msra.mxu0 0.0
    %1027 = vmatprep.subr.mxu0 0.0
    %1028 = vmatpush1.msra.mxu0 0.0
    %1029 = vmatprep.subr.mxu0 0.0
    %1030 = vmatpush1.msra.mxu0 0.0
    %1031 = vmatprep.subr.mxu0 0.0
    %1032 = vmatpush1.msra.mxu0 0.0
    %1033 = vmatprep.subr.mxu0 0.0
    %1034 = vmatpush1.msra.mxu0 0.0
    %1035 = vmatprep.subr.mxu0 0.0
    %1036 = vmatpush1.msra.mxu0 0.0
    %1037 = vmatprep.subr.mxu0 0.0
    %1038 = vmatpush1.msra.mxu0 0.0
    %1039 = vmatprep.subr.mxu0 0.0
    %1040 = vmatpush1.msra.mxu0 0.0
    %1041 = vmatprep.subr.mxu0 0.0
    %1042 = vmatpush1.msra.mxu0 0.0
    %1043 = vmatprep.subr.mxu0 0.0
    %1044 = vmatpush1.msra.mxu0 0.0
    %1045 = vmatprep.subr.mxu0 0.0
    %1046 = vmatpush1.msra.mxu0 0.0
    %1047 = vmatprep.subr.mxu0 0.0
    %1048 = vmatpush1.msra.mxu0 0.0
    %1049 = vmatprep.subr.mxu0 0.0
    %1050 = vmatpush1.msra.mxu0 0.0
    %1051 = vmatprep.subr.mxu0 0.0
    %1052 = vmatpush1.msra.mxu0 0.0
    %1053 = vmatprep.subr.mxu0 0.0
    %1054 = vmatpush1.msra.mxu0 0.0
    %1055 = vmatprep.subr.mxu0 0.0
    %1056 = vmatpush1.msra.mxu0 0.0
    %1057 = vmatprep.subr.mxu0 0.0
    %1058 = vmatpush1.msra.mxu0 0.0
    %1059 = vmatprep.subr.mxu0 0.0
    %1060 = vmatpush1.msra.mxu0 0.0
    %1061 = vmatprep.subr.mxu0 0.0
    %1062 = vmatpush1.msra.mxu0 0.0
    %1063 = vmatprep.subr.mxu0 0.0
    %1064 = vmatpush1.msra.mxu0 0.0
    %1065 = vmatprep.mubr.f32.mxu0 0.0
    %1066 = vmatmul.mubr.f32.gmra.mrb[0].mxu0 %v999
    %v1067 = vpop.f32.mrb[0].mxu0
    %v1068 = vadd.f32 0.0, %v1067
    %v1069 = vpop.f32.mrb[0].mxu0
    %1070 = vdwg.mxu0
    %v1071 = vld [vmem:[#allocation12] sm:$0xff]
    %v1072 = vld [vmem:[#allocation12 + $0x8] sm:$0xff]
    %v1073 = vld [vmem:[#allocation12 + $0x10] sm:$0xff]
    %v1074 = vld [vmem:[#allocation12 + $0x18] sm:$0xff]
    %v1076 = vsel %vm135, %v1068, 0
    %1078 = vmatprep.subr.mxu0 0.0
    %1079 = vmatpush1.msra.mxu0 %v1071
    %1080 = vmatprep.subr.mxu0 0.0
    %1081 = vmatpush1.msra.mxu0 %v1072
    %1082 = vmatprep.subr.mxu0 0.0
    %1083 = vmatpush1.msra.mxu0 %v1073
    %1084 = vmatprep.subr.mxu0 0.0
    %1085 = vmatpush1.msra.mxu0 %v1074
    %1086 = vmatprep.subr.mxu0 0.0
    %1087 = vmatpush1.msra.mxu0 0.0
    %1088 = vmatprep.subr.mxu0 0.0
    %1089 = vmatpush1.msra.mxu0 0.0
    %1090 = vmatprep.subr.mxu0 0.0
    %1091 = vmatpush1.msra.mxu0 0.0
    %1092 = vmatprep.subr.mxu0 0.0
    %1093 = vmatpush1.msra.mxu0 0.0
    %1094 = vmatprep.subr.mxu0 0.0
    %1095 = vmatpush1.msra.mxu0 0.0
    %1096 = vmatprep.subr.mxu0 0.0
    %1097 = vmatpush1.msra.mxu0 0.0
    %1098 = vmatprep.subr.mxu0 0.0
    %1099 = vmatpush1.msra.mxu0 0.0
    %1100 = vmatprep.subr.mxu0 0.0
    %1101 = vmatpush1.msra.mxu0 0.0
    %1102 = vmatprep.subr.mxu0 0.0
    %1103 = vmatpush1.msra.mxu0 0.0
    %1104 = vmatprep.subr.mxu0 0.0
    %1105 = vmatpush1.msra.mxu0 0.0
    %1106 = vmatprep.subr.mxu0 0.0
    %1107 = vmatpush1.msra.mxu0 0.0
    %1108 = vmatprep.subr.mxu0 0.0
    %1109 = vmatpush1.msra.mxu0 0.0
    %1110 = vmatprep.subr.mxu0 0.0
    %1111 = vmatpush1.msra.mxu0 0.0
    %1112 = vmatprep.subr.mxu0 0.0
    %1113 = vmatpush1.msra.mxu0 0.0
    %1114 = vmatprep.subr.mxu0 0.0
    %1115 = vmatpush1.msra.mxu0 0.0
    %1116 = vmatprep.subr.mxu0 0.0
    %1117 = vmatpush1.msra.mxu0 0.0
    %1118 = vmatprep.subr.mxu0 0.0
    %1119 = vmatpush1.msra.mxu0 0.0
    %1120 = vmatprep.subr.mxu0 0.0
    %1121 = vmatpush1.msra.mxu0 0.0
    %1122 = vmatprep.subr.mxu0 0.0
    %1123 = vmatpush1.msra.mxu0 0.0
    %1124 = vmatprep.subr.mxu0 0.0
    %1125 = vmatpush1.msra.mxu0 0.0
    %1126 = vmatprep.subr.mxu0 0.0
    %1127 = vmatpush1.msra.mxu0 0.0
    %1128 = vmatprep.subr.mxu0 0.0
    %1129 = vmatpush1.msra.mxu0 0.0
    %1130 = vmatprep.subr.mxu0 0.0
    %1131 = vmatpush1.msra.mxu0 0.0
    %1132 = vmatprep.subr.mxu0 0.0
    %1133 = vmatpush1.msra.mxu0 0.0
    %1134 = vmatprep.subr.mxu0 0.0
    %1135 = vmatpush1.msra.mxu0 0.0
    %1136 = vmatprep.subr.mxu0 0.0
    %1137 = vmatpush1.msra.mxu0 0.0
    %1138 = vmatprep.subr.mxu0 0.0
    %1139 = vmatpush1.msra.mxu0 0.0
    %1140 = vmatprep.subr.mxu0 0.0
    %1141 = vmatpush1.msra.mxu0 0.0
    %1142 = vmatprep.mubr.f32.mxu0 0.0
    %1143 = vmatmul.mubr.f32.gmra.mrb[0].mxu0 %v1076
    %v1144 = vpop.f32.mrb[0].mxu0
    %v1145 = vadd.f32 0.0, %v1144
    %v1146 = vpop.f32.mrb[0].mxu0
    %1147 = vdwg.mxu0
    %1149 = vrot.lane.b32.xlu0 %v1145, 8
    %v1150 = vpop.permute.xlu0 %1149
    %v1152 = vadd.f32 %v896, %v1150
    %v1153 = vmax.f32 %v1152, 0.0
    %v1154 = vld [vmem:[#allocation11] sm:$0xff]
    %v1155 = vld [vmem:[#allocation11 + $0x8] sm:$0xff]
    %v1156 = vld [vmem:[#allocation11 + $0x10] sm:$0xff]
    %v1157 = vld [vmem:[#allocation11 + $0x18] sm:$0xff]
    %v1158 = vld [vmem:[%s9] sm:$0x1]
    %1160 = vrot.lane.b32.xlu0 %v1153, 120
    %v1161 = vpop.permute.xlu0 %1160
    %v1162 = vsel %vm135, %v1161, 0
    %1164 = vmatprep.subr.mxu0 0.0
    %1165 = vmatpush1.msra.mxu0 %v1154
    %1166 = vmatprep.subr.mxu0 0.0
    %1167 = vmatpush1.msra.mxu0 %v1155
    %1168 = vmatprep.subr.mxu0 0.0
    %1169 = vmatpush1.msra.mxu0 %v1156
    %1170 = vmatprep.subr.mxu0 0.0
    %1171 = vmatpush1.msra.mxu0 %v1157
    %1172 = vmatprep.subr.mxu0 0.0
    %1173 = vmatpush1.msra.mxu0 0.0
    %1174 = vmatprep.subr.mxu0 0.0
    %1175 = vmatpush1.msra.mxu0 0.0
    %1176 = vmatprep.subr.mxu0 0.0
    %1177 = vmatpush1.msra.mxu0 0.0
    %1178 = vmatprep.subr.mxu0 0.0
    %1179 = vmatpush1.msra.mxu0 0.0
    %1180 = vmatprep.subr.mxu0 0.0
    %1181 = vmatpush1.msra.mxu0 0.0
    %1182 = vmatprep.subr.mxu0 0.0
    %1183 = vmatpush1.msra.mxu0 0.0
    %1184 = vmatprep.subr.mxu0 0.0
    %1185 = vmatpush1.msra.mxu0 0.0
    %1186 = vmatprep.subr.mxu0 0.0
    %1187 = vmatpush1.msra.mxu0 0.0
    %1188 = vmatprep.subr.mxu0 0.0
    %1189 = vmatpush1.msra.mxu0 0.0
    %1190 = vmatprep.subr.mxu0 0.0
    %1191 = vmatpush1.msra.mxu0 0.0
    %1192 = vmatprep.subr.mxu0 0.0
    %1193 = vmatpush1.msra.mxu0 0.0
    %1194 = vmatprep.subr.mxu0 0.0
    %1195 = vmatpush1.msra.mxu0 0.0
    %1196 = vmatprep.subr.mxu0 0.0
    %1197 = vmatpush1.msra.mxu0 0.0
    %1198 = vmatprep.subr.mxu0 0.0
    %1199 = vmatpush1.msra.mxu0 0.0
    %1200 = vmatprep.subr.mxu0 0.0
    %1201 = vmatpush1.msra.mxu0 0.0
    %1202 = vmatprep.subr.mxu0 0.0
    %1203 = vmatpush1.msra.mxu0 0.0
    %1204 = vmatprep.subr.mxu0 0.0
    %1205 = vmatpush1.msra.mxu0 0.0
    %1206 = vmatprep.subr.mxu0 0.0
    %1207 = vmatpush1.msra.mxu0 0.0
    %1208 = vmatprep.subr.mxu0 0.0
    %1209 = vmatpush1.msra.mxu0 0.0
    %1210 = vmatprep.subr.mxu0 0.0
    %1211 = vmatpush1.msra.mxu0 0.0
    %1212 = vmatprep.subr.mxu0 0.0
    %1213 = vmatpush1.msra.mxu0 0.0
    %1214 = vmatprep.subr.mxu0 0.0
    %1215 = vmatpush1.msra.mxu0 0.0
    %1216 = vmatprep.subr.mxu0 0.0
    %1217 = vmatpush1.msra.mxu0 0.0
    %1218 = vmatprep.subr.mxu0 0.0
    %1219 = vmatpush1.msra.mxu0 0.0
    %1220 = vmatprep.subr.mxu0 0.0
    %1221 = vmatpush1.msra.mxu0 0.0
    %1222 = vmatprep.subr.mxu0 0.0
    %1223 = vmatpush1.msra.mxu0 0.0
    %1224 = vmatprep.subr.mxu0 0.0
    %1225 = vmatpush1.msra.mxu0 0.0
    %1226 = vmatprep.subr.mxu0 0.0
    %1227 = vmatpush1.msra.mxu0 0.0
    %1228 = vmatprep.mubr.f32.mxu0 0.0
    %1229 = vmatmul.mubr.f32.gmra.mrb[0].mxu0 %v1162
    %v1230 = vpop.f32.mrb[0].mxu0
    %v1231 = vadd.f32 %v1158, %v1230
    %v1232 = vpop.f32.mrb[0].mxu0
    %1233 = vdwg.mxu0
    %v1234 = vadd.f32 %v1231, %v973
    %v1235 = vxor.u32 %v1234, 2147483648
    %v1236 = vmul.f32 %v1235, 1.442695
    %v1237 = vpow.pop %v1236
    %v1238 = vadd.f32 %v1237, 1.0
    %v1239 = vrcp.pop %v1238
    %v1240 = vmul.f32 1.0, %v1239
    %1241 = vrot.lane.b32.xlu0 %v973, 64
    %v1242 = vpop.permute.xlu0 %1241
    %v1244 = vmul.f32 %v1240, %v1242
    %1246 = vrot.lane.b32.xlu0 %v1244, 64
    %v1247 = vpop.permute.xlu0 %1246
    %v1249 = vadd.f32 %v1231, %v1247
    %v1250 = vtanh.pop %v1249
    %v1251 = vsub.f32 1.0, %v1240
    %1253 = vrot.lane.b32.xlu0 %v1250, 96
    %v1254 = vpop.permute.xlu0 %1253
    %v1256 = vmul.f32 %v1251, %v1254
    %v1257 = vmul.f32 %v1240, %v883
    %v1258 = vadd.f32 %v1256, %v1257
    %v1259 = vld [vmem:[%s11] sm:$0xff]
    %v1260 = vld [vmem:[%s11 + $0x8] sm:$0xff]
    %v1261 = vld [vmem:[%s11 + $0x10] sm:$0xff]
    %v1262 = vld [vmem:[%s11 + $0x18] sm:$0xff]
    %v1263 = vld [vmem:[%s12] sm:$0x1]
    %1265 = vrot.lane.b32.xlu0 %v1258, 96
    %v1266 = vpop.permute.xlu0 %1265
    %v1267 = vsel %vm135, %v1266, 0
    %1269 = vmatprep.subr.mxu0 0.0
    %1270 = vmatpush1.msra.mxu0 %v1259
    %1271 = vmatprep.subr.mxu0 0.0
    %1272 = vmatpush1.msra.mxu0 %v1260
    %1273 = vmatprep.subr.mxu0 0.0
    %1274 = vmatpush1.msra.mxu0 %v1261
    %1275 = vmatprep.subr.mxu0 0.0
    %1276 = vmatpush1.msra.mxu0 %v1262
    %1277 = vmatprep.subr.mxu0 0.0
    %1278 = vmatpush1.msra.mxu0 0.0
    %1279 = vmatprep.subr.mxu0 0.0
    %1280 = vmatpush1.msra.mxu0 0.0
    %1281 = vmatprep.subr.mxu0 0.0
    %1282 = vmatpush1.msra.mxu0 0.0
    %1283 = vmatprep.subr.mxu0 0.0
    %1284 = vmatpush1.msra.mxu0 0.0
    %1285 = vmatprep.subr.mxu0 0.0
    %1286 = vmatpush1.msra.mxu0 0.0
    %1287 = vmatprep.subr.mxu0 0.0
    %1288 = vmatpush1.msra.mxu0 0.0
    %1289 = vmatprep.subr.mxu0 0.0
    %1290 = vmatpush1.msra.mxu0 0.0
    %1291 = vmatprep.subr.mxu0 0.0
    %1292 = vmatpush1.msra.mxu0 0.0
    %1293 = vmatprep.subr.mxu0 0.0
    %1294 = vmatpush1.msra.mxu0 0.0
    %1295 = vmatprep.subr.mxu0 0.0
    %1296 = vmatpush1.msra.mxu0 0.0
    %1297 = vmatprep.subr.mxu0 0.0
    %1298 = vmatpush1.msra.mxu0 0.0
    %1299 = vmatprep.subr.mxu0 0.0
    %1300 = vmatpush1.msra.mxu0 0.0
    %1301 = vmatprep.subr.mxu0 0.0
    %1302 = vmatpush1.msra.mxu0 0.0
    %1303 = vmatprep.subr.mxu0 0.0
    %1304 = vmatpush1.msra.mxu0 0.0
    %1305 = vmatprep.subr.mxu0 0.0
    %1306 = vmatpush1.msra.mxu0 0.0
    %1307 = vmatprep.subr.mxu0 0.0
    %1308 = vmatpush1.msra.mxu0 0.0
    %1309 = vmatprep.subr.mxu0 0.0
    %1310 = vmatpush1.msra.mxu0 0.0
    %1311 = vmatprep.subr.mxu0 0.0
    %1312 = vmatpush1.msra.mxu0 0.0
    %1313 = vmatprep.subr.mxu0 0.0
    %1314 = vmatpush1.msra.mxu0 0.0
    %1315 = vmatprep.subr.mxu0 0.0
    %1316 = vmatpush1.msra.mxu0 0.0
    %1317 = vmatprep.subr.mxu0 0.0
    %1318 = vmatpush1.msra.mxu0 0.0
    %1319 = vmatprep.subr.mxu0 0.0
    %1320 = vmatpush1.msra.mxu0 0.0
    %1321 = vmatprep.subr.mxu0 0.0
    %1322 = vmatpush1.msra.mxu0 0.0
    %1323 = vmatprep.subr.mxu0 0.0
    %1324 = vmatpush1.msra.mxu0 0.0
    %1325 = vmatprep.subr.mxu0 0.0
    %1326 = vmatpush1.msra.mxu0 0.0
    %1327 = vmatprep.subr.mxu0 0.0
    %1328 = vmatpush1.msra.mxu0 0.0
    %1329 = vmatprep.subr.mxu0 0.0
    %1330 = vmatpush1.msra.mxu0 0.0
    %1331 = vmatprep.subr.mxu0 0.0
    %1332 = vmatpush1.msra.mxu0 0.0
    %1333 = vmatprep.mubr.f32.mxu0 0.0
    %1334 = vmatmul.mubr.f32.gmra.mrb[0].mxu0 %v1267
    %v1335 = vpop.f32.mrb[0].mxu0
    %v1336 = vadd.f32 %v1263, %v1335
    %v1337 = vpop.f32.mrb[0].mxu0
    %1338 = vdwg.mxu0
    %vm1339 = vcmask 139264
    %v1340 = vsel %vm1339, %v1336, -inf
    %1341 = vmax.xlane.f32.xlu0 %v1340
    %v1342 = vpop.xlane.xlu0 %1341
    %v1343 = vsub.f32 %v1336, %v1342
    %v1344 = vmul.f32 %v1343, 1.442695
    %v1345 = vpow.pop %v1344
    %v1346 = vsel %vm1339, %v1345, 0.0
    %1347 = vadd.xlane.f32.xlu0 %v1346
    %v1348 = vpop.xlane.xlu0 %1347
    %v1349 = vlog2.pop %v1348
    %v1350 = vmul.f32 %v1349, 0.6931472
    %s1351 = sld [smem:[#allocation6]]
    %v1352 = vstv %s1351
    %vm1353 = vcmp.eq.s32.totalorder %v895, %v1352
    %v1354 = vsel %vm1353, %v1343, 0.0
    %v1355 = vsel %vm1339, %v1354, 0.0
    %1356 = vadd.xlane.f32.xlu0 %v1355
    %v1357 = vpop.xlane.xlu0 %1356
    %v1358 = vrot.slane %v1357, 4
    %v1359 = vadd.f32 %v1357, %v1358
    %v1360 = vrot.slane %v1359, 2
    %v1361 = vadd.f32 %v1359, %v1360
    %v1362 = vrot.slane %v1361, 1
    %v1363 = vadd.f32 %v1361, %v1362
    %s1364 = vtos %v1363
    %v1365 = vadd.f32 %v1350, 0.0
    %s1366 = vtos %v1365
    %s1367 = ssub.f32 %s1366, %s1364
    %s1368 = sadd.f32 %s1367, 0.0
    %vm1369 = vcmp.eq.f32.partialorder %v1343, 0.0
    %v1370 = vsel %vm1369, %v895, 18
    %v1371 = vsel %vm1339, %v1370, 2147483647
    %v1372 = vand.u32 %v1371, 65535
    %v1373 = vshra.s32 %v1371, 16
    %v1374 = vcvt.s32.f32 %v1372
    %v1375 = vcvt.s32.f32 %v1373
    %1376 = vmin.xlane.f32.xlu0 %v1375
    %v1377 = vpop.xlane.xlu0 %1376
    %vm1378 = vcmp.eq.f32.partialorder %v1375, %v1377
    %v1379 = vsel %vm1378, %v1374, inf
    %1380 = vmin.xlane.f32.xlu0 %v1379
    %v1381 = vpop.xlane.xlu0 %1380
    %v1382 = vcvt.f32.s32 %v1381
    %v1383 = vcvt.f32.s32 %v1377
    %v1384 = vshll.u32 %v1383, 16
    %v1385 = vadd.s32 %v1384, %v1382
    %v1386 = vrot.slane %v1385, 4
    %vm1387 = vcmp.lt.s32.totalorder %v1385, %v1386
    %v1388 = vsel %vm1387, %v1385, %v1386
    %v1389 = vrot.slane %v1388, 2
    %vm1390 = vcmp.lt.s32.totalorder %v1388, %v1389
    %v1391 = vsel %vm1390, %v1388, %v1389
    %v1392 = vrot.slane %v1391, 1
    %vm1393 = vcmp.lt.s32.totalorder %v1391, %v1392
    %v1394 = vsel %vm1393, %v1391, %v1392
    %s1395 = vtos %v1394
    %p1396 = scmp.eq.s32.totalorder %s1395, 1
    %s1397 = scalar_select %p1396, 0.0, 1.0
    %v1398 = vstv %s1395
    %vm1399 = vcmp.eq.s32.totalorder %v895, %v1398
    %v1400 = vsel %vm1399, 1.0, 0.0
    %v1401 = vld [vmem:[#allocation9] sm:$0xff]
    %v1402 = vld [vmem:[#allocation9 + $0x8] sm:$0xff]
    %v1403 = vld [vmem:[#allocation9 + $0x10] sm:$0x3]
    %vm1404 = vcmask 146432
    %v1406 = vsel %vm1404, %v1400, 0
    %vm1408 = vcmask 1041408
    %v1410 = vsel %vm1408, %v1403, 0
    %1412 = vmatprep.subr.mxu0 0.0
    %1413 = vmatpush1.msra.mxu0 %v1401
    %1414 = vmatprep.subr.mxu0 0.0
    %1415 = vmatpush1.msra.mxu0 %v1402
    %1416 = vmatprep.subr.mxu0 0.0
    %1417 = vmatpush1.msra.mxu0 %v1410
    %1418 = vmatprep.subr.mxu0 0.0
    %1419 = vmatpush1.msra.mxu0 0.0
    %1420 = vmatprep.subr.mxu0 0.0
    %1421 = vmatpush1.msra.mxu0 0.0
    %1422 = vmatprep.subr.mxu0 0.0
    %1423 = vmatpush1.msra.mxu0 0.0
    %1424 = vmatprep.subr.mxu0 0.0
    %1425 = vmatpush1.msra.mxu0 0.0
    %1426 = vmatprep.subr.mxu0 0.0
    %1427 = vmatpush1.msra.mxu0 0.0
    %1428 = vmatprep.subr.mxu0 0.0
    %1429 = vmatpush1.msra.mxu0 0.0
    %1430 = vmatprep.subr.mxu0 0.0
    %1431 = vmatpush1.msra.mxu0 0.0
    %1432 = vmatprep.subr.mxu0 0.0
    %1433 = vmatpush1.msra.mxu0 0.0
    %1434 = vmatprep.subr.mxu0 0.0
    %1435 = vmatpush1.msra.mxu0 0.0
    %1436 = vmatprep.subr.mxu0 0.0
    %1437 = vmatpush1.msra.mxu0 0.0
    %1438 = vmatprep.subr.mxu0 0.0
    %1439 = vmatpush1.msra.mxu0 0.0
    %1440 = vmatprep.subr.mxu0 0.0
    %1441 = vmatpush1.msra.mxu0 0.0
    %1442 = vmatprep.subr.mxu0 0.0
    %1443 = vmatpush1.msra.mxu0 0.0
    %1444 = vmatprep.subr.mxu0 0.0
    %1445 = vmatpush1.msra.mxu0 0.0
    %1446 = vmatprep.subr.mxu0 0.0
    %1447 = vmatpush1.msra.mxu0 0.0
    %1448 = vmatprep.subr.mxu0 0.0
    %1449 = vmatpush1.msra.mxu0 0.0
    %1450 = vmatprep.subr.mxu0 0.0
    %1451 = vmatpush1.msra.mxu0 0.0
    %1452 = vmatprep.subr.mxu0 0.0
    %1453 = vmatpush1.msra.mxu0 0.0
    %1454 = vmatprep.subr.mxu0 0.0
    %1455 = vmatpush1.msra.mxu0 0.0
    %1456 = vmatprep.subr.mxu0 0.0
    %1457 = vmatpush1.msra.mxu0 0.0
    %1458 = vmatprep.subr.mxu0 0.0
    %1459 = vmatpush1.msra.mxu0 0.0
    %1460 = vmatprep.subr.mxu0 0.0
    %1461 = vmatpush1.msra.mxu0 0.0
    %1462 = vmatprep.subr.mxu0 0.0
    %1463 = vmatpush1.msra.mxu0 0.0
    %1464 = vmatprep.subr.mxu0 0.0
    %1465 = vmatpush1.msra.mxu0 0.0
    %1466 = vmatprep.subr.mxu0 0.0
    %1467 = vmatpush1.msra.mxu0 0.0
    %1468 = vmatprep.subr.mxu0 0.0
    %1469 = vmatpush1.msra.mxu0 0.0
    %1470 = vmatprep.subr.mxu0 0.0
    %1471 = vmatpush1.msra.mxu0 0.0
    %1472 = vmatprep.subr.mxu0 0.0
    %1473 = vmatpush1.msra.mxu0 0.0
    %1474 = vmatprep.subr.mxu0 0.0
    %1475 = vmatpush1.msra.mxu0 0.0
    %1476 = vmatprep.mubr.f32.mxu0 0.0
    %1477 = vmatmul.mubr.f32.gmra.mrb[0].mxu0 %v1406
    %v1478 = vpop.f32.mrb[0].mxu0
    %v1479 = vadd.f32 0.0, %v1478
    %v1480 = vpop.f32.mrb[0].mxu0
    %1481 = vdwg.mxu0
    %1482 = vmatprep.subr.mxu0 0.0
    %1483 = vmatpush1.msra.mxu0 %v897
    %1484 = vmatprep.subr.mxu0 0.0
    %1485 = vmatpush1.msra.mxu0 %v898
    %1486 = vmatprep.subr.mxu0 0.0
    %1487 = vmatpush1.msra.mxu0 %v899
    %1488 = vmatprep.subr.mxu0 0.0
    %1489 = vmatpush1.msra.mxu0 %v900
    %1490 = vmatprep.subr.mxu0 0.0
    %1491 = vmatpush1.msra.mxu0 0.0
    %1492 = vmatprep.subr.mxu0 0.0
    %1493 = vmatpush1.msra.mxu0 0.0
    %1494 = vmatprep.subr.mxu0 0.0
    %1495 = vmatpush1.msra.mxu0 0.0
    %1496 = vmatprep.subr.mxu0 0.0
    %1497 = vmatpush1.msra.mxu0 0.0
    %1498 = vmatprep.subr.mxu0 0.0
    %1499 = vmatpush1.msra.mxu0 0.0
    %1500 = vmatprep.subr.mxu0 0.0
    %1501 = vmatpush1.msra.mxu0 0.0
    %1502 = vmatprep.subr.mxu0 0.0
    %1503 = vmatpush1.msra.mxu0 0.0
    %1504 = vmatprep.subr.mxu0 0.0
    %1505 = vmatpush1.msra.mxu0 0.0
    %1506 = vmatprep.subr.mxu0 0.0
    %1507 = vmatpush1.msra.mxu0 0.0
    %1508 = vmatprep.subr.mxu0 0.0
    %1509 = vmatpush1.msra.mxu0 0.0
    %1510 = vmatprep.subr.mxu0 0.0
    %1511 = vmatpush1.msra.mxu0 0.0
    %1512 = vmatprep.subr.mxu0 0.0
    %1513 = vmatpush1.msra.mxu0 0.0
    %1514 = vmatprep.subr.mxu0 0.0
    %1515 = vmatpush1.msra.mxu0 0.0
    %1516 = vmatprep.subr.mxu0 0.0
    %1517 = vmatpush1.msra.mxu0 0.0
    %1518 = vmatprep.subr.mxu0 0.0
    %1519 = vmatpush1.msra.mxu0 0.0
    %1520 = vmatprep.subr.mxu0 0.0
    %1521 = vmatpush1.msra.mxu0 0.0
    %1522 = vmatprep.subr.mxu0 0.0
    %1523 = vmatpush1.msra.mxu0 0.0
    %1524 = vmatprep.subr.mxu0 0.0
    %1525 = vmatpush1.msra.mxu0 0.0
    %1526 = vmatprep.subr.mxu0 0.0
    %1527 = vmatpush1.msra.mxu0 0.0
    %1528 = vmatprep.subr.mxu0 0.0
    %1529 = vmatpush1.msra.mxu0 0.0
    %1530 = vmatprep.subr.mxu0 0.0
    %1531 = vmatpush1.msra.mxu0 0.0
    %1532 = vmatprep.subr.mxu0 0.0
    %1533 = vmatpush1.msra.mxu0 0.0
    %1534 = vmatprep.subr.mxu0 0.0
    %1535 = vmatpush1.msra.mxu0 0.0
    %1536 = vmatprep.subr.mxu0 0.0
    %1537 = vmatpush1.msra.mxu0 0.0
    %1538 = vmatprep.subr.mxu0 0.0
    %1539 = vmatpush1.msra.mxu0 0.0
    %1540 = vmatprep.subr.mxu0 0.0
    %1541 = vmatpush1.msra.mxu0 0.0
    %1542 = vmatprep.subr.mxu0 0.0
    %1543 = vmatpush1.msra.mxu0 0.0
    %1544 = vmatprep.subr.mxu0 0.0
    %1545 = vmatpush1.msra.mxu0 0.0
    %1546 = vmatprep.mubr.f32.mxu0 0.0
    %1547 = vmatmul.mubr.f32.gmra.mrb[0].mxu0 %v1267
    %v1548 = vpop.f32.mrb[0].mxu0
    %v1549 = vadd.f32 %v901, %v1548
    %v1550 = vpop.f32.mrb[0].mxu0
    %1551 = vdwg.mxu0
    %1553 = vrot.lane.b32.xlu0 %v1549, 32
    %v1554 = vpop.permute.xlu0 %1553
    %v1556 = vadd.f32 %v1479, %v1554
    %v1557 = vsel %vm981, %v1556, -inf
    %1558 = vmax.xlane.f32.xlu0 %v1557
    %v1559 = vpop.xlane.xlu0 %1558
    %v1560 = vsub.f32 %v1556, %v1559
    %v1561 = vmul.f32 %v1560, 1.442695
    %v1562 = vpow.pop %v1561
    %v1563 = vsel %vm981, %v1562, 0.0
    %1564 = vadd.xlane.f32.xlu0 %v1563
    %v1565 = vpop.xlane.xlu0 %1564
    %v1566 = vrcp.pop %v1565
    %v1567 = vmul.f32 %v1562, %v1566
    %v1569 = vsel %vm997, %v1567, 0
    %1571 = vmatprep.subr.mxu0 0.0
    %1572 = vmatpush1.msra.mxu0 %v995
    %1573 = vmatprep.subr.mxu0 0.0
    %1574 = vmatpush1.msra.mxu0 0.0
    %1575 = vmatprep.subr.mxu0 0.0
    %1576 = vmatpush1.msra.mxu0 0.0
    %1577 = vmatprep.subr.mxu0 0.0
    %1578 = vmatpush1.msra.mxu0 0.0
    %1579 = vmatprep.subr.mxu0 0.0
    %1580 = vmatpush1.msra.mxu0 0.0
    %1581 = vmatprep.subr.mxu0 0.0
    %1582 = vmatpush1.msra.mxu0 0.0
    %1583 = vmatprep.subr.mxu0 0.0
    %1584 = vmatpush1.msra.mxu0 0.0
    %1585 = vmatprep.subr.mxu0 0.0
    %1586 = vmatpush1.msra.mxu0 0.0
    %1587 = vmatprep.subr.mxu0 0.0
    %1588 = vmatpush1.msra.mxu0 0.0
    %1589 = vmatprep.subr.mxu0 0.0
    %1590 = vmatpush1.msra.mxu0 0.0
    %1591 = vmatprep.subr.mxu0 0.0
    %1592 = vmatpush1.msra.mxu0 0.0
    %1593 = vmatprep.subr.mxu0 0.0
    %1594 = vmatpush1.msra.mxu0 0.0
    %1595 = vmatprep.subr.mxu0 0.0
    %1596 = vmatpush1.msra.mxu0 0.0
    %1597 = vmatprep.subr.mxu0 0.0
    %1598 = vmatpush1.msra.mxu0 0.0
    %1599 = vmatprep.subr.mxu0 0.0
    %1600 = vmatpush1.msra.mxu0 0.0
    %1601 = vmatprep.subr.mxu0 0.0
    %1602 = vmatpush1.msra.mxu0 0.0
    %1603 = vmatprep.subr.mxu0 0.0
    %1604 = vmatpush1.msra.mxu0 0.0
    %1605 = vmatprep.subr.mxu0 0.0
    %1606 = vmatpush1.msra.mxu0 0.0
    %1607 = vmatprep.subr.mxu0 0.0
    %1608 = vmatpush1.msra.mxu0 0.0
    %1609 = vmatprep.subr.mxu0 0.0
    %1610 = vmatpush1.msra.mxu0 0.0
    %1611 = vmatprep.subr.mxu0 0.0
    %1612 = vmatpush1.msra.mxu0 0.0
    %1613 = vmatprep.subr.mxu0 0.0
    %1614 = vmatpush1.msra.mxu0 0.0
    %1615 = vmatprep.subr.mxu0 0.0
    %1616 = vmatpush1.msra.mxu0 0.0
    %1617 = vmatprep.subr.mxu0 0.0
    %1618 = vmatpush1.msra.mxu0 0.0
    %1619 = vmatprep.subr.mxu0 0.0
    %1620 = vmatpush1.msra.mxu0 0.0
    %1621 = vmatprep.subr.mxu0 0.0
    %1622 = vmatpush1.msra.mxu0 0.0
    %1623 = vmatprep.subr.mxu0 0.0
    %1624 = vmatpush1.msra.mxu0 0.0
    %1625 = vmatprep.subr.mxu0 0.0
    %1626 = vmatpush1.msra.mxu0 0.0
    %1627 = vmatprep.subr.mxu0 0.0
    %1628 = vmatpush1.msra.mxu0 0.0
    %1629 = vmatprep.subr.mxu0 0.0
    %1630 = vmatpush1.msra.mxu0 0.0
    %1631 = vmatprep.subr.mxu0 0.0
    %1632 = vmatpush1.msra.mxu0 0.0
    %1633 = vmatprep.subr.mxu0 0.0
    %1634 = vmatpush1.msra.mxu0 0.0
    %1635 = vmatprep.mubr.f32.mxu0 0.0
    %1636 = vmatmul.mubr.f32.gmra.mrb[0].mxu0 %v1569
    %v1637 = vpop.f32.mrb[0].mxu0
    %v1638 = vadd.f32 0.0, %v1637
    %v1639 = vpop.f32.mrb[0].mxu0
    %1640 = vdwg.mxu0
    %v1642 = vsel %vm135, %v1638, 0
    %1644 = vmatprep.subr.mxu0 0.0
    %1645 = vmatpush1.msra.mxu0 %v1071
    %1646 = vmatprep.subr.mxu0 0.0
    %1647 = vmatpush1.msra.mxu0 %v1072
    %1648 = vmatprep.subr.mxu0 0.0
    %1649 = vmatpush1.msra.mxu0 %v1073
    %1650 = vmatprep.subr.mxu0 0.0
    %1651 = vmatpush1.msra.mxu0 %v1074
    %1652 = vmatprep.subr.mxu0 0.0
    %1653 = vmatpush1.msra.mxu0 0.0
    %1654 = vmatprep.subr.mxu0 0.0
    %1655 = vmatpush1.msra.mxu0 0.0
    %1656 = vmatprep.subr.mxu0 0.0
    %1657 = vmatpush1.msra.mxu0 0.0
    %1658 = vmatprep.subr.mxu0 0.0
    %1659 = vmatpush1.msra.mxu0 0.0
    %1660 = vmatprep.subr.mxu0 0.0
    %1661 = vmatpush1.msra.mxu0 0.0
    %1662 = vmatprep.subr.mxu0 0.0
    %1663 = vmatpush1.msra.mxu0 0.0
    %1664 = vmatprep.subr.mxu0 0.0
    %1665 = vmatpush1.msra.mxu0 0.0
    %1666 = vmatprep.subr.mxu0 0.0
    %1667 = vmatpush1.msra.mxu0 0.0
    %1668 = vmatprep.subr.mxu0 0.0
    %1669 = vmatpush1.msra.mxu0 0.0
    %1670 = vmatprep.subr.mxu0 0.0
    %1671 = vmatpush1.msra.mxu0 0.0
    %1672 = vmatprep.subr.mxu0 0.0
    %1673 = vmatpush1.msra.mxu0 0.0
    %1674 = vmatprep.subr.mxu0 0.0
    %1675 = vmatpush1.msra.mxu0 0.0
    %1676 = vmatprep.subr.mxu0 0.0
    %1677 = vmatpush1.msra.mxu0 0.0
    %1678 = vmatprep.subr.mxu0 0.0
    %1679 = vmatpush1.msra.mxu0 0.0
    %1680 = vmatprep.subr.mxu0 0.0
    %1681 = vmatpush1.msra.mxu0 0.0
    %1682 = vmatprep.subr.mxu0 0.0
    %1683 = vmatpush1.msra.mxu0 0.0
    %1684 = vmatprep.subr.mxu0 0.0
    %1685 = vmatpush1.msra.mxu0 0.0
    %1686 = vmatprep.subr.mxu0 0.0
    %1687 = vmatpush1.msra.mxu0 0.0
    %1688 = vmatprep.subr.mxu0 0.0
    %1689 = vmatpush1.msra.mxu0 0.0
    %1690 = vmatprep.subr.mxu0 0.0
    %1691 = vmatpush1.msra.mxu0 0.0
    %1692 = vmatprep.subr.mxu0 0.0
    %1693 = vmatpush1.msra.mxu0 0.0
    %1694 = vmatprep.subr.mxu0 0.0
    %1695 = vmatpush1.msra.mxu0 0.0
    %1696 = vmatprep.subr.mxu0 0.0
    %1697 = vmatpush1.msra.mxu0 0.0
    %1698 = vmatprep.subr.mxu0 0.0
    %1699 = vmatpush1.msra.mxu0 0.0
    %1700 = vmatprep.subr.mxu0 0.0
    %1701 = vmatpush1.msra.mxu0 0.0
    %1702 = vmatprep.subr.mxu0 0.0
    %1703 = vmatpush1.msra.mxu0 0.0
    %1704 = vmatprep.subr.mxu0 0.0
    %1705 = vmatpush1.msra.mxu0 0.0
    %1706 = vmatprep.subr.mxu0 0.0
    %1707 = vmatpush1.msra.mxu0 0.0
    %1708 = vmatprep.mubr.f32.mxu0 0.0
    %1709 = vmatmul.mubr.f32.gmra.mrb[0].mxu0 %v1642
    %v1710 = vpop.f32.mrb[0].mxu0
    %v1711 = vadd.f32 0.0, %v1710
    %v1712 = vpop.f32.mrb[0].mxu0
    %1713 = vdwg.mxu0
    %1715 = vrot.lane.b32.xlu0 %v1711, 8
    %v1716 = vpop.permute.xlu0 %1715
    %v1718 = vadd.f32 %v1479, %v1716
    %v1719 = vmax.f32 %v1718, 0.0
    %1721 = vrot.lane.b32.xlu0 %v1719, 120
    %v1722 = vpop.permute.xlu0 %1721
    %v1723 = vsel %vm135, %v1722, 0
    %1725 = vmatprep.subr.mxu0 0.0
    %1726 = vmatpush1.msra.mxu0 %v1154
    %1727 = vmatprep.subr.mxu0 0.0
    %1728 = vmatpush1.msra.mxu0 %v1155
    %1729 = vmatprep.subr.mxu0 0.0
    %1730 = vmatpush1.msra.mxu0 %v1156
    %1731 = vmatprep.subr.mxu0 0.0
    %1732 = vmatpush1.msra.mxu0 %v1157
    %1733 = vmatprep.subr.mxu0 0.0
    %1734 = vmatpush1.msra.mxu0 0.0
    %1735 = vmatprep.subr.mxu0 0.0
    %1736 = vmatpush1.msra.mxu0 0.0
    %1737 = vmatprep.subr.mxu0 0.0
    %1738 = vmatpush1.msra.mxu0 0.0
    %1739 = vmatprep.subr.mxu0 0.0
    %1740 = vmatpush1.msra.mxu0 0.0
    %1741 = vmatprep.subr.mxu0 0.0
    %1742 = vmatpush1.msra.mxu0 0.0
    %1743 = vmatprep.subr.mxu0 0.0
    %1744 = vmatpush1.msra.mxu0 0.0
    %1745 = vmatprep.subr.mxu0 0.0
    %1746 = vmatpush1.msra.mxu0 0.0
    %1747 = vmatprep.subr.mxu0 0.0
    %1748 = vmatpush1.msra.mxu0 0.0
    %1749 = vmatprep.subr.mxu0 0.0
    %1750 = vmatpush1.msra.mxu0 0.0
    %1751 = vmatprep.subr.mxu0 0.0
    %1752 = vmatpush1.msra.mxu0 0.0
    %1753 = vmatprep.subr.mxu0 0.0
    %1754 = vmatpush1.msra.mxu0 0.0
    %1755 = vmatprep.subr.mxu0 0.0
    %1756 = vmatpush1.msra.mxu0 0.0
    %1757 = vmatprep.subr.mxu0 0.0
    %1758 = vmatpush1.msra.mxu0 0.0
    %1759 = vmatprep.subr.mxu0 0.0
    %1760 = vmatpush1.msra.mxu0 0.0
    %1761 = vmatprep.subr.mxu0 0.0
    %1762 = vmatpush1.msra.mxu0 0.0
    %1763 = vmatprep.subr.mxu0 0.0
    %1764 = vmatpush1.msra.mxu0 0.0
    %1765 = vmatprep.subr.mxu0 0.0
    %1766 = vmatpush1.msra.mxu0 0.0
    %1767 = vmatprep.subr.mxu0 0.0
    %1768 = vmatpush1.msra.mxu0 0.0
    %1769 = vmatprep.subr.mxu0 0.0
    %1770 = vmatpush1.msra.mxu0 0.0
    %1771 = vmatprep.subr.mxu0 0.0
    %1772 = vmatpush1.msra.mxu0 0.0
    %1773 = vmatprep.subr.mxu0 0.0
    %1774 = vmatpush1.msra.mxu0 0.0
    %1775 = vmatprep.subr.mxu0 0.0
    %1776 = vmatpush1.msra.mxu0 0.0
    %1777 = vmatprep.subr.mxu0 0.0
    %1778 = vmatpush1.msra.mxu0 0.0
    %1779 = vmatprep.subr.mxu0 0.0
    %1780 = vmatpush1.msra.mxu0 0.0
    %1781 = vmatprep.subr.mxu0 0.0
    %1782 = vmatpush1.msra.mxu0 0.0
    %1783 = vmatprep.subr.mxu0 0.0
    %1784 = vmatpush1.msra.mxu0 0.0
    %1785 = vmatprep.subr.mxu0 0.0
    %1786 = vmatpush1.msra.mxu0 0.0
    %1787 = vmatprep.subr.mxu0 0.0
    %1788 = vmatpush1.msra.mxu0 0.0
    %1789 = vmatprep.mubr.f32.mxu0 0.0
    %1790 = vmatmul.mubr.f32.gmra.mrb[0].mxu0 %v1723
    %v1791 = vpop.f32.mrb[0].mxu0
    %v1792 = vadd.f32 %v1158, %v1791
    %v1793 = vpop.f32.mrb[0].mxu0
    %1794 = vdwg.mxu0
    %v1795 = vadd.f32 %v1792, %v1549
    %v1796 = vxor.u32 %v1795, 2147483648
    %v1797 = vmul.f32 %v1796, 1.442695
    %v1798 = vpow.pop %v1797
    %v1799 = vadd.f32 %v1798, 1.0
    %v1800 = vrcp.pop %v1799
    %v1801 = vmul.f32 1.0, %v1800
    %1802 = vrot.lane.b32.xlu0 %v1549, 64
    %v1803 = vpop.permute.xlu0 %1802
    %v1805 = vmul.f32 %v1801, %v1803
    %1807 = vrot.lane.b32.xlu0 %v1805, 64
    %v1808 = vpop.permute.xlu0 %1807
    %v1810 = vadd.f32 %v1792, %v1808
    %v1811 = vtanh.pop %v1810
    %v1812 = vsub.f32 1.0, %v1801
    %1814 = vrot.lane.b32.xlu0 %v1811, 96
    %v1815 = vpop.permute.xlu0 %1814
    %v1817 = vmul.f32 %v1812, %v1815
    %v1818 = vmul.f32 %v1801, %v1258
    %v1819 = vadd.f32 %v1817, %v1818
    %1821 = vrot.lane.b32.xlu0 %v1819, 96
    %v1822 = vpop.permute.xlu0 %1821
    %v1823 = vsel %vm135, %v1822, 0
    %1825 = vmatprep.subr.mxu0 0.0
    %1826 = vmatpush1.msra.mxu0 %v1259
    %1827 = vmatprep.subr.mxu0 0.0
    %1828 = vmatpush1.msra.mxu0 %v1260
    %1829 = vmatprep.subr.mxu0 0.0
    %1830 = vmatpush1.msra.mxu0 %v1261
    %1831 = vmatprep.subr.mxu0 0.0
    %1832 = vmatpush1.msra.mxu0 %v1262
    %1833 = vmatprep.subr.mxu0 0.0
    %1834 = vmatpush1.msra.mxu0 0.0
    %1835 = vmatprep.subr.mxu0 0.0
    %1836 = vmatpush1.msra.mxu0 0.0
    %1837 = vmatprep.subr.mxu0 0.0
    %1838 = vmatpush1.msra.mxu0 0.0
    %1839 = vmatprep.subr.mxu0 0.0
    %1840 = vmatpush1.msra.mxu0 0.0
    %1841 = vmatprep.subr.mxu0 0.0
    %1842 = vmatpush1.msra.mxu0 0.0
    %1843 = vmatprep.subr.mxu0 0.0
    %1844 = vmatpush1.msra.mxu0 0.0
    %1845 = vmatprep.subr.mxu0 0.0
    %1846 = vmatpush1.msra.mxu0 0.0
    %1847 = vmatprep.subr.mxu0 0.0
    %1848 = vmatpush1.msra.mxu0 0.0
    %1849 = vmatprep.subr.mxu0 0.0
    %1850 = vmatpush1.msra.mxu0 0.0
    %1851 = vmatprep.subr.mxu0 0.0
    %1852 = vmatpush1.msra.mxu0 0.0
    %1853 = vmatprep.subr.mxu0 0.0
    %1854 = vmatpush1.msra.mxu0 0.0
    %1855 = vmatprep.subr.mxu0 0.0
    %1856 = vmatpush1.msra.mxu0 0.0
    %1857 = vmatprep.subr.mxu0 0.0
    %1858 = vmatpush1.msra.mxu0 0.0
    %1859 = vmatprep.subr.mxu0 0.0
    %1860 = vmatpush1.msra.mxu0 0.0
    %1861 = vmatprep.subr.mxu0 0.0
    %1862 = vmatpush1.msra.mxu0 0.0
    %1863 = vmatprep.subr.mxu0 0.0
    %1864 = vmatpush1.msra.mxu0 0.0
    %1865 = vmatprep.subr.mxu0 0.0
    %1866 = vmatpush1.msra.mxu0 0.0
    %1867 = vmatprep.subr.mxu0 0.0
    %1868 = vmatpush1.msra.mxu0 0.0
    %1869 = vmatprep.subr.mxu0 0.0
    %1870 = vmatpush1.msra.mxu0 0.0
    %1871 = vmatprep.subr.mxu0 0.0
    %1872 = vmatpush1.msra.mxu0 0.0
    %1873 = vmatprep.subr.mxu0 0.0
    %1874 = vmatpush1.msra.mxu0 0.0
    %1875 = vmatprep.subr.mxu0 0.0
    %1876 = vmatpush1.msra.mxu0 0.0
    %1877 = vmatprep.subr.mxu0 0.0
    %1878 = vmatpush1.msra.mxu0 0.0
    %1879 = vmatprep.subr.mxu0 0.0
    %1880 = vmatpush1.msra.mxu0 0.0
    %1881 = vmatprep.subr.mxu0 0.0
    %1882 = vmatpush1.msra.mxu0 0.0
    %1883 = vmatprep.subr.mxu0 0.0
    %1884 = vmatpush1.msra.mxu0 0.0
    %1885 = vmatprep.subr.mxu0 0.0
    %1886 = vmatpush1.msra.mxu0 0.0
    %1887 = vmatprep.subr.mxu0 0.0
    %1888 = vmatpush1.msra.mxu0 0.0
    %1889 = vmatprep.mubr.f32.mxu0 0.0
    %1890 = vmatmul.mubr.f32.gmra.mrb[0].mxu0 %v1823
    %v1891 = vpop.f32.mrb[0].mxu0
    %v1892 = vadd.f32 %v1263, %v1891
    %v1893 = vpop.f32.mrb[0].mxu0
    %1894 = vdwg.mxu0
    %v1895 = vsel %vm1339, %v1892, -inf
    %1896 = vmax.xlane.f32.xlu0 %v1895
    %v1897 = vpop.xlane.xlu0 %1896
    %v1898 = vsub.f32 %v1892, %v1897
    %v1899 = vmul.f32 %v1898, 1.442695
    %v1900 = vpow.pop %v1899
    %v1901 = vsel %vm1339, %v1900, 0.0
    %1902 = vadd.xlane.f32.xlu0 %v1901
    %v1903 = vpop.xlane.xlu0 %1902
    %v1904 = vlog2.pop %v1903
    %v1905 = vmul.f32 %v1904, 0.6931472
    %s1906 = sld [smem:[#allocation6 + $0x1]]
    %v1907 = vstv %s1906
    %vm1908 = vcmp.eq.s32.totalorder %v895, %v1907
    %v1909 = vsel %vm1908, %v1898, 0.0
    %v1910 = vsel %vm1339, %v1909, 0.0
    %1911 = vadd.xlane.f32.xlu0 %v1910
    %v1912 = vpop.xlane.xlu0 %1911
    %v1913 = vrot.slane %v1912, 4
    %v1914 = vadd.f32 %v1912, %v1913
    %v1915 = vrot.slane %v1914, 2
    %v1916 = vadd.f32 %v1914, %v1915
    %v1917 = vrot.slane %v1916, 1
    %v1918 = vadd.f32 %v1916, %v1917
    %s1919 = vtos %v1918
    %v1920 = vadd.f32 %v1905, 0.0
    %s1921 = vtos %v1920
    %s1922 = ssub.f32 %s1921, %s1919
    %s1923 = smul.f32 %s1397, %s1922
    %s1924 = sadd.f32 %s1368, %s1923
    %vm1925 = vcmp.eq.f32.partialorder %v1898, 0.0
    %v1926 = vsel %vm1925, %v895, 18
    %v1927 = vsel %vm1339, %v1926, 2147483647
    %v1928 = vand.u32 %v1927, 65535
    %v1929 = vshra.s32 %v1927, 16
    %v1930 = vcvt.s32.f32 %v1928
    %v1931 = vcvt.s32.f32 %v1929
    %1932 = vmin.xlane.f32.xlu0 %v1931
    %v1933 = vpop.xlane.xlu0 %1932
    %vm1934 = vcmp.eq.f32.partialorder %v1931, %v1933
    %v1935 = vsel %vm1934, %v1930, inf
    %1936 = vmin.xlane.f32.xlu0 %v1935
    %v1937 = vpop.xlane.xlu0 %1936
    %v1938 = vcvt.f32.s32 %v1937
    %v1939 = vcvt.f32.s32 %v1933
    %v1940 = vshll.u32 %v1939, 16
    %v1941 = vadd.s32 %v1940, %v1938
    %v1942 = vrot.slane %v1941, 4
    %vm1943 = vcmp.lt.s32.totalorder %v1941, %v1942
    %v1944 = vsel %vm1943, %v1941, %v1942
    %v1945 = vrot.slane %v1944, 2
    %vm1946 = vcmp.lt.s32.totalorder %v1944, %v1945
    %v1947 = vsel %vm1946, %v1944, %v1945
    %v1948 = vrot.slane %v1947, 1
    %vm1949 = vcmp.lt.s32.totalorder %v1947, %v1948
    %v1950 = vsel %vm1949, %v1947, %v1948
    %s1951 = vtos %v1950
    %p1952 = scmp.eq.s32.totalorder %s1951, 1
    %s1953 = scalar_select %p1952, 0.0, 1.0
    %s1954 = smul.f32 %s1397, %s1953
    %v1955 = vstv %s1951
    %vm1956 = vcmp.eq.s32.totalorder %v895, %v1955
    %v1957 = vsel %vm1956, 1.0, 0.0
    %v1959 = vsel %vm1404, %v1957, 0
    %1961 = vmatprep.subr.mxu0 0.0
    %1962 = vmatpush1.msra.mxu0 %v1401
    %1963 = vmatprep.subr.mxu0 0.0
    %1964 = vmatpush1.msra.mxu0 %v1402
    %1965 = vmatprep.subr.mxu0 0.0
    %1966 = vmatpush1.msra.mxu0 %v1410
    %1967 = vmatprep.subr.mxu0 0.0
    %1968 = vmatpush1.msra.mxu0 0.0
    %1969 = vmatprep.subr.mxu0 0.0
    %1970 = vmatpush1.msra.mxu0 0.0
    %1971 = vmatprep.subr.mxu0 0.0
    %1972 = vmatpush1.msra.mxu0 0.0
    %1973 = vmatprep.subr.mxu0 0.0
    %1974 = vmatpush1.msra.mxu0 0.0
    %1975 = vmatprep.subr.mxu0 0.0
    %1976 = vmatpush1.msra.mxu0 0.0
    %1977 = vmatprep.subr.mxu0 0.0
    %1978 = vmatpush1.msra.mxu0 0.0
    %1979 = vmatprep.subr.mxu0 0.0
    %1980 = vmatpush1.msra.mxu0 0.0
    %1981 = vmatprep.subr.mxu0 0.0
    %1982 = vmatpush1.msra.mxu0 0.0
    %1983 = vmatprep.subr.mxu0 0.0
    %1984 = vmatpush1.msra.mxu0 0.0
    %1985 = vmatprep.subr.mxu0 0.0
    %1986 = vmatpush1.msra.mxu0 0.0
    %1987 = vmatprep.subr.mxu0 0.0
    %1988 = vmatpush1.msra.mxu0 0.0
    %1989 = vmatprep.subr.mxu0 0.0
    %1990 = vmatpush1.msra.mxu0 0.0
    %1991 = vmatprep.subr.mxu0 0.0
    %1992 = vmatpush1.msra.mxu0 0.0
    %1993 = vmatprep.subr.mxu0 0.0
    %1994 = vmatpush1.msra.mxu0 0.0
    %1995 = vmatprep.subr.mxu0 0.0
    %1996 = vmatpush1.msra.mxu0 0.0
    %1997 = vmatprep.subr.mxu0 0.0
    %1998 = vmatpush1.msra.mxu0 0.0
    %1999 = vmatprep.subr.mxu0 0.0
    %2000 = vmatpush1.msra.mxu0 0.0
    %2001 = vmatprep.subr.mxu0 0.0
    %2002 = vmatpush1.msra.mxu0 0.0
    %2003 = vmatprep.subr.mxu0 0.0
    %2004 = vmatpush1.msra.mxu0 0.0
    %2005 = vmatprep.subr.mxu0 0.0
    %2006 = vmatpush1.msra.mxu0 0.0
    %2007 = vmatprep.subr.mxu0 0.0
    %2008 = vmatpush1.msra.mxu0 0.0
    %2009 = vmatprep.subr.mxu0 0.0
    %2010 = vmatpush1.msra.mxu0 0.0
    %2011 = vmatprep.subr.mxu0 0.0
    %2012 = vmatpush1.msra.mxu0 0.0
    %2013 = vmatprep.subr.mxu0 0.0
    %2014 = vmatpush1.msra.mxu0 0.0
    %2015 = vmatprep.subr.mxu0 0.0
    %2016 = vmatpush1.msra.mxu0 0.0
    %2017 = vmatprep.subr.mxu0 0.0
    %2018 = vmatpush1.msra.mxu0 0.0
    %2019 = vmatprep.subr.mxu0 0.0
    %2020 = vmatpush1.msra.mxu0 0.0
    %2021 = vmatprep.subr.mxu0 0.0
    %2022 = vmatpush1.msra.mxu0 0.0
    %2023 = vmatprep.subr.mxu0 0.0
    %2024 = vmatpush1.msra.mxu0 0.0
    %2025 = vmatprep.mubr.f32.mxu0 0.0
    %2026 = vmatmul.mubr.f32.gmra.mrb[0].mxu0 %v1959
    %v2027 = vpop.f32.mrb[0].mxu0
    %v2028 = vadd.f32 0.0, %v2027
    %v2029 = vpop.f32.mrb[0].mxu0
    %2030 = vdwg.mxu0
    %2031 = vmatprep.subr.mxu0 0.0
    %2032 = vmatpush1.msra.mxu0 %v897
    %2033 = vmatprep.subr.mxu0 0.0
    %2034 = vmatpush1.msra.mxu0 %v898
    %2035 = vmatprep.subr.mxu0 0.0
    %2036 = vmatpush1.msra.mxu0 %v899
    %2037 = vmatprep.subr.mxu0 0.0
    %2038 = vmatpush1.msra.mxu0 %v900
    %2039 = vmatprep.subr.mxu0 0.0
    %2040 = vmatpush1.msra.mxu0 0.0
    %2041 = vmatprep.subr.mxu0 0.0
    %2042 = vmatpush1.msra.mxu0 0.0
    %2043 = vmatprep.subr.mxu0 0.0
    %2044 = vmatpush1.msra.mxu0 0.0
    %2045 = vmatprep.subr.mxu0 0.0
    %2046 = vmatpush1.msra.mxu0 0.0
    %2047 = vmatprep.subr.mxu0 0.0
    %2048 = vmatpush1.msra.mxu0 0.0
    %2049 = vmatprep.subr.mxu0 0.0
    %2050 = vmatpush1.msra.mxu0 0.0
    %2051 = vmatprep.subr.mxu0 0.0
    %2052 = vmatpush1.msra.mxu0 0.0
    %2053 = vmatprep.subr.mxu0 0.0
    %2054 = vmatpush1.msra.mxu0 0.0
    %2055 = vmatprep.subr.mxu0 0.0
    %2056 = vmatpush1.msra.mxu0 0.0
    %2057 = vmatprep.subr.mxu0 0.0
    %2058 = vmatpush1.msra.mxu0 0.0
    %2059 = vmatprep.subr.mxu0 0.0
    %2060 = vmatpush1.msra.mxu0 0.0
    %2061 = vmatprep.subr.mxu0 0.0
    %2062 = vmatpush1.msra.mxu0 0.0
    %2063 = vmatprep.subr.mxu0 0.0
    %2064 = vmatpush1.msra.mxu0 0.0
    %2065 = vmatprep.subr.mxu0 0.0
    %2066 = vmatpush1.msra.mxu0 0.0
    %2067 = vmatprep.subr.mxu0 0.0
    %2068 = vmatpush1.msra.mxu0 0.0
    %2069 = vmatprep.subr.mxu0 0.0
    %2070 = vmatpush1.msra.mxu0 0.0
    %2071 = vmatprep.subr.mxu0 0.0
    %2072 = vmatpush1.msra.mxu0 0.0
    %2073 = vmatprep.subr.mxu0 0.0
    %2074 = vmatpush1.msra.mxu0 0.0
    %2075 = vmatprep.subr.mxu0 0.0
    %2076 = vmatpush1.msra.mxu0 0.0
    %2077 = vmatprep.subr.mxu0 0.0
    %2078 = vmatpush1.msra.mxu0 0.0
    %2079 = vmatprep.subr.mxu0 0.0
    %2080 = vmatpush1.msra.mxu0 0.0
    %2081 = vmatprep.subr.mxu0 0.0
    %2082 = vmatpush1.msra.mxu0 0.0
    %2083 = vmatprep.subr.mxu0 0.0
    %2084 = vmatpush1.msra.mxu0 0.0
    %2085 = vmatprep.subr.mxu0 0.0
    %2086 = vmatpush1.msra.mxu0 0.0
    %2087 = vmatprep.subr.mxu0 0.0
    %2088 = vmatpush1.msra.mxu0 0.0
    %2089 = vmatprep.subr.mxu0 0.0
    %2090 = vmatpush1.msra.mxu0 0.0
    %2091 = vmatprep.subr.mxu0 0.0
    %2092 = vmatpush1.msra.mxu0 0.0
    %2093 = vmatprep.subr.mxu0 0.0
    %2094 = vmatpush1.msra.mxu0 0.0
    %2095 = vmatprep.mubr.f32.mxu0 0.0
    %2096 = vmatmul.mubr.f32.gmra.mrb[0].mxu0 %v1823
    %v2097 = vpop.f32.mrb[0].mxu0
    %v2098 = vadd.f32 %v901, %v2097
    %v2099 = vpop.f32.mrb[0].mxu0
    %2100 = vdwg.mxu0
    %2102 = vrot.lane.b32.xlu0 %v2098, 32
    %v2103 = vpop.permute.xlu0 %2102
    %v2105 = vadd.f32 %v2028, %v2103
    %v2106 = vsel %vm981, %v2105, -inf
    %2107 = vmax.xlane.f32.xlu0 %v2106
    %v2108 = vpop.xlane.xlu0 %2107
    %v2109 = vsub.f32 %v2105, %v2108
    %v2110 = vmul.f32 %v2109, 1.442695
    %v2111 = vpow.pop %v2110
    %v2112 = vsel %vm981, %v2111, 0.0
    %2113 = vadd.xlane.f32.xlu0 %v2112
    %v2114 = vpop.xlane.xlu0 %2113
    %v2115 = vrcp.pop %v2114
    %v2116 = vmul.f32 %v2111, %v2115
    %v2118 = vsel %vm997, %v2116, 0
    %2120 = vmatprep.subr.mxu0 0.0
    %2121 = vmatpush1.msra.mxu0 %v995
    %2122 = vmatprep.subr.mxu0 0.0
    %2123 = vmatpush1.msra.mxu0 0.0
    %2124 = vmatprep.subr.mxu0 0.0
    %2125 = vmatpush1.msra.mxu0 0.0
    %2126 = vmatprep.subr.mxu0 0.0
    %2127 = vmatpush1.msra.mxu0 0.0
    %2128 = vmatprep.subr.mxu0 0.0
    %2129 = vmatpush1.msra.mxu0 0.0
    %2130 = vmatprep.subr.mxu0 0.0
    %2131 = vmatpush1.msra.mxu0 0.0
    %2132 = vmatprep.subr.mxu0 0.0
    %2133 = vmatpush1.msra.mxu0 0.0
    %2134 = vmatprep.subr.mxu0 0.0
    %2135 = vmatpush1.msra.mxu0 0.0
    %2136 = vmatprep.subr.mxu0 0.0
    %2137 = vmatpush1.msra.mxu0 0.0
    %2138 = vmatprep.subr.mxu0 0.0
    %2139 = vmatpush1.msra.mxu0 0.0
    %2140 = vmatprep.subr.mxu0 0.0
    %2141 = vmatpush1.msra.mxu0 0.0
    %2142 = vmatprep.subr.mxu0 0.0
    %2143 = vmatpush1.msra.mxu0 0.0
    %2144 = vmatprep.subr.mxu0 0.0
    %2145 = vmatpush1.msra.mxu0 0.0
    %2146 = vmatprep.subr.mxu0 0.0
    %2147 = vmatpush1.msra.mxu0 0.0
    %2148 = vmatprep.subr.mxu0 0.0
    %2149 = vmatpush1.msra.mxu0 0.0
    %2150 = vmatprep.subr.mxu0 0.0
    %2151 = vmatpush1.msra.mxu0 0.0
    %2152 = vmatprep.subr.mxu0 0.0
    %2153 = vmatpush1.msra.mxu0 0.0
    %2154 = vmatprep.subr.mxu0 0.0
    %2155 = vmatpush1.msra.mxu0 0.0
    %2156 = vmatprep.subr.mxu0 0.0
    %2157 = vmatpush1.msra.mxu0 0.0
    %2158 = vmatprep.subr.mxu0 0.0
    %2159 = vmatpush1.msra.mxu0 0.0
    %2160 = vmatprep.subr.mxu0 0.0
    %2161 = vmatpush1.msra.mxu0 0.0
    %2162 = vmatprep.subr.mxu0 0.0
    %2163 = vmatpush1.msra.mxu0 0.0
    %2164 = vmatprep.subr.mxu0 0.0
    %2165 = vmatpush1.msra.mxu0 0.0
    %2166 = vmatprep.subr.mxu0 0.0
    %2167 = vmatpush1.msra.mxu0 0.0
    %2168 = vmatprep.subr.mxu0 0.0
    %2169 = vmatpush1.msra.mxu0 0.0
    %2170 = vmatprep.subr.mxu0 0.0
    %2171 = vmatpush1.msra.mxu0 0.0
    %2172 = vmatprep.subr.mxu0 0.0
    %2173 = vmatpush1.msra.mxu0 0.0
    %2174 = vmatprep.subr.mxu0 0.0
    %2175 = vmatpush1.msra.mxu0 0.0
    %2176 = vmatprep.subr.mxu0 0.0
    %2177 = vmatpush1.msra.mxu0 0.0
    %2178 = vmatprep.subr.mxu0 0.0
    %2179 = vmatpush1.msra.mxu0 0.0
    %2180 = vmatprep.subr.mxu0 0.0
    %2181 = vmatpush1.msra.mxu0 0.0
    %2182 = vmatprep.subr.mxu0 0.0
    %2183 = vmatpush1.msra.mxu0 0.0
    %2184 = vmatprep.mubr.f32.mxu0 0.0
    %2185 = vmatmul.mubr.f32.gmra.mrb[0].mxu0 %v2118
    %v2186 = vpop.f32.mrb[0].mxu0
    %v2187 = vadd.f32 0.0, %v2186
    %v2188 = vpop.f32.mrb[0].mxu0
    %2189 = vdwg.mxu0
    %v2191 = vsel %vm135, %v2187, 0
    %2193 = vmatprep.subr.mxu0 0.0
    %2194 = vmatpush1.msra.mxu0 %v1071
    %2195 = vmatprep.subr.mxu0 0.0
    %2196 = vmatpush1.msra.mxu0 %v1072
    %2197 = vmatprep.subr.mxu0 0.0
    %2198 = vmatpush1.msra.mxu0 %v1073
    %2199 = vmatprep.subr.mxu0 0.0
    %2200 = vmatpush1.msra.mxu0 %v1074
    %2201 = vmatprep.subr.mxu0 0.0
    %2202 = vmatpush1.msra.mxu0 0.0
    %2203 = vmatprep.subr.mxu0 0.0
    %2204 = vmatpush1.msra.mxu0 0.0
    %2205 = vmatprep.subr.mxu0 0.0
    %2206 = vmatpush1.msra.mxu0 0.0
    %2207 = vmatprep.subr.mxu0 0.0
    %2208 = vmatpush1.msra.mxu0 0.0
    %2209 = vmatprep.subr.mxu0 0.0
    %2210 = vmatpush1.msra.mxu0 0.0
    %2211 = vmatprep.subr.mxu0 0.0
    %2212 = vmatpush1.msra.mxu0 0.0
    %2213 = vmatprep.subr.mxu0 0.0
    %2214 = vmatpush1.msra.mxu0 0.0
    %2215 = vmatprep.subr.mxu0 0.0
    %2216 = vmatpush1.msra.mxu0 0.0
    %2217 = vmatprep.subr.mxu0 0.0
    %2218 = vmatpush1.msra.mxu0 0.0
    %2219 = vmatprep.subr.mxu0 0.0
    %2220 = vmatpush1.msra.mxu0 0.0
    %2221 = vmatprep.subr.mxu0 0.0
    %2222 = vmatpush1.msra.mxu0 0.0
    %2223 = vmatprep.subr.mxu0 0.0
    %2224 = vmatpush1.msra.mxu0 0.0
    %2225 = vmatprep.subr.mxu0 0.0
    %2226 = vmatpush1.msra.mxu0 0.0
    %2227 = vmatprep.subr.mxu0 0.0
    %2228 = vmatpush1.msra.mxu0 0.0
    %2229 = vmatprep.subr.mxu0 0.0
    %2230 = vmatpush1.msra.mxu0 0.0
    %2231 = vmatprep.subr.mxu0 0.0
    %2232 = vmatpush1.msra.mxu0 0.0
    %2233 = vmatprep.subr.mxu0 0.0
    %2234 = vmatpush1.msra.mxu0 0.0
    %2235 = vmatprep.subr.mxu0 0.0
    %2236 = vmatpush1.msra.mxu0 0.0
    %2237 = vmatprep.subr.mxu0 0.0
    %2238 = vmatpush1.msra.mxu0 0.0
    %2239 = vmatprep.subr.mxu0 0.0
    %2240 = vmatpush1.msra.mxu0 0.0
    %2241 = vmatprep.subr.mxu0 0.0
    %2242 = vmatpush1.msra.mxu0 0.0
    %2243 = vmatprep.subr.mxu0 0.0
    %2244 = vmatpush1.msra.mxu0 0.0
    %2245 = vmatprep.subr.mxu0 0.0
    %2246 = vmatpush1.msra.mxu0 0.0
    %2247 = vmatprep.subr.mxu0 0.0
    %2248 = vmatpush1.msra.mxu0 0.0
    %2249 = vmatprep.subr.mxu0 0.0
    %2250 = vmatpush1.msra.mxu0 0.0
    %2251 = vmatprep.subr.mxu0 0.0
    %2252 = vmatpush1.msra.mxu0 0.0
    %2253 = vmatprep.subr.mxu0 0.0
    %2254 = vmatpush1.msra.mxu0 0.0
    %2255 = vmatprep.subr.mxu0 0.0
    %2256 = vmatpush1.msra.mxu0 0.0
    %2257 = vmatprep.mubr.f32.mxu0 0.0
    %2258 = vmatmul.mubr.f32.gmra.mrb[0].mxu0 %v2191
    %v2259 = vpop.f32.mrb[0].mxu0
    %v2260 = vadd.f32 0.0, %v2259
    %v2261 = vpop.f32.mrb[0].mxu0
    %2262 = vdwg.mxu0
    %2264 = vrot.lane.b32.xlu0 %v2260, 8
    %v2265 = vpop.permute.xlu0 %2264
    %v2267 = vadd.f32 %v2028, %v2265
    %v2268 = vmax.f32 %v2267, 0.0
    %2270 = vrot.lane.b32.xlu0 %v2268, 120
    %v2271 = vpop.permute.xlu0 %2270
    %v2272 = vsel %vm135, %v2271, 0
    %2274 = vmatprep.subr.mxu0 0.0
    %2275 = vmatpush1.msra.mxu0 %v1154
    %2276 = vmatprep.subr.mxu0 0.0
    %2277 = vmatpush1.msra.mxu0 %v1155
    %2278 = vmatprep.subr.mxu0 0.0
    %2279 = vmatpush1.msra.mxu0 %v1156
    %2280 = vmatprep.subr.mxu0 0.0
    %2281 = vmatpush1.msra.mxu0 %v1157
    %2282 = vmatprep.subr.mxu0 0.0
    %2283 = vmatpush1.msra.mxu0 0.0
    %2284 = vmatprep.subr.mxu0 0.0
    %2285 = vmatpush1.msra.mxu0 0.0
    %2286 = vmatprep.subr.mxu0 0.0
    %2287 = vmatpush1.msra.mxu0 0.0
    %2288 = vmatprep.subr.mxu0 0.0
    %2289 = vmatpush1.msra.mxu0 0.0
    %2290 = vmatprep.subr.mxu0 0.0
    %2291 = vmatpush1.msra.mxu0 0.0
    %2292 = vmatprep.subr.mxu0 0.0
    %2293 = vmatpush1.msra.mxu0 0.0
    %2294 = vmatprep.subr.mxu0 0.0
    %2295 = vmatpush1.msra.mxu0 0.0
    %2296 = vmatprep.subr.mxu0 0.0
    %2297 = vmatpush1.msra.mxu0 0.0
    %2298 = vmatprep.subr.mxu0 0.0
    %2299 = vmatpush1.msra.mxu0 0.0
    %2300 = vmatprep.subr.mxu0 0.0
    %2301 = vmatpush1.msra.mxu0 0.0
    %2302 = vmatprep.subr.mxu0 0.0
    %2303 = vmatpush1.msra.mxu0 0.0
    %2304 = vmatprep.subr.mxu0 0.0
    %2305 = vmatpush1.msra.mxu0 0.0
    %2306 = vmatprep.subr.mxu0 0.0
    %2307 = vmatpush1.msra.mxu0 0.0
    %2308 = vmatprep.subr.mxu0 0.0
    %2309 = vmatpush1.msra.mxu0 0.0
    %2310 = vmatprep.subr.mxu0 0.0
    %2311 = vmatpush1.msra.mxu0 0.0
    %2312 = vmatprep.subr.mxu0 0.0
    %2313 = vmatpush1.msra.mxu0 0.0
    %2314 = vmatprep.subr.mxu0 0.0
    %2315 = vmatpush1.msra.mxu0 0.0
    %2316 = vmatprep.subr.mxu0 0.0
    %2317 = vmatpush1.msra.mxu0 0.0
    %2318 = vmatprep.subr.mxu0 0.0
    %2319 = vmatpush1.msra.mxu0 0.0
    %2320 = vmatprep.subr.mxu0 0.0
    %2321 = vmatpush1.msra.mxu0 0.0
    %2322 = vmatprep.subr.mxu0 0.0
    %2323 = vmatpush1.msra.mxu0 0.0
    %2324 = vmatprep.subr.mxu0 0.0
    %2325 = vmatpush1.msra.mxu0 0.0
    %2326 = vmatprep.subr.mxu0 0.0
    %2327 = vmatpush1.msra.mxu0 0.0
    %2328 = vmatprep.subr.mxu0 0.0
    %2329 = vmatpush1.msra.mxu0 0.0
    %2330 = vmatprep.subr.mxu0 0.0
    %2331 = vmatpush1.msra.mxu0 0.0
    %2332 = vmatprep.subr.mxu0 0.0
    %2333 = vmatpush1.msra.mxu0 0.0
    %2334 = vmatprep.subr.mxu0 0.0
    %2335 = vmatpush1.msra.mxu0 0.0
    %2336 = vmatprep.subr.mxu0 0.0
    %2337 = vmatpush1.msra.mxu0 0.0
    %2338 = vmatprep.mubr.f32.mxu0 0.0
    %2339 = vmatmul.mubr.f32.gmra.mrb[0].mxu0 %v2272
    %v2340 = vpop.f32.mrb[0].mxu0
    %v2341 = vadd.f32 %v1158, %v2340
    %v2342 = vpop.f32.mrb[0].mxu0
    %2343 = vdwg.mxu0
    %v2344 = vadd.f32 %v2341, %v2098
    %v2345 = vxor.u32 %v2344, 2147483648
    %v2346 = vmul.f32 %v2345, 1.442695
    %v2347 = vpow.pop %v2346
    %v2348 = vadd.f32 %v2347, 1.0
    %v2349 = vrcp.pop %v2348
    %v2350 = vmul.f32 1.0, %v2349
    %2351 = vrot.lane.b32.xlu0 %v2098, 64
    %v2352 = vpop.permute.xlu0 %2351
    %v2354 = vmul.f32 %v2350, %v2352
    %2356 = vrot.lane.b32.xlu0 %v2354, 64
    %v2357 = vpop.permute.xlu0 %2356
    %v2359 = vadd.f32 %v2341, %v2357
    %v2360 = vtanh.pop %v2359
    %v2361 = vsub.f32 1.0, %v2350
    %2363 = vrot.lane.b32.xlu0 %v2360, 96
    %v2364 = vpop.permute.xlu0 %2363
    %v2366 = vmul.f32 %v2361, %v2364
    %v2367 = vmul.f32 %v2350, %v1819
    %v2368 = vadd.f32 %v2366, %v2367
    %2370 = vrot.lane.b32.xlu0 %v2368, 96
    %v2371 = vpop.permute.xlu0 %2370
    %v2372 = vsel %vm135, %v2371, 0
    %2374 = vmatprep.subr.mxu0 0.0
    %2375 = vmatpush1.msra.mxu0 %v1259
    %2376 = vmatprep.subr.mxu0 0.0
    %2377 = vmatpush1.msra.mxu0 %v1260
    %2378 = vmatprep.subr.mxu0 0.0
    %2379 = vmatpush1.msra.mxu0 %v1261
    %2380 = vmatprep.subr.mxu0 0.0
    %2381 = vmatpush1.msra.mxu0 %v1262
    %2382 = vmatprep.subr.mxu0 0.0
    %2383 = vmatpush1.msra.mxu0 0.0
    %2384 = vmatprep.subr.mxu0 0.0
    %2385 = vmatpush1.msra.mxu0 0.0
    %2386 = vmatprep.subr.mxu0 0.0
    %2387 = vmatpush1.msra.mxu0 0.0
    %2388 = vmatprep.subr.mxu0 0.0
    %2389 = vmatpush1.msra.mxu0 0.0
    %2390 = vmatprep.subr.mxu0 0.0
    %2391 = vmatpush1.msra.mxu0 0.0
    %2392 = vmatprep.subr.mxu0 0.0
    %2393 = vmatpush1.msra.mxu0 0.0
    %2394 = vmatprep.subr.mxu0 0.0
    %2395 = vmatpush1.msra.mxu0 0.0
    %2396 = vmatprep.subr.mxu0 0.0
    %2397 = vmatpush1.msra.mxu0 0.0
    %2398 = vmatprep.subr.mxu0 0.0
    %2399 = vmatpush1.msra.mxu0 0.0
    %2400 = vmatprep.subr.mxu0 0.0
    %2401 = vmatpush1.msra.mxu0 0.0
    %2402 = vmatprep.subr.mxu0 0.0
    %2403 = vmatpush1.msra.mxu0 0.0
    %2404 = vmatprep.subr.mxu0 0.0
    %2405 = vmatpush1.msra.mxu0 0.0
    %2406 = vmatprep.subr.mxu0 0.0
    %2407 = vmatpush1.msra.mxu0 0.0
    %2408 = vmatprep.subr.mxu0 0.0
    %2409 = vmatpush1.msra.mxu0 0.0
    %2410 = vmatprep.subr.mxu0 0.0
    %2411 = vmatpush1.msra.mxu0 0.0
    %2412 = vmatprep.subr.mxu0 0.0
    %2413 = vmatpush1.msra.mxu0 0.0
    %2414 = vmatprep.subr.mxu0 0.0
    %2415 = vmatpush1.msra.mxu0 0.0
    %2416 = vmatprep.subr.mxu0 0.0
    %2417 = vmatpush1.msra.mxu0 0.0
    %2418 = vmatprep.subr.mxu0 0.0
    %2419 = vmatpush1.msra.mxu0 0.0
    %2420 = vmatprep.subr.mxu0 0.0
    %2421 = vmatpush1.msra.mxu0 0.0
    %2422 = vmatprep.subr.mxu0 0.0
    %2423 = vmatpush1.msra.mxu0 0.0
    %2424 = vmatprep.subr.mxu0 0.0
    %2425 = vmatpush1.msra.mxu0 0.0
    %2426 = vmatprep.subr.mxu0 0.0
    %2427 = vmatpush1.msra.mxu0 0.0
    %2428 = vmatprep.subr.mxu0 0.0
    %2429 = vmatpush1.msra.mxu0 0.0
    %2430 = vmatprep.subr.mxu0 0.0
    %2431 = vmatpush1.msra.mxu0 0.0
    %2432 = vmatprep.subr.mxu0 0.0
    %2433 = vmatpush1.msra.mxu0 0.0
    %2434 = vmatprep.subr.mxu0 0.0
    %2435 = vmatpush1.msra.mxu0 0.0
    %2436 = vmatprep.subr.mxu0 0.0
    %2437 = vmatpush1.msra.mxu0 0.0
    %2438 = vmatprep.mubr.f32.mxu0 0.0
    %2439 = vmatmul.mubr.f32.gmra.mrb[0].mxu0 %v2372
    %v2440 = vpop.f32.mrb[0].mxu0
    %v2441 = vadd.f32 %v1263, %v2440
    %v2442 = vpop.f32.mrb[0].mxu0
    %2443 = vdwg.mxu0
    %v2444 = vsel %vm1339, %v2441, -inf
    %2445 = vmax.xlane.f32.xlu0 %v2444
    %v2446 = vpop.xlane.xlu0 %2445
    %v2447 = vsub.f32 %v2441, %v2446
    %v2448 = vmul.f32 %v2447, 1.442695
    %v2449 = vpow.pop %v2448
    %v2450 = vsel %vm1339, %v2449, 0.0
    %2451 = vadd.xlane.f32.xlu0 %v2450
    %v2452 = vpop.xlane.xlu0 %2451
    %v2453 = vlog2.pop %v2452
    %v2454 = vmul.f32 %v2453, 0.6931472
    %s2455 = sld [smem:[#allocation6 + $0x2]]
    %v2456 = vstv %s2455
    %vm2457 = vcmp.eq.s32.totalorder %v895, %v2456
    %v2458 = vsel %vm2457, %v2447, 0.0
    %v2459 = vsel %vm1339, %v2458, 0.0
    %2460 = vadd.xlane.f32.xlu0 %v2459
    %v2461 = vpop.xlane.xlu0 %2460
    %v2462 = vrot.slane %v2461, 4
    %v2463 = vadd.f32 %v2461, %v2462
    %v2464 = vrot.slane %v2463, 2
    %v2465 = vadd.f32 %v2463, %v2464
    %v2466 = vrot.slane %v2465, 1
    %v2467 = vadd.f32 %v2465, %v2466
    %s2468 = vtos %v2467
    %v2469 = vadd.f32 %v2454, 0.0
    %s2470 = vtos %v2469
    %s2471 = ssub.f32 %s2470, %s2468
    %s2472 = smul.f32 %s1954, %s2471
    %s2473 = sadd.f32 %s1924, %s2472
    %vm2474 = vcmp.eq.f32.partialorder %v2447, 0.0
    %v2475 = vsel %vm2474, %v895, 18
    %v2476 = vsel %vm1339, %v2475, 2147483647
    %v2477 = vand.u32 %v2476, 65535
    %v2478 = vshra.s32 %v2476, 16
    %v2479 = vcvt.s32.f32 %v2477
    %v2480 = vcvt.s32.f32 %v2478
    %2481 = vmin.xlane.f32.xlu0 %v2480
    %v2482 = vpop.xlane.xlu0 %2481
    %vm2483 = vcmp.eq.f32.partialorder %v2480, %v2482
    %v2484 = vsel %vm2483, %v2479, inf
    %2485 = vmin.xlane.f32.xlu0 %v2484
    %v2486 = vpop.xlane.xlu0 %2485
    %v2487 = vcvt.f32.s32 %v2486
    %v2488 = vcvt.f32.s32 %v2482
    %v2489 = vshll.u32 %v2488, 16
    %v2490 = vadd.s32 %v2489, %v2487
    %v2491 = vrot.slane %v2490, 4
    %vm2492 = vcmp.lt.s32.totalorder %v2490, %v2491
    %v2493 = vsel %vm2492, %v2490, %v2491
    %v2494 = vrot.slane %v2493, 2
    %vm2495 = vcmp.lt.s32.totalorder %v2493, %v2494
    %v2496 = vsel %vm2495, %v2493, %v2494
    %v2497 = vrot.slane %v2496, 1
    %vm2498 = vcmp.lt.s32.totalorder %v2496, %v2497
    %v2499 = vsel %vm2498, %v2496, %v2497
    %s2500 = vtos %v2499
    %p2501 = scmp.eq.s32.totalorder %s2500, 1
    %s2502 = scalar_select %p2501, 0.0, 1.0
    %s2503 = smul.f32 %s1954, %s2502
    %v2504 = vstv %s2500
    %vm2505 = vcmp.eq.s32.totalorder %v895, %v2504
    %v2506 = vsel %vm2505, 1.0, 0.0
    %v2508 = vsel %vm1404, %v2506, 0
    %2510 = vmatprep.subr.mxu0 0.0
    %2511 = vmatpush1.msra.mxu0 %v1401
    %2512 = vmatprep.subr.mxu0 0.0
    %2513 = vmatpush1.msra.mxu0 %v1402
    %2514 = vmatprep.subr.mxu0 0.0
    %2515 = vmatpush1.msra.mxu0 %v1410
    %2516 = vmatprep.subr.mxu0 0.0
    %2517 = vmatpush1.msra.mxu0 0.0
    %2518 = vmatprep.subr.mxu0 0.0
    %2519 = vmatpush1.msra.mxu0 0.0
    %2520 = vmatprep.subr.mxu0 0.0
    %2521 = vmatpush1.msra.mxu0 0.0
    %2522 = vmatprep.subr.mxu0 0.0
    %2523 = vmatpush1.msra.mxu0 0.0
    %2524 = vmatprep.subr.mxu0 0.0
    %2525 = vmatpush1.msra.mxu0 0.0
    %2526 = vmatprep.subr.mxu0 0.0
    %2527 = vmatpush1.msra.mxu0 0.0
    %2528 = vmatprep.subr.mxu0 0.0
    %2529 = vmatpush1.msra.mxu0 0.0
    %2530 = vmatprep.subr.mxu0 0.0
    %2531 = vmatpush1.msra.mxu0 0.0
    %2532 = vmatprep.subr.mxu0 0.0
    %2533 = vmatpush1.msra.mxu0 0.0
    %2534 = vmatprep.subr.mxu0 0.0
    %2535 = vmatpush1.msra.mxu0 0.0
    %2536 = vmatprep.subr.mxu0 0.0
    %2537 = vmatpush1.msra.mxu0 0.0
    %2538 = vmatprep.subr.mxu0 0.0
    %2539 = vmatpush1.msra.mxu0 0.0
    %2540 = vmatprep.subr.mxu0 0.0
    %2541 = vmatpush1.msra.mxu0 0.0
    %2542 = vmatprep.subr.mxu0 0.0
    %2543 = vmatpush1.msra.mxu0 0.0
    %2544 = vmatprep.subr.mxu0 0.0
    %2545 = vmatpush1.msra.mxu0 0.0
    %2546 = vmatprep.subr.mxu0 0.0
    %2547 = vmatpush1.msra.mxu0 0.0
    %2548 = vmatprep.subr.mxu0 0.0
    %2549 = vmatpush1.msra.mxu0 0.0
    %2550 = vmatprep.subr.mxu0 0.0
    %2551 = vmatpush1.msra.mxu0 0.0
    %2552 = vmatprep.subr.mxu0 0.0
    %2553 = vmatpush1.msra.mxu0 0.0
    %2554 = vmatprep.subr.mxu0 0.0
    %2555 = vmatpush1.msra.mxu0 0.0
    %2556 = vmatprep.subr.mxu0 0.0
    %2557 = vmatpush1.msra.mxu0 0.0
    %2558 = vmatprep.subr.mxu0 0.0
    %2559 = vmatpush1.msra.mxu0 0.0
    %2560 = vmatprep.subr.mxu0 0.0
    %2561 = vmatpush1.msra.mxu0 0.0
    %2562 = vmatprep.subr.mxu0 0.0
    %2563 = vmatpush1.msra.mxu0 0.0
    %2564 = vmatprep.subr.mxu0 0.0
    %2565 = vmatpush1.msra.mxu0 0.0
    %2566 = vmatprep.subr.mxu0 0.0
    %2567 = vmatpush1.msra.mxu0 0.0
    %2568 = vmatprep.subr.mxu0 0.0
    %2569 = vmatpush1.msra.mxu0 0.0
    %2570 = vmatprep.subr.mxu0 0.0
    %2571 = vmatpush1.msra.mxu0 0.0
    %2572 = vmatprep.subr.mxu0 0.0
    %2573 = vmatpush1.msra.mxu0 0.0
    %2574 = vmatprep.mubr.f32.mxu0 0.0
    %2575 = vmatmul.mubr.f32.gmra.mrb[0].mxu0 %v2508
    %v2576 = vpop.f32.mrb[0].mxu0
    %v2577 = vadd.f32 0.0, %v2576
    %v2578 = vpop.f32.mrb[0].mxu0
    %2579 = vdwg.mxu0
    %2580 = vmatprep.subr.mxu0 0.0
    %2581 = vmatpush1.msra.mxu0 %v897
    %2582 = vmatprep.subr.mxu0 0.0
    %2583 = vmatpush1.msra.mxu0 %v898
    %2584 = vmatprep.subr.mxu0 0.0
    %2585 = vmatpush1.msra.mxu0 %v899
    %2586 = vmatprep.subr.mxu0 0.0
    %2587 = vmatpush1.msra.mxu0 %v900
    %2588 = vmatprep.subr.mxu0 0.0
    %2589 = vmatpush1.msra.mxu0 0.0
    %2590 = vmatprep.subr.mxu0 0.0
    %2591 = vmatpush1.msra.mxu0 0.0
    %2592 = vmatprep.subr.mxu0 0.0
    %2593 = vmatpush1.msra.mxu0 0.0
    %2594 = vmatprep.subr.mxu0 0.0
    %2595 = vmatpush1.msra.mxu0 0.0
    %2596 = vmatprep.subr.mxu0 0.0
    %2597 = vmatpush1.msra.mxu0 0.0
    %2598 = vmatprep.subr.mxu0 0.0
    %2599 = vmatpush1.msra.mxu0 0.0
    %2600 = vmatprep.subr.mxu0 0.0
    %2601 = vmatpush1.msra.mxu0 0.0
    %2602 = vmatprep.subr.mxu0 0.0
    %2603 = vmatpush1.msra.mxu0 0.0
    %2604 = vmatprep.subr.mxu0 0.0
    %2605 = vmatpush1.msra.mxu0 0.0
    %2606 = vmatprep.subr.mxu0 0.0
    %2607 = vmatpush1.msra.mxu0 0.0
    %2608 = vmatprep.subr.mxu0 0.0
    %2609 = vmatpush1.msra.mxu0 0.0
    %2610 = vmatprep.subr.mxu0 0.0
    %2611 = vmatpush1.msra.mxu0 0.0
    %2612 = vmatprep.subr.mxu0 0.0
    %2613 = vmatpush1.msra.mxu0 0.0
    %2614 = vmatprep.subr.mxu0 0.0
    %2615 = vmatpush1.msra.mxu0 0.0
    %2616 = vmatprep.subr.mxu0 0.0
    %2617 = vmatpush1.msra.mxu0 0.0
    %2618 = vmatprep.subr.mxu0 0.0
    %2619 = vmatpush1.msra.mxu0 0.0
    %2620 = vmatprep.subr.mxu0 0.0
    %2621 = vmatpush1.msra.mxu0 0.0
    %2622 = vmatprep.subr.mxu0 0.0
    %2623 = vmatpush1.msra.mxu0 0.0
    %2624 = vmatprep.subr.mxu0 0.0
    %2625 = vmatpush1.msra.mxu0 0.0
    %2626 = vmatprep.subr.mxu0 0.0
    %2627 = vmatpush1.msra.mxu0 0.0
    %2628 = vmatprep.subr.mxu0 0.0
    %2629 = vmatpush1.msra.mxu0 0.0
    %2630 = vmatprep.subr.mxu0 0.0
    %2631 = vmatpush1.msra.mxu0 0.0
    %2632 = vmatprep.subr.mxu0 0.0
    %2633 = vmatpush1.msra.mxu0 0.0
    %2634 = vmatprep.subr.mxu0 0.0
    %2635 = vmatpush1.msra.mxu0 0.0
    %2636 = vmatprep.subr.mxu0 0.0
    %2637 = vmatpush1.msra.mxu0 0.0
    %2638 = vmatprep.subr.mxu0 0.0
    %2639 = vmatpush1.msra.mxu0 0.0
    %2640 = vmatprep.subr.mxu0 0.0
    %2641 = vmatpush1.msra.mxu0 0.0
    %2642 = vmatprep.subr.mxu0 0.0
    %2643 = vmatpush1.msra.mxu0 0.0
    %2644 = vmatprep.mubr.f32.mxu0 0.0
    %2645 = vmatmul.mubr.f32.gmra.mrb[0].mxu0 %v2372
    %v2646 = vpop.f32.mrb[0].mxu0
    %v2647 = vadd.f32 %v901, %v2646
    %v2648 = vpop.f32.mrb[0].mxu0
    %2649 = vdwg.mxu0
    %2651 = vrot.lane.b32.xlu0 %v2647, 32
    %v2652 = vpop.permute.xlu0 %2651
    %v2654 = vadd.f32 %v2577, %v2652
    %v2655 = vsel %vm981, %v2654, -inf
    %2656 = vmax.xlane.f32.xlu0 %v2655
    %v2657 = vpop.xlane.xlu0 %2656
    %v2658 = vsub.f32 %v2654, %v2657
    %v2659 = vmul.f32 %v2658, 1.442695
    %v2660 = vpow.pop %v2659
    %v2661 = vsel %vm981, %v2660, 0.0
    %2662 = vadd.xlane.f32.xlu0 %v2661
    %v2663 = vpop.xlane.xlu0 %2662
    %v2664 = vrcp.pop %v2663
    %v2665 = vmul.f32 %v2660, %v2664
    %v2667 = vsel %vm997, %v2665, 0
    %2669 = vmatprep.subr.mxu0 0.0
    %2670 = vmatpush1.msra.mxu0 %v995
    %2671 = vmatprep.subr.mxu0 0.0
    %2672 = vmatpush1.msra.mxu0 0.0
    %2673 = vmatprep.subr.mxu0 0.0
    %2674 = vmatpush1.msra.mxu0 0.0
    %2675 = vmatprep.subr.mxu0 0.0
    %2676 = vmatpush1.msra.mxu0 0.0
    %2677 = vmatprep.subr.mxu0 0.0
    %2678 = vmatpush1.msra.mxu0 0.0
    %2679 = vmatprep.subr.mxu0 0.0
    %2680 = vmatpush1.msra.mxu0 0.0
    %2681 = vmatprep.subr.mxu0 0.0
    %2682 = vmatpush1.msra.mxu0 0.0
    %2683 = vmatprep.subr.mxu0 0.0
    %2684 = vmatpush1.msra.mxu0 0.0
    %2685 = vmatprep.subr.mxu0 0.0
    %2686 = vmatpush1.msra.mxu0 0.0
    %2687 = vmatprep.subr.mxu0 0.0
    %2688 = vmatpush1.msra.mxu0 0.0
    %2689 = vmatprep.subr.mxu0 0.0
    %2690 = vmatpush1.msra.mxu0 0.0
    %2691 = vmatprep.subr.mxu0 0.0
    %2692 = vmatpush1.msra.mxu0 0.0
    %2693 = vmatprep.subr.mxu0 0.0
    %2694 = vmatpush1.msra.mxu0 0.0
    %2695 = vmatprep.subr.mxu0 0.0
    %2696 = vmatpush1.msra.mxu0 0.0
    %2697 = vmatprep.subr.mxu0 0.0
    %2698 = vmatpush1.msra.mxu0 0.0
    %2699 = vmatprep.subr.mxu0 0.0
    %2700 = vmatpush1.msra.mxu0 0.0
    %2701 = vmatprep.subr.mxu0 0.0
    %2702 = vmatpush1.msra.mxu0 0.0
    %2703 = vmatprep.subr.mxu0 0.0
    %2704 = vmatpush1.msra.mxu0 0.0
    %2705 = vmatprep.subr.mxu0 0.0
    %2706 = vmatpush1.msra.mxu0 0.0
    %2707 = vmatprep.subr.mxu0 0.0
    %2708 = vmatpush1.msra.mxu0 0.0
    %2709 = vmatprep.subr.mxu0 0.0
    %2710 = vmatpush1.msra.mxu0 0.0
    %2711 = vmatprep.subr.mxu0 0.0
    %2712 = vmatpush1.msra.mxu0 0.0
    %2713 = vmatprep.subr.mxu0 0.0
    %2714 = vmatpush1.msra.mxu0 0.0
    %2715 = vmatprep.subr.mxu0 0.0
    %2716 = vmatpush1.msra.mxu0 0.0
    %2717 = vmatprep.subr.mxu0 0.0
    %2718 = vmatpush1.msra.mxu0 0.0
    %2719 = vmatprep.subr.mxu0 0.0
    %2720 = vmatpush1.msra.mxu0 0.0
    %2721 = vmatprep.subr.mxu0 0.0
    %2722 = vmatpush1.msra.mxu0 0.0
    %2723 = vmatprep.subr.mxu0 0.0
    %2724 = vmatpush1.msra.mxu0 0.0
    %2725 = vmatprep.subr.mxu0 0.0
    %2726 = vmatpush1.msra.mxu0 0.0
    %2727 = vmatprep.subr.mxu0 0.0
    %2728 = vmatpush1.msra.mxu0 0.0
    %2729 = vmatprep.subr.mxu0 0.0
    %2730 = vmatpush1.msra.mxu0 0.0
    %2731 = vmatprep.subr.mxu0 0.0
    %2732 = vmatpush1.msra.mxu0 0.0
    %2733 = vmatprep.mubr.f32.mxu0 0.0
    %2734 = vmatmul.mubr.f32.gmra.mrb[0].mxu0 %v2667
    %v2735 = vpop.f32.mrb[0].mxu0
    %v2736 = vadd.f32 0.0, %v2735
    %v2737 = vpop.f32.mrb[0].mxu0
    %2738 = vdwg.mxu0
    %v2740 = vsel %vm135, %v2736, 0
    %2742 = vmatprep.subr.mxu0 0.0
    %2743 = vmatpush1.msra.mxu0 %v1071
    %2744 = vmatprep.subr.mxu0 0.0
    %2745 = vmatpush1.msra.mxu0 %v1072
    %2746 = vmatprep.subr.mxu0 0.0
    %2747 = vmatpush1.msra.mxu0 %v1073
    %2748 = vmatprep.subr.mxu0 0.0
    %2749 = vmatpush1.msra.mxu0 %v1074
    %2750 = vmatprep.subr.mxu0 0.0
    %2751 = vmatpush1.msra.mxu0 0.0
    %2752 = vmatprep.subr.mxu0 0.0
    %2753 = vmatpush1.msra.mxu0 0.0
    %2754 = vmatprep.subr.mxu0 0.0
    %2755 = vmatpush1.msra.mxu0 0.0
    %2756 = vmatprep.subr.mxu0 0.0
    %2757 = vmatpush1.msra.mxu0 0.0
    %2758 = vmatprep.subr.mxu0 0.0
    %2759 = vmatpush1.msra.mxu0 0.0
    %2760 = vmatprep.subr.mxu0 0.0
    %2761 = vmatpush1.msra.mxu0 0.0
    %2762 = vmatprep.subr.mxu0 0.0
    %2763 = vmatpush1.msra.mxu0 0.0
    %2764 = vmatprep.subr.mxu0 0.0
    %2765 = vmatpush1.msra.mxu0 0.0
    %2766 = vmatprep.subr.mxu0 0.0
    %2767 = vmatpush1.msra.mxu0 0.0
    %2768 = vmatprep.subr.mxu0 0.0
    %2769 = vmatpush1.msra.mxu0 0.0
    %2770 = vmatprep.subr.mxu0 0.0
    %2771 = vmatpush1.msra.mxu0 0.0
    %2772 = vmatprep.subr.mxu0 0.0
    %2773 = vmatpush1.msra.mxu0 0.0
    %2774 = vmatprep.subr.mxu0 0.0
    %2775 = vmatpush1.msra.mxu0 0.0
    %2776 = vmatprep.subr.mxu0 0.0
    %2777 = vmatpush1.msra.mxu0 0.0
    %2778 = vmatprep.subr.mxu0 0.0
    %2779 = vmatpush1.msra.mxu0 0.0
    %2780 = vmatprep.subr.mxu0 0.0
    %2781 = vmatpush1.msra.mxu0 0.0
    %2782 = vmatprep.subr.mxu0 0.0
    %2783 = vmatpush1.msra.mxu0 0.0
    %2784 = vmatprep.subr.mxu0 0.0
    %2785 = vmatpush1.msra.mxu0 0.0
    %2786 = vmatprep.subr.mxu0 0.0
    %2787 = vmatpush1.msra.mxu0 0.0
    %2788 = vmatprep.subr.mxu0 0.0
    %2789 = vmatpush1.msra.mxu0 0.0
    %2790 = vmatprep.subr.mxu0 0.0
    %2791 = vmatpush1.msra.mxu0 0.0
    %2792 = vmatprep.subr.mxu0 0.0
    %2793 = vmatpush1.msra.mxu0 0.0
    %2794 = vmatprep.subr.mxu0 0.0
    %2795 = vmatpush1.msra.mxu0 0.0
    %2796 = vmatprep.subr.mxu0 0.0
    %2797 = vmatpush1.msra.mxu0 0.0
    %2798 = vmatprep.subr.mxu0 0.0
    %2799 = vmatpush1.msra.mxu0 0.0
    %2800 = vmatprep.subr.mxu0 0.0
    %2801 = vmatpush1.msra.mxu0 0.0
    %2802 = vmatprep.subr.mxu0 0.0
    %2803 = vmatpush1.msra.mxu0 0.0
    %2804 = vmatprep.subr.mxu0 0.0
    %2805 = vmatpush1.msra.mxu0 0.0
    %2806 = vmatprep.mubr.f32.mxu0 0.0
    %2807 = vmatmul.mubr.f32.gmra.mrb[0].mxu0 %v2740
    %v2808 = vpop.f32.mrb[0].mxu0
    %v2809 = vadd.f32 0.0, %v2808
    %v2810 = vpop.f32.mrb[0].mxu0
    %2811 = vdwg.mxu0
    %2813 = vrot.lane.b32.xlu0 %v2809, 8
    %v2814 = vpop.permute.xlu0 %2813
    %v2816 = vadd.f32 %v2577, %v2814
    %v2817 = vmax.f32 %v2816, 0.0
    %2819 = vrot.lane.b32.xlu0 %v2817, 120
    %v2820 = vpop.permute.xlu0 %2819
    %v2821 = vsel %vm135, %v2820, 0
    %2823 = vmatprep.subr.mxu0 0.0
    %2824 = vmatpush1.msra.mxu0 %v1154
    %2825 = vmatprep.subr.mxu0 0.0
    %2826 = vmatpush1.msra.mxu0 %v1155
    %2827 = vmatprep.subr.mxu0 0.0
    %2828 = vmatpush1.msra.mxu0 %v1156
    %2829 = vmatprep.subr.mxu0 0.0
    %2830 = vmatpush1.msra.mxu0 %v1157
    %2831 = vmatprep.subr.mxu0 0.0
    %2832 = vmatpush1.msra.mxu0 0.0
    %2833 = vmatprep.subr.mxu0 0.0
    %2834 = vmatpush1.msra.mxu0 0.0
    %2835 = vmatprep.subr.mxu0 0.0
    %2836 = vmatpush1.msra.mxu0 0.0
    %2837 = vmatprep.subr.mxu0 0.0
    %2838 = vmatpush1.msra.mxu0 0.0
    %2839 = vmatprep.subr.mxu0 0.0
    %2840 = vmatpush1.msra.mxu0 0.0
    %2841 = vmatprep.subr.mxu0 0.0
    %2842 = vmatpush1.msra.mxu0 0.0
    %2843 = vmatprep.subr.mxu0 0.0
    %2844 = vmatpush1.msra.mxu0 0.0
    %2845 = vmatprep.subr.mxu0 0.0
    %2846 = vmatpush1.msra.mxu0 0.0
    %2847 = vmatprep.subr.mxu0 0.0
    %2848 = vmatpush1.msra.mxu0 0.0
    %2849 = vmatprep.subr.mxu0 0.0
    %2850 = vmatpush1.msra.mxu0 0.0
    %2851 = vmatprep.subr.mxu0 0.0
    %2852 = vmatpush1.msra.mxu0 0.0
    %2853 = vmatprep.subr.mxu0 0.0
    %2854 = vmatpush1.msra.mxu0 0.0
    %2855 = vmatprep.subr.mxu0 0.0
    %2856 = vmatpush1.msra.mxu0 0.0
    %2857 = vmatprep.subr.mxu0 0.0
    %2858 = vmatpush1.msra.mxu0 0.0
    %2859 = vmatprep.subr.mxu0 0.0
    %2860 = vmatpush1.msra.mxu0 0.0
    %2861 = vmatprep.subr.mxu0 0.0
    %2862 = vmatpush1.msra.mxu0 0.0
    %2863 = vmatprep.subr.mxu0 0.0
    %2864 = vmatpush1.msra.mxu0 0.0
    %2865 = vmatprep.subr.mxu0 0.0
    %2866 = vmatpush1.msra.mxu0 0.0
    %2867 = vmatprep.subr.mxu0 0.0
    %2868 = vmatpush1.msra.mxu0 0.0
    %2869 = vmatprep.subr.mxu0 0.0
    %2870 = vmatpush1.msra.mxu0 0.0
    %2871 = vmatprep.subr.mxu0 0.0
    %2872 = vmatpush1.msra.mxu0 0.0
    %2873 = vmatprep.subr.mxu0 0.0
    %2874 = vmatpush1.msra.mxu0 0.0
    %2875 = vmatprep.subr.mxu0 0.0
    %2876 = vmatpush1.msra.mxu0 0.0
    %2877 = vmatprep.subr.mxu0 0.0
    %2878 = vmatpush1.msra.mxu0 0.0
    %2879 = vmatprep.subr.mxu0 0.0
    %2880 = vmatpush1.msra.mxu0 0.0
    %2881 = vmatprep.subr.mxu0 0.0
    %2882 = vmatpush1.msra.mxu0 0.0
    %2883 = vmatprep.subr.mxu0 0.0
    %2884 = vmatpush1.msra.mxu0 0.0
    %2885 = vmatprep.subr.mxu0 0.0
    %2886 = vmatpush1.msra.mxu0 0.0
    %2887 = vmatprep.mubr.f32.mxu0 0.0
    %2888 = vmatmul.mubr.f32.gmra.mrb[0].mxu0 %v2821
    %v2889 = vpop.f32.mrb[0].mxu0
    %v2890 = vadd.f32 %v1158, %v2889
    %v2891 = vpop.f32.mrb[0].mxu0
    %2892 = vdwg.mxu0
    %v2893 = vadd.f32 %v2890, %v2647
    %v2894 = vxor.u32 %v2893, 2147483648
    %v2895 = vmul.f32 %v2894, 1.442695
    %v2896 = vpow.pop %v2895
    %v2897 = vadd.f32 %v2896, 1.0
    %v2898 = vrcp.pop %v2897
    %v2899 = vmul.f32 1.0, %v2898
    %2900 = vrot.lane.b32.xlu0 %v2647, 64
    %v2901 = vpop.permute.xlu0 %2900
    %v2903 = vmul.f32 %v2899, %v2901
    %2905 = vrot.lane.b32.xlu0 %v2903, 64
    %v2906 = vpop.permute.xlu0 %2905
    %v2908 = vadd.f32 %v2890, %v2906
    %v2909 = vtanh.pop %v2908
    %v2910 = vsub.f32 1.0, %v2899
    %2912 = vrot.lane.b32.xlu0 %v2909, 96
    %v2913 = vpop.permute.xlu0 %2912
    %v2915 = vmul.f32 %v2910, %v2913
    %v2916 = vmul.f32 %v2899, %v2368
    %v2917 = vadd.f32 %v2915, %v2916
    %2919 = vrot.lane.b32.xlu0 %v2917, 96
    %v2920 = vpop.permute.xlu0 %2919
    %v2921 = vsel %vm135, %v2920, 0
    %2923 = vmatprep.subr.mxu0 0.0
    %2924 = vmatpush1.msra.mxu0 %v1259
    %2925 = vmatprep.subr.mxu0 0.0
    %2926 = vmatpush1.msra.mxu0 %v1260
    %2927 = vmatprep.subr.mxu0 0.0
    %2928 = vmatpush1.msra.mxu0 %v1261
    %2929 = vmatprep.subr.mxu0 0.0
    %2930 = vmatpush1.msra.mxu0 %v1262
    %2931 = vmatprep.subr.mxu0 0.0
    %2932 = vmatpush1.msra.mxu0 0.0
    %2933 = vmatprep.subr.mxu0 0.0
    %2934 = vmatpush1.msra.mxu0 0.0
    %2935 = vmatprep.subr.mxu0 0.0
    %2936 = vmatpush1.msra.mxu0 0.0
    %2937 = vmatprep.subr.mxu0 0.0
    %2938 = vmatpush1.msra.mxu0 0.0
    %2939 = vmatprep.subr.mxu0 0.0
    %2940 = vmatpush1.msra.mxu0 0.0
    %2941 = vmatprep.subr.mxu0 0.0
    %2942 = vmatpush1.msra.mxu0 0.0
    %2943 = vmatprep.subr.mxu0 0.0
    %2944 = vmatpush1.msra.mxu0 0.0
    %2945 = vmatprep.subr.mxu0 0.0
    %2946 = vmatpush1.msra.mxu0 0.0
    %2947 = vmatprep.subr.mxu0 0.0
    %2948 = vmatpush1.msra.mxu0 0.0
    %2949 = vmatprep.subr.mxu0 0.0
    %2950 = vmatpush1.msra.mxu0 0.0
    %2951 = vmatprep.subr.mxu0 0.0
    %2952 = vmatpush1.msra.mxu0 0.0
    %2953 = vmatprep.subr.mxu0 0.0
    %2954 = vmatpush1.msra.mxu0 0.0
    %2955 = vmatprep.subr.mxu0 0.0
    %2956 = vmatpush1.msra.mxu0 0.0
    %2957 = vmatprep.subr.mxu0 0.0
    %2958 = vmatpush1.msra.mxu0 0.0
    %2959 = vmatprep.subr.mxu0 0.0
    %2960 = vmatpush1.msra.mxu0 0.0
    %2961 = vmatprep.subr.mxu0 0.0
    %2962 = vmatpush1.msra.mxu0 0.0
    %2963 = vmatprep.subr.mxu0 0.0
    %2964 = vmatpush1.msra.mxu0 0.0
    %2965 = vmatprep.subr.mxu0 0.0
    %2966 = vmatpush1.msra.mxu0 0.0
    %2967 = vmatprep.subr.mxu0 0.0
    %2968 = vmatpush1.msra.mxu0 0.0
    %2969 = vmatprep.subr.mxu0 0.0
    %2970 = vmatpush1.msra.mxu0 0.0
    %2971 = vmatprep.subr.mxu0 0.0
    %2972 = vmatpush1.msra.mxu0 0.0
    %2973 = vmatprep.subr.mxu0 0.0
    %2974 = vmatpush1.msra.mxu0 0.0
    %2975 = vmatprep.subr.mxu0 0.0
    %2976 = vmatpush1.msra.mxu0 0.0
    %2977 = vmatprep.subr.mxu0 0.0
    %2978 = vmatpush1.msra.mxu0 0.0
    %2979 = vmatprep.subr.mxu0 0.0
    %2980 = vmatpush1.msra.mxu0 0.0
    %2981 = vmatprep.subr.mxu0 0.0
    %2982 = vmatpush1.msra.mxu0 0.0
    %2983 = vmatprep.subr.mxu0 0.0
    %2984 = vmatpush1.msra.mxu0 0.0
    %2985 = vmatprep.subr.mxu0 0.0
    %2986 = vmatpush1.msra.mxu0 0.0
    %2987 = vmatprep.mubr.f32.mxu0 0.0
    %2988 = vmatmul.mubr.f32.gmra.mrb[0].mxu0 %v2921
    %v2989 = vpop.f32.mrb[0].mxu0
    %v2990 = vadd.f32 %v1263, %v2989
    %v2991 = vpop.f32.mrb[0].mxu0
    %2992 = vdwg.mxu0
    %v2993 = vsel %vm1339, %v2990, -inf
    %2994 = vmax.xlane.f32.xlu0 %v2993
    %v2995 = vpop.xlane.xlu0 %2994
    %v2996 = vsub.f32 %v2990, %v2995
    %v2997 = vmul.f32 %v2996, 1.442695
    %v2998 = vpow.pop %v2997
    %v2999 = vsel %vm1339, %v2998, 0.0
    %3000 = vadd.xlane.f32.xlu0 %v2999
    %v3001 = vpop.xlane.xlu0 %3000
    %v3002 = vlog2.pop %v3001
    %v3003 = vmul.f32 %v3002, 0.6931472
    %s3004 = sld [smem:[#allocation6 + $0x3]]
    %v3005 = vstv %s3004
    %vm3006 = vcmp.eq.s32.totalorder %v895, %v3005
    %v3007 = vsel %vm3006, %v2996, 0.0
    %v3008 = vsel %vm1339, %v3007, 0.0
    %3009 = vadd.xlane.f32.xlu0 %v3008
    %v3010 = vpop.xlane.xlu0 %3009
    %v3011 = vrot.slane %v3010, 4
    %v3012 = vadd.f32 %v3010, %v3011
    %v3013 = vrot.slane %v3012, 2
    %v3014 = vadd.f32 %v3012, %v3013
    %v3015 = vrot.slane %v3014, 1
    %v3016 = vadd.f32 %v3014, %v3015
    %s3017 = vtos %v3016
    %v3018 = vadd.f32 %v3003, 0.0
    %s3019 = vtos %v3018
    %s3020 = ssub.f32 %s3019, %s3017
    %s3021 = smul.f32 %s2503, %s3020
    %s3022 = sadd.f32 %s2473, %s3021
    %vm3023 = vcmp.eq.f32.partialorder %v2996, 0.0
    %v3024 = vsel %vm3023, %v895, 18
    %v3025 = vsel %vm1339, %v3024, 2147483647
    %v3026 = vand.u32 %v3025, 65535
    %v3027 = vshra.s32 %v3025, 16
    %v3028 = vcvt.s32.f32 %v3026
    %v3029 = vcvt.s32.f32 %v3027
    %3030 = vmin.xlane.f32.xlu0 %v3029
    %v3031 = vpop.xlane.xlu0 %3030
    %vm3032 = vcmp.eq.f32.partialorder %v3029, %v3031
    %v3033 = vsel %vm3032, %v3028, inf
    %3034 = vmin.xlane.f32.xlu0 %v3033
    %v3035 = vpop.xlane.xlu0 %3034
    %v3036 = vcvt.f32.s32 %v3035
    %v3037 = vcvt.f32.s32 %v3031
    %v3038 = vshll.u32 %v3037, 16
    %v3039 = vadd.s32 %v3038, %v3036
    %v3040 = vrot.slane %v3039, 4
    %vm3041 = vcmp.lt.s32.totalorder %v3039, %v3040
    %v3042 = vsel %vm3041, %v3039, %v3040
    %v3043 = vrot.slane %v3042, 2
    %vm3044 = vcmp.lt.s32.totalorder %v3042, %v3043
    %v3045 = vsel %vm3044, %v3042, %v3043
    %v3046 = vrot.slane %v3045, 1
    %vm3047 = vcmp.lt.s32.totalorder %v3045, %v3046
    %v3048 = vsel %vm3047, %v3045, %v3046
    %s3049 = vtos %v3048
    %p3050 = scmp.eq.s32.totalorder %s3049, 1
    %s3051 = scalar_select %p3050, 0.0, 1.0
    %s3052 = smul.f32 %s2503, %s3051
    %v3053 = vstv %s3049
    %vm3054 = vcmp.eq.s32.totalorder %v895, %v3053
    %v3055 = vsel %vm3054, 1.0, 0.0
    %v3057 = vsel %vm1404, %v3055, 0
    %3059 = vmatprep.subr.mxu0 0.0
    %3060 = vmatpush1.msra.mxu0 %v1401
    %3061 = vmatprep.subr.mxu0 0.0
    %3062 = vmatpush1.msra.mxu0 %v1402
    %3063 = vmatprep.subr.mxu0 0.0
    %3064 = vmatpush1.msra.mxu0 %v1410
    %3065 = vmatprep.subr.mxu0 0.0
    %3066 = vmatpush1.msra.mxu0 0.0
    %3067 = vmatprep.subr.mxu0 0.0
    %3068 = vmatpush1.msra.mxu0 0.0
    %3069 = vmatprep.subr.mxu0 0.0
    %3070 = vmatpush1.msra.mxu0 0.0
    %3071 = vmatprep.subr.mxu0 0.0
    %3072 = vmatpush1.msra.mxu0 0.0
    %3073 = vmatprep.subr.mxu0 0.0
    %3074 = vmatpush1.msra.mxu0 0.0
    %3075 = vmatprep.subr.mxu0 0.0
    %3076 = vmatpush1.msra.mxu0 0.0
    %3077 = vmatprep.subr.mxu0 0.0
    %3078 = vmatpush1.msra.mxu0 0.0
    %3079 = vmatprep.subr.mxu0 0.0
    %3080 = vmatpush1.msra.mxu0 0.0
    %3081 = vmatprep.subr.mxu0 0.0
    %3082 = vmatpush1.msra.mxu0 0.0
    %3083 = vmatprep.subr.mxu0 0.0
    %3084 = vmatpush1.msra.mxu0 0.0
    %3085 = vmatprep.subr.mxu0 0.0
    %3086 = vmatpush1.msra.mxu0 0.0
    %3087 = vmatprep.subr.mxu0 0.0
    %3088 = vmatpush1.msra.mxu0 0.0
    %3089 = vmatprep.subr.mxu0 0.0
    %3090 = vmatpush1.msra.mxu0 0.0
    %3091 = vmatprep.subr.mxu0 0.0
    %3092 = vmatpush1.msra.mxu0 0.0
    %3093 = vmatprep.subr.mxu0 0.0
    %3094 = vmatpush1.msra.mxu0 0.0
    %3095 = vmatprep.subr.mxu0 0.0
    %3096 = vmatpush1.msra.mxu0 0.0
    %3097 = vmatprep.subr.mxu0 0.0
    %3098 = vmatpush1.msra.mxu0 0.0
    %3099 = vmatprep.subr.mxu0 0.0
    %3100 = vmatpush1.msra.mxu0 0.0
    %3101 = vmatprep.subr.mxu0 0.0
    %3102 = vmatpush1.msra.mxu0 0.0
    %3103 = vmatprep.subr.mxu0 0.0
    %3104 = vmatpush1.msra.mxu0 0.0
    %3105 = vmatprep.subr.mxu0 0.0
    %3106 = vmatpush1.msra.mxu0 0.0
    %3107 = vmatprep.subr.mxu0 0.0
    %3108 = vmatpush1.msra.mxu0 0.0
    %3109 = vmatprep.subr.mxu0 0.0
    %3110 = vmatpush1.msra.mxu0 0.0
    %3111 = vmatprep.subr.mxu0 0.0
    %3112 = vmatpush1.msra.mxu0 0.0
    %3113 = vmatprep.subr.mxu0 0.0
    %3114 = vmatpush1.msra.mxu0 0.0
    %3115 = vmatprep.subr.mxu0 0.0
    %3116 = vmatpush1.msra.mxu0 0.0
    %3117 = vmatprep.subr.mxu0 0.0
    %3118 = vmatpush1.msra.mxu0 0.0
    %3119 = vmatprep.subr.mxu0 0.0
    %3120 = vmatpush1.msra.mxu0 0.0
    %3121 = vmatprep.subr.mxu0 0.0
    %3122 = vmatpush1.msra.mxu0 0.0
    %3123 = vmatprep.mubr.f32.mxu0 0.0
    %3124 = vmatmul.mubr.f32.gmra.mrb[0].mxu0 %v3057
    %v3125 = vpop.f32.mrb[0].mxu0
    %v3126 = vadd.f32 0.0, %v3125
    %v3127 = vpop.f32.mrb[0].mxu0
    %3128 = vdwg.mxu0
    %3129 = vmatprep.subr.mxu0 0.0
    %3130 = vmatpush1.msra.mxu0 %v897
    %3131 = vmatprep.subr.mxu0 0.0
    %3132 = vmatpush1.msra.mxu0 %v898
    %3133 = vmatprep.subr.mxu0 0.0
    %3134 = vmatpush1.msra.mxu0 %v899
    %3135 = vmatprep.subr.mxu0 0.0
    %3136 = vmatpush1.msra.mxu0 %v900
    %3137 = vmatprep.subr.mxu0 0.0
    %3138 = vmatpush1.msra.mxu0 0.0
    %3139 = vmatprep.subr.mxu0 0.0
    %3140 = vmatpush1.msra.mxu0 0.0
    %3141 = vmatprep.subr.mxu0 0.0
    %3142 = vmatpush1.msra.mxu0 0.0
    %3143 = vmatprep.subr.mxu0 0.0
    %3144 = vmatpush1.msra.mxu0 0.0
    %3145 = vmatprep.subr.mxu0 0.0
    %3146 = vmatpush1.msra.mxu0 0.0
    %3147 = vmatprep.subr.mxu0 0.0
    %3148 = vmatpush1.msra.mxu0 0.0
    %3149 = vmatprep.subr.mxu0 0.0
    %3150 = vmatpush1.msra.mxu0 0.0
    %3151 = vmatprep.subr.mxu0 0.0
    %3152 = vmatpush1.msra.mxu0 0.0
    %3153 = vmatprep.subr.mxu0 0.0
    %3154 = vmatpush1.msra.mxu0 0.0
    %3155 = vmatprep.subr.mxu0 0.0
    %3156 = vmatpush1.msra.mxu0 0.0
    %3157 = vmatprep.subr.mxu0 0.0
    %3158 = vmatpush1.msra.mxu0 0.0
    %3159 = vmatprep.subr.mxu0 0.0
    %3160 = vmatpush1.msra.mxu0 0.0
    %3161 = vmatprep.subr.mxu0 0.0
    %3162 = vmatpush1.msra.mxu0 0.0
    %3163 = vmatprep.subr.mxu0 0.0
    %3164 = vmatpush1.msra.mxu0 0.0
    %3165 = vmatprep.subr.mxu0 0.0
    %3166 = vmatpush1.msra.mxu0 0.0
    %3167 = vmatprep.subr.mxu0 0.0
    %3168 = vmatpush1.msra.mxu0 0.0
    %3169 = vmatprep.subr.mxu0 0.0
    %3170 = vmatpush1.msra.mxu0 0.0
    %3171 = vmatprep.subr.mxu0 0.0
    %3172 = vmatpush1.msra.mxu0 0.0
    %3173 = vmatprep.subr.mxu0 0.0
    %3174 = vmatpush1.msra.mxu0 0.0
    %3175 = vmatprep.subr.mxu0 0.0
    %3176 = vmatpush1.msra.mxu0 0.0
    %3177 = vmatprep.subr.mxu0 0.0
    %3178 = vmatpush1.msra.mxu0 0.0
    %3179 = vmatprep.subr.mxu0 0.0
    %3180 = vmatpush1.msra.mxu0 0.0
    %3181 = vmatprep.subr.mxu0 0.0
    %3182 = vmatpush1.msra.mxu0 0.0
    %3183 = vmatprep.subr.mxu0 0.0
    %3184 = vmatpush1.msra.mxu0 0.0
    %3185 = vmatprep.subr.mxu0 0.0
    %3186 = vmatpush1.msra.mxu0 0.0
    %3187 = vmatprep.subr.mxu0 0.0
    %3188 = vmatpush1.msra.mxu0 0.0
    %3189 = vmatprep.subr.mxu0 0.0
    %3190 = vmatpush1.msra.mxu0 0.0
    %3191 = vmatprep.subr.mxu0 0.0
    %3192 = vmatpush1.msra.mxu0 0.0
    %3193 = vmatprep.mubr.f32.mxu0 0.0
    %3194 = vmatmul.mubr.f32.gmra.mrb[0].mxu0 %v2921
    %v3195 = vpop.f32.mrb[0].mxu0
    %v3196 = vadd.f32 %v901, %v3195
    %v3197 = vpop.f32.mrb[0].mxu0
    %3198 = vdwg.mxu0
    %3200 = vrot.lane.b32.xlu0 %v3196, 32
    %v3201 = vpop.permute.xlu0 %3200
    %v3203 = vadd.f32 %v3126, %v3201
    %v3204 = vsel %vm981, %v3203, -inf
    %3205 = vmax.xlane.f32.xlu0 %v3204
    %v3206 = vpop.xlane.xlu0 %3205
    %v3207 = vsub.f32 %v3203, %v3206
    %v3208 = vmul.f32 %v3207, 1.442695
    %v3209 = vpow.pop %v3208
    %v3210 = vsel %vm981, %v3209, 0.0
    %3211 = vadd.xlane.f32.xlu0 %v3210
    %v3212 = vpop.xlane.xlu0 %3211
    %v3213 = vrcp.pop %v3212
    %v3214 = vmul.f32 %v3209, %v3213
    %v3216 = vsel %vm997, %v3214, 0
    %3218 = vmatprep.subr.mxu0 0.0
    %3219 = vmatpush1.msra.mxu0 %v995
    %3220 = vmatprep.subr.mxu0 0.0
    %3221 = vmatpush1.msra.mxu0 0.0
    %3222 = vmatprep.subr.mxu0 0.0
    %3223 = vmatpush1.msra.mxu0 0.0
    %3224 = vmatprep.subr.mxu0 0.0
    %3225 = vmatpush1.msra.mxu0 0.0
    %3226 = vmatprep.subr.mxu0 0.0
    %3227 = vmatpush1.msra.mxu0 0.0
    %3228 = vmatprep.subr.mxu0 0.0
    %3229 = vmatpush1.msra.mxu0 0.0
    %3230 = vmatprep.subr.mxu0 0.0
    %3231 = vmatpush1.msra.mxu0 0.0
    %3232 = vmatprep.subr.mxu0 0.0
    %3233 = vmatpush1.msra.mxu0 0.0
    %3234 = vmatprep.subr.mxu0 0.0
    %3235 = vmatpush1.msra.mxu0 0.0
    %3236 = vmatprep.subr.mxu0 0.0
    %3237 = vmatpush1.msra.mxu0 0.0
    %3238 = vmatprep.subr.mxu0 0.0
    %3239 = vmatpush1.msra.mxu0 0.0
    %3240 = vmatprep.subr.mxu0 0.0
    %3241 = vmatpush1.msra.mxu0 0.0
    %3242 = vmatprep.subr.mxu0 0.0
    %3243 = vmatpush1.msra.mxu0 0.0
    %3244 = vmatprep.subr.mxu0 0.0
    %3245 = vmatpush1.msra.mxu0 0.0
    %3246 = vmatprep.subr.mxu0 0.0
    %3247 = vmatpush1.msra.mxu0 0.0
    %3248 = vmatprep.subr.mxu0 0.0
    %3249 = vmatpush1.msra.mxu0 0.0
    %3250 = vmatprep.subr.mxu0 0.0
    %3251 = vmatpush1.msra.mxu0 0.0
    %3252 = vmatprep.subr.mxu0 0.0
    %3253 = vmatpush1.msra.mxu0 0.0
    %3254 = vmatprep.subr.mxu0 0.0
    %3255 = vmatpush1.msra.mxu0 0.0
    %3256 = vmatprep.subr.mxu0 0.0
    %3257 = vmatpush1.msra.mxu0 0.0
    %3258 = vmatprep.subr.mxu0 0.0
    %3259 = vmatpush1.msra.mxu0 0.0
    %3260 = vmatprep.subr.mxu0 0.0
    %3261 = vmatpush1.msra.mxu0 0.0
    %3262 = vmatprep.subr.mxu0 0.0
    %3263 = vmatpush1.msra.mxu0 0.0
    %3264 = vmatprep.subr.mxu0 0.0
    %3265 = vmatpush1.msra.mxu0 0.0
    %3266 = vmatprep.subr.mxu0 0.0
    %3267 = vmatpush1.msra.mxu0 0.0
    %3268 = vmatprep.subr.mxu0 0.0
    %3269 = vmatpush1.msra.mxu0 0.0
    %3270 = vmatprep.subr.mxu0 0.0
    %3271 = vmatpush1.msra.mxu0 0.0
    %3272 = vmatprep.subr.mxu0 0.0
    %3273 = vmatpush1.msra.mxu0 0.0
    %3274 = vmatprep.subr.mxu0 0.0
    %3275 = vmatpush1.msra.mxu0 0.0
    %3276 = vmatprep.subr.mxu0 0.0
    %3277 = vmatpush1.msra.mxu0 0.0
    %3278 = vmatprep.subr.mxu0 0.0
    %3279 = vmatpush1.msra.mxu0 0.0
    %3280 = vmatprep.subr.mxu0 0.0
    %3281 = vmatpush1.msra.mxu0 0.0
    %3282 = vmatprep.mubr.f32.mxu0 0.0
    %3283 = vmatmul.mubr.f32.gmra.mrb[0].mxu0 %v3216
    %v3284 = vpop.f32.mrb[0].mxu0
    %v3285 = vadd.f32 0.0, %v3284
    %v3286 = vpop.f32.mrb[0].mxu0
    %3287 = vdwg.mxu0
    %v3289 = vsel %vm135, %v3285, 0
    %3291 = vmatprep.subr.mxu0 0.0
    %3292 = vmatpush1.msra.mxu0 %v1071
    %3293 = vmatprep.subr.mxu0 0.0
    %3294 = vmatpush1.msra.mxu0 %v1072
    %3295 = vmatprep.subr.mxu0 0.0
    %3296 = vmatpush1.msra.mxu0 %v1073
    %3297 = vmatprep.subr.mxu0 0.0
    %3298 = vmatpush1.msra.mxu0 %v1074
    %3299 = vmatprep.subr.mxu0 0.0
    %3300 = vmatpush1.msra.mxu0 0.0
    %3301 = vmatprep.subr.mxu0 0.0
    %3302 = vmatpush1.msra.mxu0 0.0
    %3303 = vmatprep.subr.mxu0 0.0
    %3304 = vmatpush1.msra.mxu0 0.0
    %3305 = vmatprep.subr.mxu0 0.0
    %3306 = vmatpush1.msra.mxu0 0.0
    %3307 = vmatprep.subr.mxu0 0.0
    %3308 = vmatpush1.msra.mxu0 0.0
    %3309 = vmatprep.subr.mxu0 0.0
    %3310 = vmatpush1.msra.mxu0 0.0
    %3311 = vmatprep.subr.mxu0 0.0
    %3312 = vmatpush1.msra.mxu0 0.0
    %3313 = vmatprep.subr.mxu0 0.0
    %3314 = vmatpush1.msra.mxu0 0.0
    %3315 = vmatprep.subr.mxu0 0.0
    %3316 = vmatpush1.msra.mxu0 0.0
    %3317 = vmatprep.subr.mxu0 0.0
    %3318 = vmatpush1.msra.mxu0 0.0
    %3319 = vmatprep.subr.mxu0 0.0
    %3320 = vmatpush1.msra.mxu0 0.0
    %3321 = vmatprep.subr.mxu0 0.0
    %3322 = vmatpush1.msra.mxu0 0.0
    %3323 = vmatprep.subr.mxu0 0.0
    %3324 = vmatpush1.msra.mxu0 0.0
    %3325 = vmatprep.subr.mxu0 0.0
    %3326 = vmatpush1.msra.mxu0 0.0
    %3327 = vmatprep.subr.mxu0 0.0
    %3328 = vmatpush1.msra.mxu0 0.0
    %3329 = vmatprep.subr.mxu0 0.0
    %3330 = vmatpush1.msra.mxu0 0.0
    %3331 = vmatprep.subr.mxu0 0.0
    %3332 = vmatpush1.msra.mxu0 0.0
    %3333 = vmatprep.subr.mxu0 0.0
    %3334 = vmatpush1.msra.mxu0 0.0
    %3335 = vmatprep.subr.mxu0 0.0
    %3336 = vmatpush1.msra.mxu0 0.0
    %3337 = vmatprep.subr.mxu0 0.0
    %3338 = vmatpush1.msra.mxu0 0.0
    %3339 = vmatprep.subr.mxu0 0.0
    %3340 = vmatpush1.msra.mxu0 0.0
    %3341 = vmatprep.subr.mxu0 0.0
    %3342 = vmatpush1.msra.mxu0 0.0
    %3343 = vmatprep.subr.mxu0 0.0
    %3344 = vmatpush1.msra.mxu0 0.0
    %3345 = vmatprep.subr.mxu0 0.0
    %3346 = vmatpush1.msra.mxu0 0.0
    %3347 = vmatprep.subr.mxu0 0.0
    %3348 = vmatpush1.msra.mxu0 0.0
    %3349 = vmatprep.subr.mxu0 0.0
    %3350 = vmatpush1.msra.mxu0 0.0
    %3351 = vmatprep.subr.mxu0 0.0
    %3352 = vmatpush1.msra.mxu0 0.0
    %3353 = vmatprep.subr.mxu0 0.0
    %3354 = vmatpush1.msra.mxu0 0.0
    %3355 = vmatprep.mubr.f32.mxu0 0.0
    %3356 = vmatmul.mubr.f32.gmra.mrb[0].mxu0 %v3289
    %v3357 = vpop.f32.mrb[0].mxu0
    %v3358 = vadd.f32 0.0, %v3357
    %v3359 = vpop.f32.mrb[0].mxu0
    %3360 = vdwg.mxu0
    %3362 = vrot.lane.b32.xlu0 %v3358, 8
    %v3363 = vpop.permute.xlu0 %3362
    %v3365 = vadd.f32 %v3126, %v3363
    %v3366 = vmax.f32 %v3365, 0.0
    %3368 = vrot.lane.b32.xlu0 %v3366, 120
    %v3369 = vpop.permute.xlu0 %3368
    %v3370 = vsel %vm135, %v3369, 0
    %3372 = vmatprep.subr.mxu0 0.0
    %3373 = vmatpush1.msra.mxu0 %v1154
    %3374 = vmatprep.subr.mxu0 0.0
    %3375 = vmatpush1.msra.mxu0 %v1155
    %3376 = vmatprep.subr.mxu0 0.0
    %3377 = vmatpush1.msra.mxu0 %v1156
    %3378 = vmatprep.subr.mxu0 0.0
    %3379 = vmatpush1.msra.mxu0 %v1157
    %3380 = vmatprep.subr.mxu0 0.0
    %3381 = vmatpush1.msra.mxu0 0.0
    %3382 = vmatprep.subr.mxu0 0.0
    %3383 = vmatpush1.msra.mxu0 0.0
    %3384 = vmatprep.subr.mxu0 0.0
    %3385 = vmatpush1.msra.mxu0 0.0
    %3386 = vmatprep.subr.mxu0 0.0
    %3387 = vmatpush1.msra.mxu0 0.0
    %3388 = vmatprep.subr.mxu0 0.0
    %3389 = vmatpush1.msra.mxu0 0.0
    %3390 = vmatprep.subr.mxu0 0.0
    %3391 = vmatpush1.msra.mxu0 0.0
    %3392 = vmatprep.subr.mxu0 0.0
    %3393 = vmatpush1.msra.mxu0 0.0
    %3394 = vmatprep.subr.mxu0 0.0
    %3395 = vmatpush1.msra.mxu0 0.0
    %3396 = vmatprep.subr.mxu0 0.0
    %3397 = vmatpush1.msra.mxu0 0.0
    %3398 = vmatprep.subr.mxu0 0.0
    %3399 = vmatpush1.msra.mxu0 0.0
    %3400 = vmatprep.subr.mxu0 0.0
    %3401 = vmatpush1.msra.mxu0 0.0
    %3402 = vmatprep.subr.mxu0 0.0
    %3403 = vmatpush1.msra.mxu0 0.0
    %3404 = vmatprep.subr.mxu0 0.0
    %3405 = vmatpush1.msra.mxu0 0.0
    %3406 = vmatprep.subr.mxu0 0.0
    %3407 = vmatpush1.msra.mxu0 0.0
    %3408 = vmatprep.subr.mxu0 0.0
    %3409 = vmatpush1.msra.mxu0 0.0
    %3410 = vmatprep.subr.mxu0 0.0
    %3411 = vmatpush1.msra.mxu0 0.0
    %3412 = vmatprep.subr.mxu0 0.0
    %3413 = vmatpush1.msra.mxu0 0.0
    %3414 = vmatprep.subr.mxu0 0.0
    %3415 = vmatpush1.msra.mxu0 0.0
    %3416 = vmatprep.subr.mxu0 0.0
    %3417 = vmatpush1.msra.mxu0 0.0
    %3418 = vmatprep.subr.mxu0 0.0
    %3419 = vmatpush1.msra.mxu0 0.0
    %3420 = vmatprep.subr.mxu0 0.0
    %3421 = vmatpush1.msra.mxu0 0.0
    %3422 = vmatprep.subr.mxu0 0.0
    %3423 = vmatpush1.msra.mxu0 0.0
    %3424 = vmatprep.subr.mxu0 0.0
    %3425 = vmatpush1.msra.mxu0 0.0
    %3426 = vmatprep.subr.mxu0 0.0
    %3427 = vmatpush1.msra.mxu0 0.0
    %3428 = vmatprep.subr.mxu0 0.0
    %3429 = vmatpush1.msra.mxu0 0.0
    %3430 = vmatprep.subr.mxu0 0.0
    %3431 = vmatpush1.msra.mxu0 0.0
    %3432 = vmatprep.subr.mxu0 0.0
    %3433 = vmatpush1.msra.mxu0 0.0
    %3434 = vmatprep.subr.mxu0 0.0
    %3435 = vmatpush1.msra.mxu0 0.0
    %3436 = vmatprep.mubr.f32.mxu0 0.0
    %3437 = vmatmul.mubr.f32.gmra.mrb[0].mxu0 %v3370
    %v3438 = vpop.f32.mrb[0].mxu0
    %v3439 = vadd.f32 %v1158, %v3438
    %v3440 = vpop.f32.mrb[0].mxu0
    %3441 = vdwg.mxu0
    %v3442 = vadd.f32 %v3439, %v3196
    %v3443 = vxor.u32 %v3442, 2147483648
    %v3444 = vmul.f32 %v3443, 1.442695
    %v3445 = vpow.pop %v3444
    %v3446 = vadd.f32 %v3445, 1.0
    %v3447 = vrcp.pop %v3446
    %v3448 = vmul.f32 1.0, %v3447
    %3449 = vrot.lane.b32.xlu0 %v3196, 64
    %v3450 = vpop.permute.xlu0 %3449
    %v3452 = vmul.f32 %v3448, %v3450
    %3454 = vrot.lane.b32.xlu0 %v3452, 64
    %v3455 = vpop.permute.xlu0 %3454
    %v3457 = vadd.f32 %v3439, %v3455
    %v3458 = vtanh.pop %v3457
    %v3459 = vsub.f32 1.0, %v3448
    %3461 = vrot.lane.b32.xlu0 %v3458, 96
    %v3462 = vpop.permute.xlu0 %3461
    %v3464 = vmul.f32 %v3459, %v3462
    %v3465 = vmul.f32 %v3448, %v2917
    %v3466 = vadd.f32 %v3464, %v3465
    %3468 = vrot.lane.b32.xlu0 %v3466, 96
    %v3469 = vpop.permute.xlu0 %3468
    %v3470 = vsel %vm135, %v3469, 0
    %3472 = vmatprep.subr.mxu0 0.0
    %3473 = vmatpush1.msra.mxu0 %v1259
    %3474 = vmatprep.subr.mxu0 0.0
    %3475 = vmatpush1.msra.mxu0 %v1260
    %3476 = vmatprep.subr.mxu0 0.0
    %3477 = vmatpush1.msra.mxu0 %v1261
    %3478 = vmatprep.subr.mxu0 0.0
    %3479 = vmatpush1.msra.mxu0 %v1262
    %3480 = vmatprep.subr.mxu0 0.0
    %3481 = vmatpush1.msra.mxu0 0.0
    %3482 = vmatprep.subr.mxu0 0.0
    %3483 = vmatpush1.msra.mxu0 0.0
    %3484 = vmatprep.subr.mxu0 0.0
    %3485 = vmatpush1.msra.mxu0 0.0
    %3486 = vmatprep.subr.mxu0 0.0
    %3487 = vmatpush1.msra.mxu0 0.0
    %3488 = vmatprep.subr.mxu0 0.0
    %3489 = vmatpush1.msra.mxu0 0.0
    %3490 = vmatprep.subr.mxu0 0.0
    %3491 = vmatpush1.msra.mxu0 0.0
    %3492 = vmatprep.subr.mxu0 0.0
    %3493 = vmatpush1.msra.mxu0 0.0
    %3494 = vmatprep.subr.mxu0 0.0
    %3495 = vmatpush1.msra.mxu0 0.0
    %3496 = vmatprep.subr.mxu0 0.0
    %3497 = vmatpush1.msra.mxu0 0.0
    %3498 = vmatprep.subr.mxu0 0.0
    %3499 = vmatpush1.msra.mxu0 0.0
    %3500 = vmatprep.subr.mxu0 0.0
    %3501 = vmatpush1.msra.mxu0 0.0
    %3502 = vmatprep.subr.mxu0 0.0
    %3503 = vmatpush1.msra.mxu0 0.0
    %3504 = vmatprep.subr.mxu0 0.0
    %3505 = vmatpush1.msra.mxu0 0.0
    %3506 = vmatprep.subr.mxu0 0.0
    %3507 = vmatpush1.msra.mxu0 0.0
    %3508 = vmatprep.subr.mxu0 0.0
    %3509 = vmatpush1.msra.mxu0 0.0
    %3510 = vmatprep.subr.mxu0 0.0
    %3511 = vmatpush1.msra.mxu0 0.0
    %3512 = vmatprep.subr.mxu0 0.0
    %3513 = vmatpush1.msra.mxu0 0.0
    %3514 = vmatprep.subr.mxu0 0.0
    %3515 = vmatpush1.msra.mxu0 0.0
    %3516 = vmatprep.subr.mxu0 0.0
    %3517 = vmatpush1.msra.mxu0 0.0
    %3518 = vmatprep.subr.mxu0 0.0
    %3519 = vmatpush1.msra.mxu0 0.0
    %3520 = vmatprep.subr.mxu0 0.0
    %3521 = vmatpush1.msra.mxu0 0.0
    %3522 = vmatprep.subr.mxu0 0.0
    %3523 = vmatpush1.msra.mxu0 0.0
    %3524 = vmatprep.subr.mxu0 0.0
    %3525 = vmatpush1.msra.mxu0 0.0
    %3526 = vmatprep.subr.mxu0 0.0
    %3527 = vmatpush1.msra.mxu0 0.0
    %3528 = vmatprep.subr.mxu0 0.0
    %3529 = vmatpush1.msra.mxu0 0.0
    %3530 = vmatprep.subr.mxu0 0.0
    %3531 = vmatpush1.msra.mxu0 0.0
    %3532 = vmatprep.subr.mxu0 0.0
    %3533 = vmatpush1.msra.mxu0 0.0
    %3534 = vmatprep.subr.mxu0 0.0
    %3535 = vmatpush1.msra.mxu0 0.0
    %3536 = vmatprep.mubr.f32.mxu0 0.0
    %3537 = vmatmul.mubr.f32.gmra.mrb[0].mxu0 %v3470
    %v3538 = vpop.f32.mrb[0].mxu0
    %v3539 = vadd.f32 %v1263, %v3538
    %v3540 = vpop.f32.mrb[0].mxu0
    %3541 = vdwg.mxu0
    %v3542 = vsel %vm1339, %v3539, -inf
    %3543 = vmax.xlane.f32.xlu0 %v3542
    %v3544 = vpop.xlane.xlu0 %3543
    %v3545 = vsub.f32 %v3539, %v3544
    %v3546 = vmul.f32 %v3545, 1.442695
    %v3547 = vpow.pop %v3546
    %v3548 = vsel %vm1339, %v3547, 0.0
    %3549 = vadd.xlane.f32.xlu0 %v3548
    %v3550 = vpop.xlane.xlu0 %3549
    %v3551 = vlog2.pop %v3550
    %v3552 = vmul.f32 %v3551, 0.6931472
    %s3553 = sld [smem:[#allocation6 + $0x4]]
    %v3554 = vstv %s3553
    %vm3555 = vcmp.eq.s32.totalorder %v895, %v3554
    %v3556 = vsel %vm3555, %v3545, 0.0
    %v3557 = vsel %vm1339, %v3556, 0.0
    %3558 = vadd.xlane.f32.xlu0 %v3557
    %v3559 = vpop.xlane.xlu0 %3558
    %v3560 = vrot.slane %v3559, 4
    %v3561 = vadd.f32 %v3559, %v3560
    %v3562 = vrot.slane %v3561, 2
    %v3563 = vadd.f32 %v3561, %v3562
    %v3564 = vrot.slane %v3563, 1
    %v3565 = vadd.f32 %v3563, %v3564
    %s3566 = vtos %v3565
    %v3567 = vadd.f32 %v3552, 0.0
    %s3568 = vtos %v3567
    %s3569 = ssub.f32 %s3568, %s3566
    %s3570 = smul.f32 %s3052, %s3569
    %s3571 = sadd.f32 %s3022, %s3570
    %vm3572 = vcmp.eq.f32.partialorder %v3545, 0.0
    %v3573 = vsel %vm3572, %v895, 18
    %v3574 = vsel %vm1339, %v3573, 2147483647
    %v3575 = vand.u32 %v3574, 65535
    %v3576 = vshra.s32 %v3574, 16
    %v3577 = vcvt.s32.f32 %v3575
    %v3578 = vcvt.s32.f32 %v3576
    %3579 = vmin.xlane.f32.xlu0 %v3578
    %v3580 = vpop.xlane.xlu0 %3579
    %vm3581 = vcmp.eq.f32.partialorder %v3578, %v3580
    %v3582 = vsel %vm3581, %v3577, inf
    %3583 = vmin.xlane.f32.xlu0 %v3582
    %v3584 = vpop.xlane.xlu0 %3583
    %v3585 = vcvt.f32.s32 %v3584
    %v3586 = vcvt.f32.s32 %v3580
    %v3587 = vshll.u32 %v3586, 16
    %v3588 = vadd.s32 %v3587, %v3585
    %v3589 = vrot.slane %v3588, 4
    %vm3590 = vcmp.lt.s32.totalorder %v3588, %v3589
    %v3591 = vsel %vm3590, %v3588, %v3589
    %v3592 = vrot.slane %v3591, 2
    %vm3593 = vcmp.lt.s32.totalorder %v3591, %v3592
    %v3594 = vsel %vm3593, %v3591, %v3592
    %v3595 = vrot.slane %v3594, 1
    %vm3596 = vcmp.lt.s32.totalorder %v3594, %v3595
    %v3597 = vsel %vm3596, %v3594, %v3595
    %s3598 = vtos %v3597
    %p3599 = scmp.eq.s32.totalorder %s3598, 1
    %s3600 = scalar_select %p3599, 0.0, 1.0
    %s3601 = smul.f32 %s3052, %s3600
    %v3602 = vstv %s3598
    %vm3603 = vcmp.eq.s32.totalorder %v895, %v3602
    %v3604 = vsel %vm3603, 1.0, 0.0
    %v3606 = vsel %vm1404, %v3604, 0
    %3608 = vmatprep.subr.mxu0 0.0
    %3609 = vmatpush1.msra.mxu0 %v1401
    %3610 = vmatprep.subr.mxu0 0.0
    %3611 = vmatpush1.msra.mxu0 %v1402
    %3612 = vmatprep.subr.mxu0 0.0
    %3613 = vmatpush1.msra.mxu0 %v1410
    %3614 = vmatprep.subr.mxu0 0.0
    %3615 = vmatpush1.msra.mxu0 0.0
    %3616 = vmatprep.subr.mxu0 0.0
    %3617 = vmatpush1.msra.mxu0 0.0
    %3618 = vmatprep.subr.mxu0 0.0
    %3619 = vmatpush1.msra.mxu0 0.0
    %3620 = vmatprep.subr.mxu0 0.0
    %3621 = vmatpush1.msra.mxu0 0.0
    %3622 = vmatprep.subr.mxu0 0.0
    %3623 = vmatpush1.msra.mxu0 0.0
    %3624 = vmatprep.subr.mxu0 0.0
    %3625 = vmatpush1.msra.mxu0 0.0
    %3626 = vmatprep.subr.mxu0 0.0
    %3627 = vmatpush1.msra.mxu0 0.0
    %3628 = vmatprep.subr.mxu0 0.0
    %3629 = vmatpush1.msra.mxu0 0.0
    %3630 = vmatprep.subr.mxu0 0.0
    %3631 = vmatpush1.msra.mxu0 0.0
    %3632 = vmatprep.subr.mxu0 0.0
    %3633 = vmatpush1.msra.mxu0 0.0
    %3634 = vmatprep.subr.mxu0 0.0
    %3635 = vmatpush1.msra.mxu0 0.0
    %3636 = vmatprep.subr.mxu0 0.0
    %3637 = vmatpush1.msra.mxu0 0.0
    %3638 = vmatprep.subr.mxu0 0.0
    %3639 = vmatpush1.msra.mxu0 0.0
    %3640 = vmatprep.subr.mxu0 0.0
    %3641 = vmatpush1.msra.mxu0 0.0
    %3642 = vmatprep.subr.mxu0 0.0
    %3643 = vmatpush1.msra.mxu0 0.0
    %3644 = vmatprep.subr.mxu0 0.0
    %3645 = vmatpush1.msra.mxu0 0.0
    %3646 = vmatprep.subr.mxu0 0.0
    %3647 = vmatpush1.msra.mxu0 0.0
    %3648 = vmatprep.subr.mxu0 0.0
    %3649 = vmatpush1.msra.mxu0 0.0
    %3650 = vmatprep.subr.mxu0 0.0
    %3651 = vmatpush1.msra.mxu0 0.0
    %3652 = vmatprep.subr.mxu0 0.0
    %3653 = vmatpush1.msra.mxu0 0.0
    %3654 = vmatprep.subr.mxu0 0.0
    %3655 = vmatpush1.msra.mxu0 0.0
    %3656 = vmatprep.subr.mxu0 0.0
    %3657 = vmatpush1.msra.mxu0 0.0
    %3658 = vmatprep.subr.mxu0 0.0
    %3659 = vmatpush1.msra.mxu0 0.0
    %3660 = vmatprep.subr.mxu0 0.0
    %3661 = vmatpush1.msra.mxu0 0.0
    %3662 = vmatprep.subr.mxu0 0.0
    %3663 = vmatpush1.msra.mxu0 0.0
    %3664 = vmatprep.subr.mxu0 0.0
    %3665 = vmatpush1.msra.mxu0 0.0
    %3666 = vmatprep.subr.mxu0 0.0
    %3667 = vmatpush1.msra.mxu0 0.0
    %3668 = vmatprep.subr.mxu0 0.0
    %3669 = vmatpush1.msra.mxu0 0.0
    %3670 = vmatprep.subr.mxu0 0.0
    %3671 = vmatpush1.msra.mxu0 0.0
    %3672 = vmatprep.mubr.f32.mxu0 0.0
    %3673 = vmatmul.mubr.f32.gmra.mrb[0].mxu0 %v3606
    %v3674 = vpop.f32.mrb[0].mxu0
    %v3675 = vadd.f32 0.0, %v3674
    %v3676 = vpop.f32.mrb[0].mxu0
    %3677 = vdwg.mxu0
    %3678 = vmatprep.subr.mxu0 0.0
    %3679 = vmatpush1.msra.mxu0 %v897
    %3680 = vmatprep.subr.mxu0 0.0
    %3681 = vmatpush1.msra.mxu0 %v898
    %3682 = vmatprep.subr.mxu0 0.0
    %3683 = vmatpush1.msra.mxu0 %v899
    %3684 = vmatprep.subr.mxu0 0.0
    %3685 = vmatpush1.msra.mxu0 %v900
    %3686 = vmatprep.subr.mxu0 0.0
    %3687 = vmatpush1.msra.mxu0 0.0
    %3688 = vmatprep.subr.mxu0 0.0
    %3689 = vmatpush1.msra.mxu0 0.0
    %3690 = vmatprep.subr.mxu0 0.0
    %3691 = vmatpush1.msra.mxu0 0.0
    %3692 = vmatprep.subr.mxu0 0.0
    %3693 = vmatpush1.msra.mxu0 0.0
    %3694 = vmatprep.subr.mxu0 0.0
    %3695 = vmatpush1.msra.mxu0 0.0
    %3696 = vmatprep.subr.mxu0 0.0
    %3697 = vmatpush1.msra.mxu0 0.0
    %3698 = vmatprep.subr.mxu0 0.0
    %3699 = vmatpush1.msra.mxu0 0.0
    %3700 = vmatprep.subr.mxu0 0.0
    %3701 = vmatpush1.msra.mxu0 0.0
    %3702 = vmatprep.subr.mxu0 0.0
    %3703 = vmatpush1.msra.mxu0 0.0
    %3704 = vmatprep.subr.mxu0 0.0
    %3705 = vmatpush1.msra.mxu0 0.0
    %3706 = vmatprep.subr.mxu0 0.0
    %3707 = vmatpush1.msra.mxu0 0.0
    %3708 = vmatprep.subr.mxu0 0.0
    %3709 = vmatpush1.msra.mxu0 0.0
    %3710 = vmatprep.subr.mxu0 0.0
    %3711 = vmatpush1.msra.mxu0 0.0
    %3712 = vmatprep.subr.mxu0 0.0
    %3713 = vmatpush1.msra.mxu0 0.0
    %3714 = vmatprep.subr.mxu0 0.0
    %3715 = vmatpush1.msra.mxu0 0.0
    %3716 = vmatprep.subr.mxu0 0.0
    %3717 = vmatpush1.msra.mxu0 0.0
    %3718 = vmatprep.subr.mxu0 0.0
    %3719 = vmatpush1.msra.mxu0 0.0
    %3720 = vmatprep.subr.mxu0 0.0
    %3721 = vmatpush1.msra.mxu0 0.0
    %3722 = vmatprep.subr.mxu0 0.0
    %3723 = vmatpush1.msra.mxu0 0.0
    %3724 = vmatprep.subr.mxu0 0.0
    %3725 = vmatpush1.msra.mxu0 0.0
    %3726 = vmatprep.subr.mxu0 0.0
    %3727 = vmatpush1.msra.mxu0 0.0
    %3728 = vmatprep.subr.mxu0 0.0
    %3729 = vmatpush1.msra.mxu0 0.0
    %3730 = vmatprep.subr.mxu0 0.0
    %3731 = vmatpush1.msra.mxu0 0.0
    %3732 = vmatprep.subr.mxu0 0.0
    %3733 = vmatpush1.msra.mxu0 0.0
    %3734 = vmatprep.subr.mxu0 0.0
    %3735 = vmatpush1.msra.mxu0 0.0
    %3736 = vmatprep.subr.mxu0 0.0
    %3737 = vmatpush1.msra.mxu0 0.0
    %3738 = vmatprep.subr.mxu0 0.0
    %3739 = vmatpush1.msra.mxu0 0.0
    %3740 = vmatprep.subr.mxu0 0.0
    %3741 = vmatpush1.msra.mxu0 0.0
    %3742 = vmatprep.mubr.f32.mxu0 0.0
    %3743 = vmatmul.mubr.f32.gmra.mrb[0].mxu0 %v3470
    %v3744 = vpop.f32.mrb[0].mxu0
    %v3745 = vadd.f32 %v901, %v3744
    %v3746 = vpop.f32.mrb[0].mxu0
    %3747 = vdwg.mxu0
    %3749 = vrot.lane.b32.xlu0 %v3745, 32
    %v3750 = vpop.permute.xlu0 %3749
    %v3752 = vadd.f32 %v3675, %v3750
    %v3753 = vsel %vm981, %v3752, -inf
    %3754 = vmax.xlane.f32.xlu0 %v3753
    %v3755 = vpop.xlane.xlu0 %3754
    %v3756 = vsub.f32 %v3752, %v3755
    %v3757 = vmul.f32 %v3756, 1.442695
    %v3758 = vpow.pop %v3757
    %v3759 = vsel %vm981, %v3758, 0.0
    %3760 = vadd.xlane.f32.xlu0 %v3759
    %v3761 = vpop.xlane.xlu0 %3760
    %v3762 = vrcp.pop %v3761
    %v3763 = vmul.f32 %v3758, %v3762
    %v3765 = vsel %vm997, %v3763, 0
    %3767 = vmatprep.subr.mxu0 0.0
    %3768 = vmatpush1.msra.mxu0 %v995
    %3769 = vmatprep.subr.mxu0 0.0
    %3770 = vmatpush1.msra.mxu0 0.0
    %3771 = vmatprep.subr.mxu0 0.0
    %3772 = vmatpush1.msra.mxu0 0.0
    %3773 = vmatprep.subr.mxu0 0.0
    %3774 = vmatpush1.msra.mxu0 0.0
    %3775 = vmatprep.subr.mxu0 0.0
    %3776 = vmatpush1.msra.mxu0 0.0
    %3777 = vmatprep.subr.mxu0 0.0
    %3778 = vmatpush1.msra.mxu0 0.0
    %3779 = vmatprep.subr.mxu0 0.0
    %3780 = vmatpush1.msra.mxu0 0.0
    %3781 = vmatprep.subr.mxu0 0.0
    %3782 = vmatpush1.msra.mxu0 0.0
    %3783 = vmatprep.subr.mxu0 0.0
    %3784 = vmatpush1.msra.mxu0 0.0
    %3785 = vmatprep.subr.mxu0 0.0
    %3786 = vmatpush1.msra.mxu0 0.0
    %3787 = vmatprep.subr.mxu0 0.0
    %3788 = vmatpush1.msra.mxu0 0.0
    %3789 = vmatprep.subr.mxu0 0.0
    %3790 = vmatpush1.msra.mxu0 0.0
    %3791 = vmatprep.subr.mxu0 0.0
    %3792 = vmatpush1.msra.mxu0 0.0
    %3793 = vmatprep.subr.mxu0 0.0
    %3794 = vmatpush1.msra.mxu0 0.0
    %3795 = vmatprep.subr.mxu0 0.0
    %3796 = vmatpush1.msra.mxu0 0.0
    %3797 = vmatprep.subr.mxu0 0.0
    %3798 = vmatpush1.msra.mxu0 0.0
    %3799 = vmatprep.subr.mxu0 0.0
    %3800 = vmatpush1.msra.mxu0 0.0
    %3801 = vmatprep.subr.mxu0 0.0
    %3802 = vmatpush1.msra.mxu0 0.0
    %3803 = vmatprep.subr.mxu0 0.0
    %3804 = vmatpush1.msra.mxu0 0.0
    %3805 = vmatprep.subr.mxu0 0.0
    %3806 = vmatpush1.msra.mxu0 0.0
    %3807 = vmatprep.subr.mxu0 0.0
    %3808 = vmatpush1.msra.mxu0 0.0
    %3809 = vmatprep.subr.mxu0 0.0
    %3810 = vmatpush1.msra.mxu0 0.0
    %3811 = vmatprep.subr.mxu0 0.0
    %3812 = vmatpush1.msra.mxu0 0.0
    %3813 = vmatprep.subr.mxu0 0.0
    %3814 = vmatpush1.msra.mxu0 0.0
    %3815 = vmatprep.subr.mxu0 0.0
    %3816 = vmatpush1.msra.mxu0 0.0
    %3817 = vmatprep.subr.mxu0 0.0
    %3818 = vmatpush1.msra.mxu0 0.0
    %3819 = vmatprep.subr.mxu0 0.0
    %3820 = vmatpush1.msra.mxu0 0.0
    %3821 = vmatprep.subr.mxu0 0.0
    %3822 = vmatpush1.msra.mxu0 0.0
    %3823 = vmatprep.subr.mxu0 0.0
    %3824 = vmatpush1.msra.mxu0 0.0
    %3825 = vmatprep.subr.mxu0 0.0
    %3826 = vmatpush1.msra.mxu0 0.0
    %3827 = vmatprep.subr.mxu0 0.0
    %3828 = vmatpush1.msra.mxu0 0.0
    %3829 = vmatprep.subr.mxu0 0.0
    %3830 = vmatpush1.msra.mxu0 0.0
    %3831 = vmatprep.mubr.f32.mxu0 0.0
    %3832 = vmatmul.mubr.f32.gmra.mrb[0].mxu0 %v3765
    %v3833 = vpop.f32.mrb[0].mxu0
    %v3834 = vadd.f32 0.0, %v3833
    %v3835 = vpop.f32.mrb[0].mxu0
    %3836 = vdwg.mxu0
    %v3838 = vsel %vm135, %v3834, 0
    %3840 = vmatprep.subr.mxu0 0.0
    %3841 = vmatpush1.msra.mxu0 %v1071
    %3842 = vmatprep.subr.mxu0 0.0
    %3843 = vmatpush1.msra.mxu0 %v1072
    %3844 = vmatprep.subr.mxu0 0.0
    %3845 = vmatpush1.msra.mxu0 %v1073
    %3846 = vmatprep.subr.mxu0 0.0
    %3847 = vmatpush1.msra.mxu0 %v1074
    %3848 = vmatprep.subr.mxu0 0.0
    %3849 = vmatpush1.msra.mxu0 0.0
    %3850 = vmatprep.subr.mxu0 0.0
    %3851 = vmatpush1.msra.mxu0 0.0
    %3852 = vmatprep.subr.mxu0 0.0
    %3853 = vmatpush1.msra.mxu0 0.0
    %3854 = vmatprep.subr.mxu0 0.0
    %3855 = vmatpush1.msra.mxu0 0.0
    %3856 = vmatprep.subr.mxu0 0.0
    %3857 = vmatpush1.msra.mxu0 0.0
    %3858 = vmatprep.subr.mxu0 0.0
    %3859 = vmatpush1.msra.mxu0 0.0
    %3860 = vmatprep.subr.mxu0 0.0
    %3861 = vmatpush1.msra.mxu0 0.0
    %3862 = vmatprep.subr.mxu0 0.0
    %3863 = vmatpush1.msra.mxu0 0.0
    %3864 = vmatprep.subr.mxu0 0.0
    %3865 = vmatpush1.msra.mxu0 0.0
    %3866 = vmatprep.subr.mxu0 0.0
    %3867 = vmatpush1.msra.mxu0 0.0
    %3868 = vmatprep.subr.mxu0 0.0
    %3869 = vmatpush1.msra.mxu0 0.0
    %3870 = vmatprep.subr.mxu0 0.0
    %3871 = vmatpush1.msra.mxu0 0.0
    %3872 = vmatprep.subr.mxu0 0.0
    %3873 = vmatpush1.msra.mxu0 0.0
    %3874 = vmatprep.subr.mxu0 0.0
    %3875 = vmatpush1.msra.mxu0 0.0
    %3876 = vmatprep.subr.mxu0 0.0
    %3877 = vmatpush1.msra.mxu0 0.0
    %3878 = vmatprep.subr.mxu0 0.0
    %3879 = vmatpush1.msra.mxu0 0.0
    %3880 = vmatprep.subr.mxu0 0.0
    %3881 = vmatpush1.msra.mxu0 0.0
    %3882 = vmatprep.subr.mxu0 0.0
    %3883 = vmatpush1.msra.mxu0 0.0
    %3884 = vmatprep.subr.mxu0 0.0
    %3885 = vmatpush1.msra.mxu0 0.0
    %3886 = vmatprep.subr.mxu0 0.0
    %3887 = vmatpush1.msra.mxu0 0.0
    %3888 = vmatprep.subr.mxu0 0.0
    %3889 = vmatpush1.msra.mxu0 0.0
    %3890 = vmatprep.subr.mxu0 0.0
    %3891 = vmatpush1.msra.mxu0 0.0
    %3892 = vmatprep.subr.mxu0 0.0
    %3893 = vmatpush1.msra.mxu0 0.0
    %3894 = vmatprep.subr.mxu0 0.0
    %3895 = vmatpush1.msra.mxu0 0.0
    %3896 = vmatprep.subr.mxu0 0.0
    %3897 = vmatpush1.msra.mxu0 0.0
    %3898 = vmatprep.subr.mxu0 0.0
    %3899 = vmatpush1.msra.mxu0 0.0
    %3900 = vmatprep.subr.mxu0 0.0
    %3901 = vmatpush1.msra.mxu0 0.0
    %3902 = vmatprep.subr.mxu0 0.0
    %3903 = vmatpush1.msra.mxu0 0.0
    %3904 = vmatprep.mubr.f32.mxu0 0.0
    %3905 = vmatmul.mubr.f32.gmra.mrb[0].mxu0 %v3838
    %v3906 = vpop.f32.mrb[0].mxu0
    %v3907 = vadd.f32 0.0, %v3906
    %v3908 = vpop.f32.mrb[0].mxu0
    %3909 = vdwg.mxu0
    %3911 = vrot.lane.b32.xlu0 %v3907, 8
    %v3912 = vpop.permute.xlu0 %3911
    %v3914 = vadd.f32 %v3675, %v3912
    %v3915 = vmax.f32 %v3914, 0.0
    %3917 = vrot.lane.b32.xlu0 %v3915, 120
    %v3918 = vpop.permute.xlu0 %3917
    %v3919 = vsel %vm135, %v3918, 0
    %3921 = vmatprep.subr.mxu0 0.0
    %3922 = vmatpush1.msra.mxu0 %v1154
    %3923 = vmatprep.subr.mxu0 0.0
    %3924 = vmatpush1.msra.mxu0 %v1155
    %3925 = vmatprep.subr.mxu0 0.0
    %3926 = vmatpush1.msra.mxu0 %v1156
    %3927 = vmatprep.subr.mxu0 0.0
    %3928 = vmatpush1.msra.mxu0 %v1157
    %3929 = vmatprep.subr.mxu0 0.0
    %3930 = vmatpush1.msra.mxu0 0.0
    %3931 = vmatprep.subr.mxu0 0.0
    %3932 = vmatpush1.msra.mxu0 0.0
    %3933 = vmatprep.subr.mxu0 0.0
    %3934 = vmatpush1.msra.mxu0 0.0
    %3935 = vmatprep.subr.mxu0 0.0
    %3936 = vmatpush1.msra.mxu0 0.0
    %3937 = vmatprep.subr.mxu0 0.0
    %3938 = vmatpush1.msra.mxu0 0.0
    %3939 = vmatprep.subr.mxu0 0.0
    %3940 = vmatpush1.msra.mxu0 0.0
    %3941 = vmatprep.subr.mxu0 0.0
    %3942 = vmatpush1.msra.mxu0 0.0
    %3943 = vmatprep.subr.mxu0 0.0
    %3944 = vmatpush1.msra.mxu0 0.0
    %3945 = vmatprep.subr.mxu0 0.0
    %3946 = vmatpush1.msra.mxu0 0.0
    %3947 = vmatprep.subr.mxu0 0.0
    %3948 = vmatpush1.msra.mxu0 0.0
    %3949 = vmatprep.subr.mxu0 0.0
    %3950 = vmatpush1.msra.mxu0 0.0
    %3951 = vmatprep.subr.mxu0 0.0
    %3952 = vmatpush1.msra.mxu0 0.0
    %3953 = vmatprep.subr.mxu0 0.0
    %3954 = vmatpush1.msra.mxu0 0.0
    %3955 = vmatprep.subr.mxu0 0.0
    %3956 = vmatpush1.msra.mxu0 0.0
    %3957 = vmatprep.subr.mxu0 0.0
    %3958 = vmatpush1.msra.mxu0 0.0
    %3959 = vmatprep.subr.mxu0 0.0
    %3960 = vmatpush1.msra.mxu0 0.0
    %3961 = vmatprep.subr.mxu0 0.0
    %3962 = vmatpush1.msra.mxu0 0.0
    %3963 = vmatprep.subr.mxu0 0.0
    %3964 = vmatpush1.msra.mxu0 0.0
    %3965 = vmatprep.subr.mxu0 0.0
    %3966 = vmatpush1.msra.mxu0 0.0
    %3967 = vmatprep.subr.mxu0 0.0
    %3968 = vmatpush1.msra.mxu0 0.0
    %3969 = vmatprep.subr.mxu0 0.0
    %3970 = vmatpush1.msra.mxu0 0.0
    %3971 = vmatprep.subr.mxu0 0.0
    %3972 = vmatpush1.msra.mxu0 0.0
    %3973 = vmatprep.subr.mxu0 0.0
    %3974 = vmatpush1.msra.mxu0 0.0
    %3975 = vmatprep.subr.mxu0 0.0
    %3976 = vmatpush1.msra.mxu0 0.0
    %3977 = vmatprep.subr.mxu0 0.0
    %3978 = vmatpush1.msra.mxu0 0.0
    %3979 = vmatprep.subr.mxu0 0.0
    %3980 = vmatpush1.msra.mxu0 0.0
    %3981 = vmatprep.subr.mxu0 0.0
    %3982 = vmatpush1.msra.mxu0 0.0
    %3983 = vmatprep.subr.mxu0 0.0
    %3984 = vmatpush1.msra.mxu0 0.0
    %3985 = vmatprep.mubr.f32.mxu0 0.0
    %3986 = vmatmul.mubr.f32.gmra.mrb[0].mxu0 %v3919
    %v3987 = vpop.f32.mrb[0].mxu0
    %v3988 = vadd.f32 %v1158, %v3987
    %v3989 = vpop.f32.mrb[0].mxu0
    %3990 = vdwg.mxu0
    %v3991 = vadd.f32 %v3988, %v3745
    %v3992 = vxor.u32 %v3991, 2147483648
    %v3993 = vmul.f32 %v3992, 1.442695
    %v3994 = vpow.pop %v3993
    %v3995 = vadd.f32 %v3994, 1.0
    %v3996 = vrcp.pop %v3995
    %v3997 = vmul.f32 1.0, %v3996
    %3998 = vrot.lane.b32.xlu0 %v3745, 64
    %v3999 = vpop.permute.xlu0 %3998
    %v4001 = vmul.f32 %v3997, %v3999
    %4003 = vrot.lane.b32.xlu0 %v4001, 64
    %v4004 = vpop.permute.xlu0 %4003
    %v4006 = vadd.f32 %v3988, %v4004
    %v4007 = vtanh.pop %v4006
    %v4008 = vsub.f32 1.0, %v3997
    %4010 = vrot.lane.b32.xlu0 %v4007, 96
    %v4011 = vpop.permute.xlu0 %4010
    %v4013 = vmul.f32 %v4008, %v4011
    %v4014 = vmul.f32 %v3997, %v3466
    %v4015 = vadd.f32 %v4013, %v4014
    %4017 = vrot.lane.b32.xlu0 %v4015, 96
    %v4018 = vpop.permute.xlu0 %4017
    %v4019 = vsel %vm135, %v4018, 0
    %4021 = vmatprep.subr.mxu0 0.0
    %4022 = vmatpush1.msra.mxu0 %v1259
    %4023 = vmatprep.subr.mxu0 0.0
    %4024 = vmatpush1.msra.mxu0 %v1260
    %4025 = vmatprep.subr.mxu0 0.0
    %4026 = vmatpush1.msra.mxu0 %v1261
    %4027 = vmatprep.subr.mxu0 0.0
    %4028 = vmatpush1.msra.mxu0 %v1262
    %4029 = vmatprep.subr.mxu0 0.0
    %4030 = vmatpush1.msra.mxu0 0.0
    %4031 = vmatprep.subr.mxu0 0.0
    %4032 = vmatpush1.msra.mxu0 0.0
    %4033 = vmatprep.subr.mxu0 0.0
    %4034 = vmatpush1.msra.mxu0 0.0
    %4035 = vmatprep.subr.mxu0 0.0
    %4036 = vmatpush1.msra.mxu0 0.0
    %4037 = vmatprep.subr.mxu0 0.0
    %4038 = vmatpush1.msra.mxu0 0.0
    %4039 = vmatprep.subr.mxu0 0.0
    %4040 = vmatpush1.msra.mxu0 0.0
    %4041 = vmatprep.subr.mxu0 0.0
    %4042 = vmatpush1.msra.mxu0 0.0
    %4043 = vmatprep.subr.mxu0 0.0
    %4044 = vmatpush1.msra.mxu0 0.0
    %4045 = vmatprep.subr.mxu0 0.0
    %4046 = vmatpush1.msra.mxu0 0.0
    %4047 = vmatprep.subr.mxu0 0.0
    %4048 = vmatpush1.msra.mxu0 0.0
    %4049 = vmatprep.subr.mxu0 0.0
    %4050 = vmatpush1.msra.mxu0 0.0
    %4051 = vmatprep.subr.mxu0 0.0
    %4052 = vmatpush1.msra.mxu0 0.0
    %4053 = vmatprep.subr.mxu0 0.0
    %4054 = vmatpush1.msra.mxu0 0.0
    %4055 = vmatprep.subr.mxu0 0.0
    %4056 = vmatpush1.msra.mxu0 0.0
    %4057 = vmatprep.subr.mxu0 0.0
    %4058 = vmatpush1.msra.mxu0 0.0
    %4059 = vmatprep.subr.mxu0 0.0
    %4060 = vmatpush1.msra.mxu0 0.0
    %4061 = vmatprep.subr.mxu0 0.0
    %4062 = vmatpush1.msra.mxu0 0.0
    %4063 = vmatprep.subr.mxu0 0.0
    %4064 = vmatpush1.msra.mxu0 0.0
    %4065 = vmatprep.subr.mxu0 0.0
    %4066 = vmatpush1.msra.mxu0 0.0
    %4067 = vmatprep.subr.mxu0 0.0
    %4068 = vmatpush1.msra.mxu0 0.0
    %4069 = vmatprep.subr.mxu0 0.0
    %4070 = vmatpush1.msra.mxu0 0.0
    %4071 = vmatprep.subr.mxu0 0.0
    %4072 = vmatpush1.msra.mxu0 0.0
    %4073 = vmatprep.subr.mxu0 0.0
    %4074 = vmatpush1.msra.mxu0 0.0
    %4075 = vmatprep.subr.mxu0 0.0
    %4076 = vmatpush1.msra.mxu0 0.0
    %4077 = vmatprep.subr.mxu0 0.0
    %4078 = vmatpush1.msra.mxu0 0.0
    %4079 = vmatprep.subr.mxu0 0.0
    %4080 = vmatpush1.msra.mxu0 0.0
    %4081 = vmatprep.subr.mxu0 0.0
    %4082 = vmatpush1.msra.mxu0 0.0
    %4083 = vmatprep.subr.mxu0 0.0
    %4084 = vmatpush1.msra.mxu0 0.0
    %4085 = vmatprep.mubr.f32.mxu0 0.0
    %4086 = vmatmul.mubr.f32.gmra.mrb[0].mxu0 %v4019
    %v4087 = vpop.f32.mrb[0].mxu0
    %v4088 = vadd.f32 %v1263, %v4087
    %v4089 = vpop.f32.mrb[0].mxu0
    %4090 = vdwg.mxu0
    %v4091 = vsel %vm1339, %v4088, -inf
    %4092 = vmax.xlane.f32.xlu0 %v4091
    %v4093 = vpop.xlane.xlu0 %4092
    %v4094 = vsub.f32 %v4088, %v4093
    %v4095 = vmul.f32 %v4094, 1.442695
    %v4096 = vpow.pop %v4095
    %v4097 = vsel %vm1339, %v4096, 0.0
    %4098 = vadd.xlane.f32.xlu0 %v4097
    %v4099 = vpop.xlane.xlu0 %4098
    %v4100 = vlog2.pop %v4099
    %v4101 = vmul.f32 %v4100, 0.6931472
    %s4102 = sld [smem:[#allocation6 + $0x5]]
    %v4103 = vstv %s4102
    %vm4104 = vcmp.eq.s32.totalorder %v895, %v4103
    %v4105 = vsel %vm4104, %v4094, 0.0
    %v4106 = vsel %vm1339, %v4105, 0.0
    %4107 = vadd.xlane.f32.xlu0 %v4106
    %v4108 = vpop.xlane.xlu0 %4107
    %v4109 = vrot.slane %v4108, 4
    %v4110 = vadd.f32 %v4108, %v4109
    %v4111 = vrot.slane %v4110, 2
    %v4112 = vadd.f32 %v4110, %v4111
    %v4113 = vrot.slane %v4112, 1
    %v4114 = vadd.f32 %v4112, %v4113
    %s4115 = vtos %v4114
    %v4116 = vadd.f32 %v4101, 0.0
    %s4117 = vtos %v4116
    %s4118 = ssub.f32 %s4117, %s4115
    %s4119 = smul.f32 %s3601, %s4118
    %s4120 = sadd.f32 %s3571, %s4119
    %vm4121 = vcmp.eq.f32.partialorder %v4094, 0.0
    %v4122 = vsel %vm4121, %v895, 18
    %v4123 = vsel %vm1339, %v4122, 2147483647
    %v4124 = vand.u32 %v4123, 65535
    %v4125 = vshra.s32 %v4123, 16
    %v4126 = vcvt.s32.f32 %v4124
    %v4127 = vcvt.s32.f32 %v4125
    %4128 = vmin.xlane.f32.xlu0 %v4127
    %v4129 = vpop.xlane.xlu0 %4128
    %vm4130 = vcmp.eq.f32.partialorder %v4127, %v4129
    %v4131 = vsel %vm4130, %v4126, inf
    %4132 = vmin.xlane.f32.xlu0 %v4131
    %v4133 = vpop.xlane.xlu0 %4132
    %v4134 = vcvt.f32.s32 %v4133
    %v4135 = vcvt.f32.s32 %v4129
    %v4136 = vshll.u32 %v4135, 16
    %v4137 = vadd.s32 %v4136, %v4134
    %v4138 = vrot.slane %v4137, 4
    %vm4139 = vcmp.lt.s32.totalorder %v4137, %v4138
    %v4140 = vsel %vm4139, %v4137, %v4138
    %v4141 = vrot.slane %v4140, 2
    %vm4142 = vcmp.lt.s32.totalorder %v4140, %v4141
    %v4143 = vsel %vm4142, %v4140, %v4141
    %v4144 = vrot.slane %v4143, 1
    %vm4145 = vcmp.lt.s32.totalorder %v4143, %v4144
    %v4146 = vsel %vm4145, %v4143, %v4144
    %s4147 = vtos %v4146
    %p4148 = scmp.eq.s32.totalorder %s4147, 1
    %s4149 = scalar_select %p4148, 0.0, 1.0
    %s4150 = smul.f32 %s3601, %s4149
    %v4151 = vstv %s4147
    %vm4152 = vcmp.eq.s32.totalorder %v895, %v4151
    %v4153 = vsel %vm4152, 1.0, 0.0
    %v4155 = vsel %vm1404, %v4153, 0
    %4157 = vmatprep.subr.mxu0 0.0
    %4158 = vmatpush1.msra.mxu0 %v1401
    %4159 = vmatprep.subr.mxu0 0.0
    %4160 = vmatpush1.msra.mxu0 %v1402
    %4161 = vmatprep.subr.mxu0 0.0
    %4162 = vmatpush1.msra.mxu0 %v1410
    %4163 = vmatprep.subr.mxu0 0.0
    %4164 = vmatpush1.msra.mxu0 0.0
    %4165 = vmatprep.subr.mxu0 0.0
    %4166 = vmatpush1.msra.mxu0 0.0
    %4167 = vmatprep.subr.mxu0 0.0
    %4168 = vmatpush1.msra.mxu0 0.0
    %4169 = vmatprep.subr.mxu0 0.0
    %4170 = vmatpush1.msra.mxu0 0.0
    %4171 = vmatprep.subr.mxu0 0.0
    %4172 = vmatpush1.msra.mxu0 0.0
    %4173 = vmatprep.subr.mxu0 0.0
    %4174 = vmatpush1.msra.mxu0 0.0
    %4175 = vmatprep.subr.mxu0 0.0
    %4176 = vmatpush1.msra.mxu0 0.0
    %4177 = vmatprep.subr.mxu0 0.0
    %4178 = vmatpush1.msra.mxu0 0.0
    %4179 = vmatprep.subr.mxu0 0.0
    %4180 = vmatpush1.msra.mxu0 0.0
    %4181 = vmatprep.subr.mxu0 0.0
    %4182 = vmatpush1.msra.mxu0 0.0
    %4183 = vmatprep.subr.mxu0 0.0
    %4184 = vmatpush1.msra.mxu0 0.0
    %4185 = vmatprep.subr.mxu0 0.0
    %4186 = vmatpush1.msra.mxu0 0.0
    %4187 = vmatprep.subr.mxu0 0.0
    %4188 = vmatpush1.msra.mxu0 0.0
    %4189 = vmatprep.subr.mxu0 0.0
    %4190 = vmatpush1.msra.mxu0 0.0
    %4191 = vmatprep.subr.mxu0 0.0
    %4192 = vmatpush1.msra.mxu0 0.0
    %4193 = vmatprep.subr.mxu0 0.0
    %4194 = vmatpush1.msra.mxu0 0.0
    %4195 = vmatprep.subr.mxu0 0.0
    %4196 = vmatpush1.msra.mxu0 0.0
    %4197 = vmatprep.subr.mxu0 0.0
    %4198 = vmatpush1.msra.mxu0 0.0
    %4199 = vmatprep.subr.mxu0 0.0
    %4200 = vmatpush1.msra.mxu0 0.0
    %4201 = vmatprep.subr.mxu0 0.0
    %4202 = vmatpush1.msra.mxu0 0.0
    %4203 = vmatprep.subr.mxu0 0.0
    %4204 = vmatpush1.msra.mxu0 0.0
    %4205 = vmatprep.subr.mxu0 0.0
    %4206 = vmatpush1.msra.mxu0 0.0
    %4207 = vmatprep.subr.mxu0 0.0
    %4208 = vmatpush1.msra.mxu0 0.0
    %4209 = vmatprep.subr.mxu0 0.0
    %4210 = vmatpush1.msra.mxu0 0.0
    %4211 = vmatprep.subr.mxu0 0.0
    %4212 = vmatpush1.msra.mxu0 0.0
    %4213 = vmatprep.subr.mxu0 0.0
    %4214 = vmatpush1.msra.mxu0 0.0
    %4215 = vmatprep.subr.mxu0 0.0
    %4216 = vmatpush1.msra.mxu0 0.0
    %4217 = vmatprep.subr.mxu0 0.0
    %4218 = vmatpush1.msra.mxu0 0.0
    %4219 = vmatprep.subr.mxu0 0.0
    %4220 = vmatpush1.msra.mxu0 0.0
    %4221 = vmatprep.mubr.f32.mxu0 0.0
    %4222 = vmatmul.mubr.f32.gmra.mrb[0].mxu0 %v4155
    %v4223 = vpop.f32.mrb[0].mxu0
    %v4224 = vadd.f32 0.0, %v4223
    %v4225 = vpop.f32.mrb[0].mxu0
    %4226 = vdwg.mxu0
    %4227 = vmatprep.subr.mxu0 0.0
    %4228 = vmatpush1.msra.mxu0 %v897
    %4229 = vmatprep.subr.mxu0 0.0
    %4230 = vmatpush1.msra.mxu0 %v898
    %4231 = vmatprep.subr.mxu0 0.0
    %4232 = vmatpush1.msra.mxu0 %v899
    %4233 = vmatprep.subr.mxu0 0.0
    %4234 = vmatpush1.msra.mxu0 %v900
    %4235 = vmatprep.subr.mxu0 0.0
    %4236 = vmatpush1.msra.mxu0 0.0
    %4237 = vmatprep.subr.mxu0 0.0
    %4238 = vmatpush1.msra.mxu0 0.0
    %4239 = vmatprep.subr.mxu0 0.0
    %4240 = vmatpush1.msra.mxu0 0.0
    %4241 = vmatprep.subr.mxu0 0.0
    %4242 = vmatpush1.msra.mxu0 0.0
    %4243 = vmatprep.subr.mxu0 0.0
    %4244 = vmatpush1.msra.mxu0 0.0
    %4245 = vmatprep.subr.mxu0 0.0
    %4246 = vmatpush1.msra.mxu0 0.0
    %4247 = vmatprep.subr.mxu0 0.0
    %4248 = vmatpush1.msra.mxu0 0.0
    %4249 = vmatprep.subr.mxu0 0.0
    %4250 = vmatpush1.msra.mxu0 0.0
    %4251 = vmatprep.subr.mxu0 0.0
    %4252 = vmatpush1.msra.mxu0 0.0
    %4253 = vmatprep.subr.mxu0 0.0
    %4254 = vmatpush1.msra.mxu0 0.0
    %4255 = vmatprep.subr.mxu0 0.0
    %4256 = vmatpush1.msra.mxu0 0.0
    %4257 = vmatprep.subr.mxu0 0.0
    %4258 = vmatpush1.msra.mxu0 0.0
    %4259 = vmatprep.subr.mxu0 0.0
    %4260 = vmatpush1.msra.mxu0 0.0
    %4261 = vmatprep.subr.mxu0 0.0
    %4262 = vmatpush1.msra.mxu0 0.0
    %4263 = vmatprep.subr.mxu0 0.0
    %4264 = vmatpush1.msra.mxu0 0.0
    %4265 = vmatprep.subr.mxu0 0.0
    %4266 = vmatpush1.msra.mxu0 0.0
    %4267 = vmatprep.subr.mxu0 0.0
    %4268 = vmatpush1.msra.mxu0 0.0
    %4269 = vmatprep.subr.mxu0 0.0
    %4270 = vmatpush1.msra.mxu0 0.0
    %4271 = vmatprep.subr.mxu0 0.0
    %4272 = vmatpush1.msra.mxu0 0.0
    %4273 = vmatprep.subr.mxu0 0.0
    %4274 = vmatpush1.msra.mxu0 0.0
    %4275 = vmatprep.subr.mxu0 0.0
    %4276 = vmatpush1.msra.mxu0 0.0
    %4277 = vmatprep.subr.mxu0 0.0
    %4278 = vmatpush1.msra.mxu0 0.0
    %4279 = vmatprep.subr.mxu0 0.0
    %4280 = vmatpush1.msra.mxu0 0.0
    %4281 = vmatprep.subr.mxu0 0.0
    %4282 = vmatpush1.msra.mxu0 0.0
    %4283 = vmatprep.subr.mxu0 0.0
    %4284 = vmatpush1.msra.mxu0 0.0
    %4285 = vmatprep.subr.mxu0 0.0
    %4286 = vmatpush1.msra.mxu0 0.0
    %4287 = vmatprep.subr.mxu0 0.0
    %4288 = vmatpush1.msra.mxu0 0.0
    %4289 = vmatprep.subr.mxu0 0.0
    %4290 = vmatpush1.msra.mxu0 0.0
    %4291 = vmatprep.mubr.f32.mxu0 0.0
    %4292 = vmatmul.mubr.f32.gmra.mrb[0].mxu0 %v4019
    %v4293 = vpop.f32.mrb[0].mxu0
    %v4294 = vadd.f32 %v901, %v4293
    %v4295 = vpop.f32.mrb[0].mxu0
    %4296 = vdwg.mxu0
    %4298 = vrot.lane.b32.xlu0 %v4294, 32
    %v4299 = vpop.permute.xlu0 %4298
    %v4301 = vadd.f32 %v4224, %v4299
    %v4302 = vsel %vm981, %v4301, -inf
    %4303 = vmax.xlane.f32.xlu0 %v4302
    %v4304 = vpop.xlane.xlu0 %4303
    %v4305 = vsub.f32 %v4301, %v4304
    %v4306 = vmul.f32 %v4305, 1.442695
    %v4307 = vpow.pop %v4306
    %v4308 = vsel %vm981, %v4307, 0.0
    %4309 = vadd.xlane.f32.xlu0 %v4308
    %v4310 = vpop.xlane.xlu0 %4309
    %v4311 = vrcp.pop %v4310
    %v4312 = vmul.f32 %v4307, %v4311
    %v4314 = vsel %vm997, %v4312, 0
    %4316 = vmatprep.subr.mxu0 0.0
    %4317 = vmatpush1.msra.mxu0 %v995
    %4318 = vmatprep.subr.mxu0 0.0
    %4319 = vmatpush1.msra.mxu0 0.0
    %4320 = vmatprep.subr.mxu0 0.0
    %4321 = vmatpush1.msra.mxu0 0.0
    %4322 = vmatprep.subr.mxu0 0.0
    %4323 = vmatpush1.msra.mxu0 0.0
    %4324 = vmatprep.subr.mxu0 0.0
    %4325 = vmatpush1.msra.mxu0 0.0
    %4326 = vmatprep.subr.mxu0 0.0
    %4327 = vmatpush1.msra.mxu0 0.0
    %4328 = vmatprep.subr.mxu0 0.0
    %4329 = vmatpush1.msra.mxu0 0.0
    %4330 = vmatprep.subr.mxu0 0.0
    %4331 = vmatpush1.msra.mxu0 0.0
    %4332 = vmatprep.subr.mxu0 0.0
    %4333 = vmatpush1.msra.mxu0 0.0
    %4334 = vmatprep.subr.mxu0 0.0
    %4335 = vmatpush1.msra.mxu0 0.0
    %4336 = vmatprep.subr.mxu0 0.0
    %4337 = vmatpush1.msra.mxu0 0.0
    %4338 = vmatprep.subr.mxu0 0.0
    %4339 = vmatpush1.msra.mxu0 0.0
    %4340 = vmatprep.subr.mxu0 0.0
    %4341 = vmatpush1.msra.mxu0 0.0
    %4342 = vmatprep.subr.mxu0 0.0
    %4343 = vmatpush1.msra.mxu0 0.0
    %4344 = vmatprep.subr.mxu0 0.0
    %4345 = vmatpush1.msra.mxu0 0.0
    %4346 = vmatprep.subr.mxu0 0.0
    %4347 = vmatpush1.msra.mxu0 0.0
    %4348 = vmatprep.subr.mxu0 0.0
    %4349 = vmatpush1.msra.mxu0 0.0
    %4350 = vmatprep.subr.mxu0 0.0
    %4351 = vmatpush1.msra.mxu0 0.0
    %4352 = vmatprep.subr.mxu0 0.0
    %4353 = vmatpush1.msra.mxu0 0.0
    %4354 = vmatprep.subr.mxu0 0.0
    %4355 = vmatpush1.msra.mxu0 0.0
    %4356 = vmatprep.subr.mxu0 0.0
    %4357 = vmatpush1.msra.mxu0 0.0
    %4358 = vmatprep.subr.mxu0 0.0
    %4359 = vmatpush1.msra.mxu0 0.0
    %4360 = vmatprep.subr.mxu0 0.0
    %4361 = vmatpush1.msra.mxu0 0.0
    %4362 = vmatprep.subr.mxu0 0.0
    %4363 = vmatpush1.msra.mxu0 0.0
    %4364 = vmatprep.subr.mxu0 0.0
    %4365 = vmatpush1.msra.mxu0 0.0
    %4366 = vmatprep.subr.mxu0 0.0
    %4367 = vmatpush1.msra.mxu0 0.0
    %4368 = vmatprep.subr.mxu0 0.0
    %4369 = vmatpush1.msra.mxu0 0.0
    %4370 = vmatprep.subr.mxu0 0.0
    %4371 = vmatpush1.msra.mxu0 0.0
    %4372 = vmatprep.subr.mxu0 0.0
    %4373 = vmatpush1.msra.mxu0 0.0
    %4374 = vmatprep.subr.mxu0 0.0
    %4375 = vmatpush1.msra.mxu0 0.0
    %4376 = vmatprep.subr.mxu0 0.0
    %4377 = vmatpush1.msra.mxu0 0.0
    %4378 = vmatprep.subr.mxu0 0.0
    %4379 = vmatpush1.msra.mxu0 0.0
    %4380 = vmatprep.mubr.f32.mxu0 0.0
    %4381 = vmatmul.mubr.f32.gmra.mrb[0].mxu0 %v4314
    %v4382 = vpop.f32.mrb[0].mxu0
    %v4383 = vadd.f32 0.0, %v4382
    %v4384 = vpop.f32.mrb[0].mxu0
    %4385 = vdwg.mxu0
    %v4387 = vsel %vm135, %v4383, 0
    %4389 = vmatprep.subr.mxu0 0.0
    %4390 = vmatpush1.msra.mxu0 %v1071
    %4391 = vmatprep.subr.mxu0 0.0
    %4392 = vmatpush1.msra.mxu0 %v1072
    %4393 = vmatprep.subr.mxu0 0.0
    %4394 = vmatpush1.msra.mxu0 %v1073
    %4395 = vmatprep.subr.mxu0 0.0
    %4396 = vmatpush1.msra.mxu0 %v1074
    %4397 = vmatprep.subr.mxu0 0.0
    %4398 = vmatpush1.msra.mxu0 0.0
    %4399 = vmatprep.subr.mxu0 0.0
    %4400 = vmatpush1.msra.mxu0 0.0
    %4401 = vmatprep.subr.mxu0 0.0
    %4402 = vmatpush1.msra.mxu0 0.0
    %4403 = vmatprep.subr.mxu0 0.0
    %4404 = vmatpush1.msra.mxu0 0.0
    %4405 = vmatprep.subr.mxu0 0.0
    %4406 = vmatpush1.msra.mxu0 0.0
    %4407 = vmatprep.subr.mxu0 0.0
    %4408 = vmatpush1.msra.mxu0 0.0
    %4409 = vmatprep.subr.mxu0 0.0
    %4410 = vmatpush1.msra.mxu0 0.0
    %4411 = vmatprep.subr.mxu0 0.0
    %4412 = vmatpush1.msra.mxu0 0.0
    %4413 = vmatprep.subr.mxu0 0.0
    %4414 = vmatpush1.msra.mxu0 0.0
    %4415 = vmatprep.subr.mxu0 0.0
    %4416 = vmatpush1.msra.mxu0 0.0
    %4417 = vmatprep.subr.mxu0 0.0
    %4418 = vmatpush1.msra.mxu0 0.0
    %4419 = vmatprep.subr.mxu0 0.0
    %4420 = vmatpush1.msra.mxu0 0.0
    %4421 = vmatprep.subr.mxu0 0.0
    %4422 = vmatpush1.msra.mxu0 0.0
    %4423 = vmatprep.subr.mxu0 0.0
    %4424 = vmatpush1.msra.mxu0 0.0
    %4425 = vmatprep.subr.mxu0 0.0
    %4426 = vmatpush1.msra.mxu0 0.0
    %4427 = vmatprep.subr.mxu0 0.0
    %4428 = vmatpush1.msra.mxu0 0.0
    %4429 = vmatprep.subr.mxu0 0.0
    %4430 = vmatpush1.msra.mxu0 0.0
    %4431 = vmatprep.subr.mxu0 0.0
    %4432 = vmatpush1.msra.mxu0 0.0
    %4433 = vmatprep.subr.mxu0 0.0
    %4434 = vmatpush1.msra.mxu0 0.0
    %4435 = vmatprep.subr.mxu0 0.0
    %4436 = vmatpush1.msra.mxu0 0.0
    %4437 = vmatprep.subr.mxu0 0.0
    %4438 = vmatpush1.msra.mxu0 0.0
    %4439 = vmatprep.subr.mxu0 0.0
    %4440 = vmatpush1.msra.mxu0 0.0
    %4441 = vmatprep.subr.mxu0 0.0
    %4442 = vmatpush1.msra.mxu0 0.0
    %4443 = vmatprep.subr.mxu0 0.0
    %4444 = vmatpush1.msra.mxu0 0.0
    %4445 = vmatprep.subr.mxu0 0.0
    %4446 = vmatpush1.msra.mxu0 0.0
    %4447 = vmatprep.subr.mxu0 0.0
    %4448 = vmatpush1.msra.mxu0 0.0
    %4449 = vmatprep.subr.mxu0 0.0
    %4450 = vmatpush1.msra.mxu0 0.0
    %4451 = vmatprep.subr.mxu0 0.0
    %4452 = vmatpush1.msra.mxu0 0.0
    %4453 = vmatprep.mubr.f32.mxu0 0.0
    %4454 = vmatmul.mubr.f32.gmra.mrb[0].mxu0 %v4387
    %v4455 = vpop.f32.mrb[0].mxu0
    %v4456 = vadd.f32 0.0, %v4455
    %v4457 = vpop.f32.mrb[0].mxu0
    %4458 = vdwg.mxu0
    %4460 = vrot.lane.b32.xlu0 %v4456, 8
    %v4461 = vpop.permute.xlu0 %4460
    %v4463 = vadd.f32 %v4224, %v4461
    %v4464 = vmax.f32 %v4463, 0.0
    %4466 = vrot.lane.b32.xlu0 %v4464, 120
    %v4467 = vpop.permute.xlu0 %4466
    %v4468 = vsel %vm135, %v4467, 0
    %4470 = vmatprep.subr.mxu0 0.0
    %4471 = vmatpush1.msra.mxu0 %v1154
    %4472 = vmatprep.subr.mxu0 0.0
    %4473 = vmatpush1.msra.mxu0 %v1155
    %4474 = vmatprep.subr.mxu0 0.0
    %4475 = vmatpush1.msra.mxu0 %v1156
    %4476 = vmatprep.subr.mxu0 0.0
    %4477 = vmatpush1.msra.mxu0 %v1157
    %4478 = vmatprep.subr.mxu0 0.0
    %4479 = vmatpush1.msra.mxu0 0.0
    %4480 = vmatprep.subr.mxu0 0.0
    %4481 = vmatpush1.msra.mxu0 0.0
    %4482 = vmatprep.subr.mxu0 0.0
    %4483 = vmatpush1.msra.mxu0 0.0
    %4484 = vmatprep.subr.mxu0 0.0
    %4485 = vmatpush1.msra.mxu0 0.0
    %4486 = vmatprep.subr.mxu0 0.0
    %4487 = vmatpush1.msra.mxu0 0.0
    %4488 = vmatprep.subr.mxu0 0.0
    %4489 = vmatpush1.msra.mxu0 0.0
    %4490 = vmatprep.subr.mxu0 0.0
    %4491 = vmatpush1.msra.mxu0 0.0
    %4492 = vmatprep.subr.mxu0 0.0
    %4493 = vmatpush1.msra.mxu0 0.0
    %4494 = vmatprep.subr.mxu0 0.0
    %4495 = vmatpush1.msra.mxu0 0.0
    %4496 = vmatprep.subr.mxu0 0.0
    %4497 = vmatpush1.msra.mxu0 0.0
    %4498 = vmatprep.subr.mxu0 0.0
    %4499 = vmatpush1.msra.mxu0 0.0
    %4500 = vmatprep.subr.mxu0 0.0
    %4501 = vmatpush1.msra.mxu0 0.0
    %4502 = vmatprep.subr.mxu0 0.0
    %4503 = vmatpush1.msra.mxu0 0.0
    %4504 = vmatprep.subr.mxu0 0.0
    %4505 = vmatpush1.msra.mxu0 0.0
    %4506 = vmatprep.subr.mxu0 0.0
    %4507 = vmatpush1.msra.mxu0 0.0
    %4508 = vmatprep.subr.mxu0 0.0
    %4509 = vmatpush1.msra.mxu0 0.0
    %4510 = vmatprep.subr.mxu0 0.0
    %4511 = vmatpush1.msra.mxu0 0.0
    %4512 = vmatprep.subr.mxu0 0.0
    %4513 = vmatpush1.msra.mxu0 0.0
    %4514 = vmatprep.subr.mxu0 0.0
    %4515 = vmatpush1.msra.mxu0 0.0
    %4516 = vmatprep.subr.mxu0 0.0
    %4517 = vmatpush1.msra.mxu0 0.0
    %4518 = vmatprep.subr.mxu0 0.0
    %4519 = vmatpush1.msra.mxu0 0.0
    %4520 = vmatprep.subr.mxu0 0.0
    %4521 = vmatpush1.msra.mxu0 0.0
    %4522 = vmatprep.subr.mxu0 0.0
    %4523 = vmatpush1.msra.mxu0 0.0
    %4524 = vmatprep.subr.mxu0 0.0
    %4525 = vmatpush1.msra.mxu0 0.0
    %4526 = vmatprep.subr.mxu0 0.0
    %4527 = vmatpush1.msra.mxu0 0.0
    %4528 = vmatprep.subr.mxu0 0.0
    %4529 = vmatpush1.msra.mxu0 0.0
    %4530 = vmatprep.subr.mxu0 0.0
    %4531 = vmatpush1.msra.mxu0 0.0
    %4532 = vmatprep.subr.mxu0 0.0
    %4533 = vmatpush1.msra.mxu0 0.0
    %4534 = vmatprep.mubr.f32.mxu0 0.0
    %4535 = vmatmul.mubr.f32.gmra.mrb[0].mxu0 %v4468
    %v4536 = vpop.f32.mrb[0].mxu0
    %v4537 = vadd.f32 %v1158, %v4536
    %v4538 = vpop.f32.mrb[0].mxu0
    %4539 = vdwg.mxu0
    %v4540 = vadd.f32 %v4537, %v4294
    %v4541 = vxor.u32 %v4540, 2147483648
    %v4542 = vmul.f32 %v4541, 1.442695
    %v4543 = vpow.pop %v4542
    %v4544 = vadd.f32 %v4543, 1.0
    %v4545 = vrcp.pop %v4544
    %v4546 = vmul.f32 1.0, %v4545
    %4547 = vrot.lane.b32.xlu0 %v4294, 64
    %v4548 = vpop.permute.xlu0 %4547
    %v4550 = vmul.f32 %v4546, %v4548
    %4552 = vrot.lane.b32.xlu0 %v4550, 64
    %v4553 = vpop.permute.xlu0 %4552
    %v4555 = vadd.f32 %v4537, %v4553
    %v4556 = vtanh.pop %v4555
    %v4557 = vsub.f32 1.0, %v4546
    %4559 = vrot.lane.b32.xlu0 %v4556, 96
    %v4560 = vpop.permute.xlu0 %4559
    %v4562 = vmul.f32 %v4557, %v4560
    %v4563 = vmul.f32 %v4546, %v4015
    %v4564 = vadd.f32 %v4562, %v4563
    %4566 = vrot.lane.b32.xlu0 %v4564, 96
    %v4567 = vpop.permute.xlu0 %4566
    %v4568 = vsel %vm135, %v4567, 0
    %4570 = vmatprep.subr.mxu0 0.0
    %4571 = vmatpush1.msra.mxu0 %v1259
    %4572 = vmatprep.subr.mxu0 0.0
    %4573 = vmatpush1.msra.mxu0 %v1260
    %4574 = vmatprep.subr.mxu0 0.0
    %4575 = vmatpush1.msra.mxu0 %v1261
    %4576 = vmatprep.subr.mxu0 0.0
    %4577 = vmatpush1.msra.mxu0 %v1262
    %4578 = vmatprep.subr.mxu0 0.0
    %4579 = vmatpush1.msra.mxu0 0.0
    %4580 = vmatprep.subr.mxu0 0.0
    %4581 = vmatpush1.msra.mxu0 0.0
    %4582 = vmatprep.subr.mxu0 0.0
    %4583 = vmatpush1.msra.mxu0 0.0
    %4584 = vmatprep.subr.mxu0 0.0
    %4585 = vmatpush1.msra.mxu0 0.0
    %4586 = vmatprep.subr.mxu0 0.0
    %4587 = vmatpush1.msra.mxu0 0.0
    %4588 = vmatprep.subr.mxu0 0.0
    %4589 = vmatpush1.msra.mxu0 0.0
    %4590 = vmatprep.subr.mxu0 0.0
    %4591 = vmatpush1.msra.mxu0 0.0
    %4592 = vmatprep.subr.mxu0 0.0
    %4593 = vmatpush1.msra.mxu0 0.0
    %4594 = vmatprep.subr.mxu0 0.0
    %4595 = vmatpush1.msra.mxu0 0.0
    %4596 = vmatprep.subr.mxu0 0.0
    %4597 = vmatpush1.msra.mxu0 0.0
    %4598 = vmatprep.subr.mxu0 0.0
    %4599 = vmatpush1.msra.mxu0 0.0
    %4600 = vmatprep.subr.mxu0 0.0
    %4601 = vmatpush1.msra.mxu0 0.0
    %4602 = vmatprep.subr.mxu0 0.0
    %4603 = vmatpush1.msra.mxu0 0.0
    %4604 = vmatprep.subr.mxu0 0.0
    %4605 = vmatpush1.msra.mxu0 0.0
    %4606 = vmatprep.subr.mxu0 0.0
    %4607 = vmatpush1.msra.mxu0 0.0
    %4608 = vmatprep.subr.mxu0 0.0
    %4609 = vmatpush1.msra.mxu0 0.0
    %4610 = vmatprep.subr.mxu0 0.0
    %4611 = vmatpush1.msra.mxu0 0.0
    %4612 = vmatprep.subr.mxu0 0.0
    %4613 = vmatpush1.msra.mxu0 0.0
    %4614 = vmatprep.subr.mxu0 0.0
    %4615 = vmatpush1.msra.mxu0 0.0
    %4616 = vmatprep.subr.mxu0 0.0
    %4617 = vmatpush1.msra.mxu0 0.0
    %4618 = vmatprep.subr.mxu0 0.0
    %4619 = vmatpush1.msra.mxu0 0.0
    %4620 = vmatprep.subr.mxu0 0.0
    %4621 = vmatpush1.msra.mxu0 0.0
    %4622 = vmatprep.subr.mxu0 0.0
    %4623 = vmatpush1.msra.mxu0 0.0
    %4624 = vmatprep.subr.mxu0 0.0
    %4625 = vmatpush1.msra.mxu0 0.0
    %4626 = vmatprep.subr.mxu0 0.0
    %4627 = vmatpush1.msra.mxu0 0.0
    %4628 = vmatprep.subr.mxu0 0.0
    %4629 = vmatpush1.msra.mxu0 0.0
    %4630 = vmatprep.subr.mxu0 0.0
    %4631 = vmatpush1.msra.mxu0 0.0
    %4632 = vmatprep.subr.mxu0 0.0
    %4633 = vmatpush1.msra.mxu0 0.0
    %4634 = vmatprep.mubr.f32.mxu0 0.0
    %4635 = vmatmul.mubr.f32.gmra.mrb[0].mxu0 %v4568
    %v4636 = vpop.f32.mrb[0].mxu0
    %v4637 = vadd.f32 %v1263, %v4636
    %v4638 = vpop.f32.mrb[0].mxu0
    %4639 = vdwg.mxu0
    %v4640 = vsel %vm1339, %v4637, -inf
    %4641 = vmax.xlane.f32.xlu0 %v4640
    %v4642 = vpop.xlane.xlu0 %4641
    %v4643 = vsub.f32 %v4637, %v4642
    %v4644 = vmul.f32 %v4643, 1.442695
    %v4645 = vpow.pop %v4644
    %v4646 = vsel %vm1339, %v4645, 0.0
    %4647 = vadd.xlane.f32.xlu0 %v4646
    %v4648 = vpop.xlane.xlu0 %4647
    %v4649 = vlog2.pop %v4648
    %v4650 = vmul.f32 %v4649, 0.6931472
    %s4651 = sld [smem:[#allocation6 + $0x6]]
    %v4652 = vstv %s4651
    %vm4653 = vcmp.eq.s32.totalorder %v895, %v4652
    %v4654 = vsel %vm4653, %v4643, 0.0
    %v4655 = vsel %vm1339, %v4654, 0.0
    %4656 = vadd.xlane.f32.xlu0 %v4655
    %v4657 = vpop.xlane.xlu0 %4656
    %v4658 = vrot.slane %v4657, 4
    %v4659 = vadd.f32 %v4657, %v4658
    %v4660 = vrot.slane %v4659, 2
    %v4661 = vadd.f32 %v4659, %v4660
    %v4662 = vrot.slane %v4661, 1
    %v4663 = vadd.f32 %v4661, %v4662
    %s4664 = vtos %v4663
    %v4665 = vadd.f32 %v4650, 0.0
    %s4666 = vtos %v4665
    %s4667 = ssub.f32 %s4666, %s4664
    %s4668 = smul.f32 %s4150, %s4667
    %s4669 = sadd.f32 %s4120, %s4668
    %s4670 = scalar_lea.smem [#allocation14], 0
    %4671 = sst [smem:[%s4670]] %s4669
    // Predicated region
    $region78: #{grumt_forward.1} parent=1 // pred_check
      _
    $region79: #{grumt_forward.1} parent=1 // pred_check_branch
      %4673 = sbr.rel (0) target = $region81
    $region80: #{grumt_forward.1} parent=1 // pred_region
      %s4675 = ssub.s32 16, 16
      %4676 = vsyncadd [#allocation4], %s4675
      %4679 = dma.smem_to_hbm [#allocation14], 16, %s13, [#allocation4]
    $region81: #{grumt_forward.1} parent=1 // pred_fallthru
      _
    // Predicated region
    $region82: #{grumt_forward.1} parent=1 // pred_check
      _
    $region83: #{grumt_forward.1} parent=1 // pred_check_branch
      %4681 = sbr.rel (0) target = $region85
    $region84: #{grumt_forward.1} parent=1 // pred_region
      %4682 = dma.done [#allocation4], 16
    $region85: #{grumt_forward.1} parent=1 // pred_fallthru
      _
    %4683 = sfence
    %4684 = vsyncpa [#allocation3], 1
    %4685 = vsyncpa [#allocation10], 1
    %4686 = vsyncpa [#allocation13], 1
    %4687 = vsyncpa [#allocation4], 1
    %4688 = vsyncpa [#allocation5], 1
    %4689 = vsyncpa [#allocation7], 1

</llo_original>
